<compile_context>
chip_gen: v7x
topology: tpu7x:2x2x1
jax: 0.10.0
libtpu: 0.0.40
codegen_flags: <defaults>
</compile_context>

<pallas_src>
import jax
import jax.numpy as jnp
from jax import lax
from jax.experimental import pallas as pl
from jax.experimental.pallas import tpu as pltpu


# ----------------------------------------------------------------------------
# Packed-slab layout helpers (static Python ints).
# ----------------------------------------------------------------------------
def _slab_layout(n_layers, E, H):
    """Row offsets of each (w_ih, w_hh, b) block in the packed LSTM slab.

    Per layer: [enc (w_ih, w_hh, b_pad8)] then [dec (w_ih, w_hh, b_pad8)].
    All offsets are multiples of 8 (sublane aligned).
    """
    offs = []
    off = 0
    for l in range(n_layers):
        d_in = E if l == 0 else H
        per = []
        for _ in range(2):                      # enc, dec
            per.append((off, off + d_in, off + d_in + H))
            off += d_in + H + 8
        offs.append(tuple(per))
    return tuple(offs), off


def _pack_lstm_slab(enc_lstm, dec_lstm):
    pieces = []
    for l in range(len(enc_lstm)):
        for (w_ih, w_hh, b) in (enc_lstm[l], dec_lstm[l]):
            pieces += [w_ih, w_hh, jnp.pad(b, ((0, 7), (0, 0)))]   # bias -> 8 rows
    return jnp.concatenate(pieces, axis=0)


# ----------------------------------------------------------------------------
# Fused encoder + decoder + attention + projection kernel.
# ----------------------------------------------------------------------------
def _make_fused_kernel(n_layers, T, B, H, E, layer_offs):
    TB = T * B
    L = n_layers
    NEG_INF = -1e30

    def kernel(emb_ref, lstm_ref, outw_ref, out_ref,
               gx_e, gx_d, eb0, eb1, db0, db1):
        enc_bufs = (eb0, eb1)
        dec_bufs = (db0, db1)

        def make_chain(offs, x_in, h0, c0, out_buf, gx_buf):
            wih_off, whh_off, b_off = offs
            d_in = whh_off - wih_off
            w_ih = lstm_ref[wih_off:wih_off + d_in, :]           # (d_in, 4H)
            w_hh = lstm_ref[whh_off:whh_off + H, :]              # (H, 4H)  hoisted
            b = lstm_ref[b_off:b_off + 1, :]                     # (1, 4H)
            # One big (TB, d_in) @ (d_in, 4H) input projection, hoisted out of
            # the serial per-timestep recurrence.
            gx_buf[...] = (jnp.dot(x_in, w_ih,
                                   preferred_element_type=jnp.float32) + b)
            return dict(gx=gx_buf, whh=w_hh, h=h0, c=c0, out=out_buf)

        def run_phase(chains):
            # Statically-unrolled recurrence.  Both chains' per-step ops are
            # emitted inside the same iteration so the scheduler can overlap the
            # two independent dependency chains.
            for t in range(T):
                for ch in chains:
                    gx = ch["gx"][pl.ds(t * B, B), :]            # (B, 4H)
                    gates = gx + jnp.dot(ch["h"], ch["whh"],
                                         preferred_element_type=jnp.float32)
                    sig = jax.nn.sigmoid(gates)   # one full-width EUP pass
                    i_g = sig[:, 0:H]
                    f_g = sig[:, H:2 * H]
                    o_g = sig[:, 3 * H:4 * H]
                    g_g = jnp.tanh(gates[:, 2 * H:3 * H])
                    c_new = f_g * ch["c"] + i_g * g_g
                    h_new = o_g * jnp.tanh(c_new)
                    ch["out"][pl.ds(t * B, B), :] = h_new        # off the dep chain
                    ch["h"], ch["c"] = h_new, c_new

        zeros = jnp.zeros((B, H), jnp.float32)
        enc_final = [None] * L

        # ----- wavefront over layers: phase p = enc layer p + dec layer p-1 -----
        for p in range(L + 1):
            staged = []
            if p < L:
                x_in = emb_ref[0:TB, :] if p == 0 else enc_bufs[(p - 1) % 2][...]
                staged.append(("e", p,
                               make_chain(layer_offs[p][0], x_in, zeros, zeros,
                                          enc_bufs[p % 2], gx_e)))
            if p >= 1:
                l = p - 1
                x_in = emb_ref[TB:2 * TB, :] if l == 0 else dec_bufs[(l - 1) % 2][...]
                h0, c0 = enc_final[l]
                staged.append(("d", l,
                               make_chain(layer_offs[l][1], x_in, h0, c0,
                                          dec_bufs[l % 2], gx_d)))
            run_phase([c for (_, _, c) in staged])
            for tag, l, ch in staged:
                if tag == "e":
                    enc_final[l] = (ch["h"], ch["c"])

        # ----- dot-product attention on the flattened (t,b)-major layout -----
        ctx = enc_bufs[(L - 1) % 2][...]          # (TB, H) encoder top hiddens
        dec = dec_bufs[(L - 1) % 2][...]          # (TB, H) decoder top hiddens

        scores = lax.dot_general(dec, ctx, (((1,), (1,)), ((), ())),
                                 preferred_element_type=jnp.float32)  # (TB, TB)
        # In-kernel cross-batch mask: rows/cols are (t, b) flattened t-major,
        # only same-batch pairs may attend (a few VPU ops, no (TB,TB) input DMA).
        row_b = lax.broadcasted_iota(jnp.int32, (TB, TB), 0) % B
        col_b = lax.broadcasted_iota(jnp.int32, (TB, TB), 1) % B
        scores = jnp.where(row_b == col_b, scores, NEG_INF)
        m = jnp.max(scores, axis=-1, keepdims=True)
        e = jnp.exp(scores - m)
        denom = jnp.sum(e, axis=-1, keepdims=True)
        w = e * pl.reciprocal(denom, approx=False)        # exact reciprocal
        attn = jnp.dot(w, ctx, preferred_element_type=jnp.float32)    # (TB, H)

        # ----- fused output projection: one (TB, 2H) @ (2H, Vpad) matmul -----
        cat = jnp.concatenate([dec, attn], axis=-1)                   # (TB, 2H)
        w_out = outw_ref[0:2 * H, :]
        b_out = outw_ref[2 * H:2 * H + 1, :]
        out_ref[...] = (jnp.dot(cat, w_out, preferred_element_type=jnp.float32)
                        + b_out)

    return kernel


def fused_seq2seq(emb_slab, lstm_slab, out_slab, *,
                  n_layers, T, B, H, E, layer_offs):
    """Single pallas_call for the whole forward. Returns (T*B, V_pad) logits."""
    TB = T * B
    V_pad = out_slab.shape[-1]
    vmem = pl.BlockSpec(memory_space=pltpu.MemorySpace.VMEM)
    return pl.pallas_call(
        _make_fused_kernel(n_layers, T, B, H, E, layer_offs),
        out_shape=jax.ShapeDtypeStruct((TB, V_pad), jnp.float32),
        in_specs=[vmem, vmem, vmem],
        out_specs=vmem,
        scratch_shapes=[
            pltpu.VMEM((TB, 4 * H), jnp.float32),   # encoder-chain gates_x
            pltpu.VMEM((TB, 4 * H), jnp.float32),   # decoder-chain gates_x
            pltpu.VMEM((TB, H), jnp.float32),       # encoder hidden-seq ping
            pltpu.VMEM((TB, H), jnp.float32),       # encoder hidden-seq pong
            pltpu.VMEM((TB, H), jnp.float32),       # decoder hidden-seq ping
            pltpu.VMEM((TB, H), jnp.float32),       # decoder hidden-seq pong
        ],
    )(emb_slab, lstm_slab, out_slab)


# ----------------------------------------------------------------------------
# Parameter init (deterministic) + model wiring.
# ----------------------------------------------------------------------------
def init_lstm_stack(key, in_dim, hidden, n_layers):
    params = []
    scale = 1.0 / float(hidden) ** 0.5
    for layer in range(n_layers):
        key, k1, k2, k3 = jax.random.split(key, 4)
        d = in_dim if layer == 0 else hidden
        w_ih = jax.random.uniform(k1, (d, 4 * hidden), jnp.float32, -scale, scale)
        w_hh = jax.random.uniform(k2, (hidden, 4 * hidden), jnp.float32, -scale, scale)
        b = jax.random.uniform(k3, (1, 4 * hidden), jnp.float32, -scale, scale)
        params.append((w_ih, w_hh, b))
    return params, key


def init_model_params(key, vocab, n_embed, n_hidden, n_layers):
    key, k_e_emb, k_d_emb, k_w1, k_w2, k_b = jax.random.split(key, 6)
    p = {}
    p["enc_emb"] = jax.random.normal(k_e_emb, (vocab, n_embed), jnp.float32) * 0.1
    p["dec_emb"] = jax.random.normal(k_d_emb, (vocab, n_embed), jnp.float32) * 0.1
    p["enc_lstm"], key = init_lstm_stack(key, n_embed, n_hidden, n_layers)
    p["dec_lstm"], key = init_lstm_stack(key, n_embed, n_hidden, n_layers)
    s = 1.0 / float(n_hidden) ** 0.5
    p["w_out_dec"] = jax.random.uniform(k_w1, (n_hidden, vocab), jnp.float32, -s, s)
    p["w_out_ctx"] = jax.random.uniform(k_w2, (n_hidden, vocab), jnp.float32, -s, s)
    p["b_out"] = jax.random.uniform(k_b, (vocab,), jnp.float32, -s, s)
    return p


@jax.jit
def model_forward(params, data):
    # data: (B, T) int32 token ids
    B, T = data.shape
    H = params["enc_lstm"][0][1].shape[0]
    E = params["enc_emb"].shape[1]
    V = params["w_out_dec"].shape[-1]
    L = len(params["enc_lstm"])
    TB = T * B
    V_pad = ((V + 127) // 128) * 128

    # Embedding gathers directly in t-major flattened order (transpose the tiny
    # int matrix, not the float activations).  TODO(synk): could be folded into
    # the kernel via a one-hot matmul if the gather ever shows up in profiles.
    idx = data.T.reshape(-1)                                       # (TB,) t-major
    enc_flat = jnp.take(params["enc_emb"], idx, axis=0)            # (TB, E)
    dec_flat = jnp.take(params["dec_emb"], idx, axis=0)
    emb_slab = jnp.concatenate([enc_flat, dec_flat], axis=0)       # (2TB, E)

    # Packed LSTM weight slab (lane-dense, width 4H) + static row offsets.
    lstm_slab = _pack_lstm_slab(params["enc_lstm"], params["dec_lstm"])
    layer_offs, _ = _slab_layout(L, E, H)

    # Packed output projection: [W_dec ; W_ctx] rows, then 8 bias rows, lane-padded.
    w_out = jnp.concatenate([params["w_out_dec"], params["w_out_ctx"]], axis=0)
    w_out_p = jnp.pad(w_out, ((0, 0), (0, V_pad - V)))
    b_out_p = jnp.pad(params["b_out"].reshape(1, V), ((0, 7), (0, V_pad - V)))
    out_slab = jnp.concatenate([w_out_p, b_out_p], axis=0)         # (2H+8, Vpad)

    logits_flat = fused_seq2seq(emb_slab, lstm_slab, out_slab,
                                n_layers=L, T=T, B=B, H=H, E=E,
                                layer_offs=layer_offs)             # (TB, Vpad)
    return logits_flat[:, :V].reshape(T, B, V)


if __name__ == "__main__":
    VOCAB = 8        # 5 symbols + pad/sos/eos
    N_EMBED = 32
    N_HIDDEN = 32
    N_LAYERS = 2
    B, T = 8, 8

    key = jax.random.PRNGKey(0)
    key, k_params, k_data = jax.random.split(key, 3)
    params = init_model_params(k_params, VOCAB, N_EMBED, N_HIDDEN, N_LAYERS)
    data = jax.random.randint(k_data, (B, T), 0, VOCAB, dtype=jnp.int32)

    pred = model_forward(params, data)
    jax.block_until_ready(pred)
    assert pred.shape == (T, B, VOCAB), pred.shape
    assert pred.dtype == jnp.float32
    print("KERNEL_OK")
</pallas_src>

<mosaic_0001>
module attributes {stable_mosaic.version = 11 : i64} {
  func.func @kernel(%arg0: memref<128x32xf32, #tpu.memory_space<vmem>>, %arg1: memref<288x128xf32, #tpu.memory_space<vmem>>, %arg2: memref<72x128xf32, #tpu.memory_space<vmem>>, %arg3: memref<64x128xf32, #tpu.memory_space<vmem>>, %arg4: memref<64x128xf32, #tpu.memory_space<vmem>>, %arg5: memref<64x128xf32, #tpu.memory_space<vmem>>, %arg6: memref<64x32xf32, #tpu.memory_space<vmem>>, %arg7: memref<64x32xf32, #tpu.memory_space<vmem>>, %arg8: memref<64x32xf32, #tpu.memory_space<vmem>>, %arg9: memref<64x32xf32, #tpu.memory_space<vmem>>) attributes {dimension_semantics = [], scalar_prefetch = 0 : i64, scratch_operands = 6 : i64, tpu.core_type = #tpu.core_type<tc>} {
    %cst = arith.constant 0.000000e+00 : f32
    %0 = vector.broadcast %cst : f32 to vector<8x32xf32>
    %c0 = arith.constant 0 : index
    %c0_0 = arith.constant 0 : index
    %1 = vector.load %arg0[%c0, %c0_0] : memref<128x32xf32, #tpu.memory_space<vmem>>, vector<64x32xf32>
    %c0_1 = arith.constant 0 : index
    %c0_2 = arith.constant 0 : index
    %2 = vector.load %arg1[%c0_1, %c0_2] : memref<288x128xf32, #tpu.memory_space<vmem>>, vector<32x128xf32>
    %c32 = arith.constant 32 : index
    %c0_3 = arith.constant 0 : index
    %3 = vector.load %arg1[%c32, %c0_3] : memref<288x128xf32, #tpu.memory_space<vmem>>, vector<32x128xf32>
    %c64 = arith.constant 64 : index
    %c0_4 = arith.constant 0 : index
    %4 = vector.load %arg1[%c64, %c0_4] : memref<288x128xf32, #tpu.memory_space<vmem>>, vector<1x128xf32>
    %cst_5 = arith.constant dense<0.000000e+00> : vector<64x128xf32>
    %5 = tpu.matmul %1, %2, %cst_5 {dimension_numbers = #tpu.dot_dimension_numbers<[1], [0], [0], [1], [0, 0, 1, 1], [], []>} : vector<64x32xf32>, vector<32x128xf32>, vector<64x128xf32> -> vector<64x128xf32>
    %6 = vector.broadcast %4 : vector<1x128xf32> to vector<64x128xf32>
    %7 = arith.addf %5, %6 : vector<64x128xf32>
    %c0_6 = arith.constant 0 : index
    %c0_7 = arith.constant 0 : index
    %8 = vector.load %arg4[%c0_6, %c0_7] : memref<64x128xf32, #tpu.memory_space<vmem>>, vector<64x128xf32>
    tpu.vector_store %arg4[%c0_6, %c0_7], %7 {strides = array<i32>} : memref<64x128xf32, #tpu.memory_space<vmem>>, vector<64x128xf32>,
    %c0_8 = arith.constant 0 : index
    %c0_9 = arith.constant 0 : index
    %9 = vector.load %arg4[%c0_8, %c0_9] : memref<64x128xf32, #tpu.memory_space<vmem>>, vector<8x128xf32>
    %cst_10 = arith.constant dense<0.000000e+00> : vector<8x128xf32>
    %10 = tpu.matmul %0, %3, %cst_10 {dimension_numbers = #tpu.dot_dimension_numbers<[1], [0], [0], [1], [0, 0, 1, 1], [], []>} : vector<8x32xf32>, vector<32x128xf32>, vector<8x128xf32> -> vector<8x128xf32>
    %11 = arith.addf %9, %10 : vector<8x128xf32>
    %12 = arith.negf %11 : vector<8x128xf32>
    %13 = math.exp %12 : vector<8x128xf32>
    %cst_11 = arith.constant 1.000000e+00 : f32
    %14 = vector.broadcast %cst_11 : f32 to vector<8x128xf32>
    %15 = arith.addf %14, %13 : vector<8x128xf32>
    %16 = arith.divf %14, %15 : vector<8x128xf32>
    %17 = vector.extract_strided_slice %16 {offsets = [0, 0], sizes = [8, 32], strides = [1, 1]} : vector<8x128xf32> to vector<8x32xf32>
    %18 = vector.extract_strided_slice %16 {offsets = [0, 32], sizes = [8, 32], strides = [1, 1]} : vector<8x128xf32> to vector<8x32xf32>
    %19 = vector.extract_strided_slice %16 {offsets = [0, 96], sizes = [8, 32], strides = [1, 1]} : vector<8x128xf32> to vector<8x32xf32>
    %20 = vector.extract_strided_slice %11 {offsets = [0, 64], sizes = [8, 32], strides = [1, 1]} : vector<8x128xf32> to vector<8x32xf32>
    %21 = math.tanh %20 : vector<8x32xf32>
    %22 = arith.mulf %18, %0 : vector<8x32xf32>
    %23 = arith.mulf %17, %21 : vector<8x32xf32>
    %24 = arith.addf %22, %23 : vector<8x32xf32>
    %25 = math.tanh %24 : vector<8x32xf32>
    %26 = arith.mulf %19, %25 : vector<8x32xf32>
    %c0_12 = arith.constant 0 : index
    %c0_13 = arith.constant 0 : index
    %27 = vector.load %arg6[%c0_12, %c0_13] : memref<64x32xf32, #tpu.memory_space<vmem>>, vector<8x32xf32>
    tpu.vector_store %arg6[%c0_12, %c0_13], %26 {strides = array<i32>} : memref<64x32xf32, #tpu.memory_space<vmem>>, vector<8x32xf32>,
    %c8 = arith.constant 8 : index
    %c0_14 = arith.constant 0 : index
    %28 = vector.load %arg4[%c8, %c0_14] : memref<64x128xf32, #tpu.memory_space<vmem>>, vector<8x128xf32>
    %cst_15 = arith.constant dense<0.000000e+00> : vector<8x128xf32>
    %29 = tpu.matmul %26, %3, %cst_15 {dimension_numbers = #tpu.dot_dimension_numbers<[1], [0], [0], [1], [0, 0, 1, 1], [], []>} : vector<8x32xf32>, vector<32x128xf32>, vector<8x128xf32> -> vector<8x128xf32>
    %30 = arith.addf %28, %29 : vector<8x128xf32>
    %31 = arith.negf %30 : vector<8x128xf32>
    %32 = math.exp %31 : vector<8x128xf32>
    %cst_16 = arith.constant 1.000000e+00 : f32
    %33 = vector.broadcast %cst_16 : f32 to vector<8x128xf32>
    %34 = arith.addf %33, %32 : vector<8x128xf32>
    %35 = arith.divf %33, %34 : vector<8x128xf32>
    %36 = vector.extract_strided_slice %35 {offsets = [0, 0], sizes = [8, 32], strides = [1, 1]} : vector<8x128xf32> to vector<8x32xf32>
    %37 = vector.extract_strided_slice %35 {offsets = [0, 32], sizes = [8, 32], strides = [1, 1]} : vector<8x128xf32> to vector<8x32xf32>
    %38 = vector.extract_strided_slice %35 {offsets = [0, 96], sizes = [8, 32], strides = [1, 1]} : vector<8x128xf32> to vector<8x32xf32>
    %39 = vector.extract_strided_slice %30 {offsets = [0, 64], sizes = [8, 32], strides = [1, 1]} : vector<8x128xf32> to vector<8x32xf32>
    %40 = math.tanh %39 : vector<8x32xf32>
    %41 = arith.mulf %37, %24 : vector<8x32xf32>
    %42 = arith.mulf %36, %40 : vector<8x32xf32>
    %43 = arith.addf %41, %42 : vector<8x32xf32>
    %44 = math.tanh %43 : vector<8x32xf32>
    %45 = arith.mulf %38, %44 : vector<8x32xf32>
    %c8_17 = arith.constant 8 : index
    %c0_18 = arith.constant 0 : index
    %46 = vector.load %arg6[%c8_17, %c0_18] : memref<64x32xf32, #tpu.memory_space<vmem>>, vector<8x32xf32>
    tpu.vector_store %arg6[%c8_17, %c0_18], %45 {strides = array<i32>} : memref<64x32xf32, #tpu.memory_space<vmem>>, vector<8x32xf32>,
    %c16 = arith.constant 16 : index
    %c0_19 = arith.constant 0 : index
    %47 = vector.load %arg4[%c16, %c0_19] : memref<64x128xf32, #tpu.memory_space<vmem>>, vector<8x128xf32>
    %cst_20 = arith.constant dense<0.000000e+00> : vector<8x128xf32>
    %48 = tpu.matmul %45, %3, %cst_20 {dimension_numbers = #tpu.dot_dimension_numbers<[1], [0], [0], [1], [0, 0, 1, 1], [], []>} : vector<8x32xf32>, vector<32x128xf32>, vector<8x128xf32> -> vector<8x128xf32>
    %49 = arith.addf %47, %48 : vector<8x128xf32>
    %50 = arith.negf %49 : vector<8x128xf32>
    %51 = math.exp %50 : vector<8x128xf32>
    %cst_21 = arith.constant 1.000000e+00 : f32
    %52 = vector.broadcast %cst_21 : f32 to vector<8x128xf32>
    %53 = arith.addf %52, %51 : vector<8x128xf32>
    %54 = arith.divf %52, %53 : vector<8x128xf32>
    %55 = vector.extract_strided_slice %54 {offsets = [0, 0], sizes = [8, 32], strides = [1, 1]} : vector<8x128xf32> to vector<8x32xf32>
    %56 = vector.extract_strided_slice %54 {offsets = [0, 32], sizes = [8, 32], strides = [1, 1]} : vector<8x128xf32> to vector<8x32xf32>
    %57 = vector.extract_strided_slice %54 {offsets = [0, 96], sizes = [8, 32], strides = [1, 1]} : vector<8x128xf32> to vector<8x32xf32>
    %58 = vector.extract_strided_slice %49 {offsets = [0, 64], sizes = [8, 32], strides = [1, 1]} : vector<8x128xf32> to vector<8x32xf32>
    %59 = math.tanh %58 : vector<8x32xf32>
    %60 = arith.mulf %56, %43 : vector<8x32xf32>
    %61 = arith.mulf %55, %59 : vector<8x32xf32>
    %62 = arith.addf %60, %61 : vector<8x32xf32>
    %63 = math.tanh %62 : vector<8x32xf32>
    %64 = arith.mulf %57, %63 : vector<8x32xf32>
    %c16_22 = arith.constant 16 : index
    %c0_23 = arith.constant 0 : index
    %65 = vector.load %arg6[%c16_22, %c0_23] : memref<64x32xf32, #tpu.memory_space<vmem>>, vector<8x32xf32>
    tpu.vector_store %arg6[%c16_22, %c0_23], %64 {strides = array<i32>} : memref<64x32xf32, #tpu.memory_space<vmem>>, vector<8x32xf32>,
    %c24 = arith.constant 24 : index
    %c0_24 = arith.constant 0 : index
    %66 = vector.load %arg4[%c24, %c0_24] : memref<64x128xf32, #tpu.memory_space<vmem>>, vector<8x128xf32>
    %cst_25 = arith.constant dense<0.000000e+00> : vector<8x128xf32>
    %67 = tpu.matmul %64, %3, %cst_25 {dimension_numbers = #tpu.dot_dimension_numbers<[1], [0], [0], [1], [0, 0, 1, 1], [], []>} : vector<8x32xf32>, vector<32x128xf32>, vector<8x128xf32> -> vector<8x128xf32>
    %68 = arith.addf %66, %67 : vector<8x128xf32>
    %69 = arith.negf %68 : vector<8x128xf32>
    %70 = math.exp %69 : vector<8x128xf32>
    %cst_26 = arith.constant 1.000000e+00 : f32
    %71 = vector.broadcast %cst_26 : f32 to vector<8x128xf32>
    %72 = arith.addf %71, %70 : vector<8x128xf32>
    %73 = arith.divf %71, %72 : vector<8x128xf32>
    %74 = vector.extract_strided_slice %73 {offsets = [0, 0], sizes = [8, 32], strides = [1, 1]} : vector<8x128xf32> to vector<8x32xf32>
    %75 = vector.extract_strided_slice %73 {offsets = [0, 32], sizes = [8, 32], strides = [1, 1]} : vector<8x128xf32> to vector<8x32xf32>
    %76 = vector.extract_strided_slice %73 {offsets = [0, 96], sizes = [8, 32], strides = [1, 1]} : vector<8x128xf32> to vector<8x32xf32>
    %77 = vector.extract_strided_slice %68 {offsets = [0, 64], sizes = [8, 32], strides = [1, 1]} : vector<8x128xf32> to vector<8x32xf32>
    %78 = math.tanh %77 : vector<8x32xf32>
    %79 = arith.mulf %75, %62 : vector<8x32xf32>
    %80 = arith.mulf %74, %78 : vector<8x32xf32>
    %81 = arith.addf %79, %80 : vector<8x32xf32>
    %82 = math.tanh %81 : vector<8x32xf32>
    %83 = arith.mulf %76, %82 : vector<8x32xf32>
    %c24_27 = arith.constant 24 : index
    %c0_28 = arith.constant 0 : index
    %84 = vector.load %arg6[%c24_27, %c0_28] : memref<64x32xf32, #tpu.memory_space<vmem>>, vector<8x32xf32>
    tpu.vector_store %arg6[%c24_27, %c0_28], %83 {strides = array<i32>} : memref<64x32xf32, #tpu.memory_space<vmem>>, vector<8x32xf32>,
    %c32_29 = arith.constant 32 : index
    %c0_30 = arith.constant 0 : index
    %85 = vector.load %arg4[%c32_29, %c0_30] : memref<64x128xf32, #tpu.memory_space<vmem>>, vector<8x128xf32>
    %cst_31 = arith.constant dense<0.000000e+00> : vector<8x128xf32>
    %86 = tpu.matmul %83, %3, %cst_31 {dimension_numbers = #tpu.dot_dimension_numbers<[1], [0], [0], [1], [0, 0, 1, 1], [], []>} : vector<8x32xf32>, vector<32x128xf32>, vector<8x128xf32> -> vector<8x128xf32>
    %87 = arith.addf %85, %86 : vector<8x128xf32>
    %88 = arith.negf %87 : vector<8x128xf32>
    %89 = math.exp %88 : vector<8x128xf32>
    %cst_32 = arith.constant 1.000000e+00 : f32
    %90 = vector.broadcast %cst_32 : f32 to vector<8x128xf32>
    %91 = arith.addf %90, %89 : vector<8x128xf32>
    %92 = arith.divf %90, %91 : vector<8x128xf32>
    %93 = vector.extract_strided_slice %92 {offsets = [0, 0], sizes = [8, 32], strides = [1, 1]} : vector<8x128xf32> to vector<8x32xf32>
    %94 = vector.extract_strided_slice %92 {offsets = [0, 32], sizes = [8, 32], strides = [1, 1]} : vector<8x128xf32> to vector<8x32xf32>
    %95 = vector.extract_strided_slice %92 {offsets = [0, 96], sizes = [8, 32], strides = [1, 1]} : vector<8x128xf32> to vector<8x32xf32>
    %96 = vector.extract_strided_slice %87 {offsets = [0, 64], sizes = [8, 32], strides = [1, 1]} : vector<8x128xf32> to vector<8x32xf32>
    %97 = math.tanh %96 : vector<8x32xf32>
    %98 = arith.mulf %94, %81 : vector<8x32xf32>
    %99 = arith.mulf %93, %97 : vector<8x32xf32>
    %100 = arith.addf %98, %99 : vector<8x32xf32>
    %101 = math.tanh %100 : vector<8x32xf32>
    %102 = arith.mulf %95, %101 : vector<8x32xf32>
    %c32_33 = arith.constant 32 : index
    %c0_34 = arith.constant 0 : index
    %103 = vector.load %arg6[%c32_33, %c0_34] : memref<64x32xf32, #tpu.memory_space<vmem>>, vector<8x32xf32>
    tpu.vector_store %arg6[%c32_33, %c0_34], %102 {strides = array<i32>} : memref<64x32xf32, #tpu.memory_space<vmem>>, vector<8x32xf32>,
    %c40 = arith.constant 40 : index
    %c0_35 = arith.constant 0 : index
    %104 = vector.load %arg4[%c40, %c0_35] : memref<64x128xf32, #tpu.memory_space<vmem>>, vector<8x128xf32>
    %cst_36 = arith.constant dense<0.000000e+00> : vector<8x128xf32>
    %105 = tpu.matmul %102, %3, %cst_36 {dimension_numbers = #tpu.dot_dimension_numbers<[1], [0], [0], [1], [0, 0, 1, 1], [], []>} : vector<8x32xf32>, vector<32x128xf32>, vector<8x128xf32> -> vector<8x128xf32>
    %106 = arith.addf %104, %105 : vector<8x128xf32>
    %107 = arith.negf %106 : vector<8x128xf32>
    %108 = math.exp %107 : vector<8x128xf32>
    %cst_37 = arith.constant 1.000000e+00 : f32
    %109 = vector.broadcast %cst_37 : f32 to vector<8x128xf32>
    %110 = arith.addf %109, %108 : vector<8x128xf32>
    %111 = arith.divf %109, %110 : vector<8x128xf32>
    %112 = vector.extract_strided_slice %111 {offsets = [0, 0], sizes = [8, 32], strides = [1, 1]} : vector<8x128xf32> to vector<8x32xf32>
    %113 = vector.extract_strided_slice %111 {offsets = [0, 32], sizes = [8, 32], strides = [1, 1]} : vector<8x128xf32> to vector<8x32xf32>
    %114 = vector.extract_strided_slice %111 {offsets = [0, 96], sizes = [8, 32], strides = [1, 1]} : vector<8x128xf32> to vector<8x32xf32>
    %115 = vector.extract_strided_slice %106 {offsets = [0, 64], sizes = [8, 32], strides = [1, 1]} : vector<8x128xf32> to vector<8x32xf32>
    %116 = math.tanh %115 : vector<8x32xf32>
    %117 = arith.mulf %113, %100 : vector<8x32xf32>
    %118 = arith.mulf %112, %116 : vector<8x32xf32>
    %119 = arith.addf %117, %118 : vector<8x32xf32>
    %120 = math.tanh %119 : vector<8x32xf32>
    %121 = arith.mulf %114, %120 : vector<8x32xf32>
    %c40_38 = arith.constant 40 : index
    %c0_39 = arith.constant 0 : index
    %122 = vector.load %arg6[%c40_38, %c0_39] : memref<64x32xf32, #tpu.memory_space<vmem>>, vector<8x32xf32>
    tpu.vector_store %arg6[%c40_38, %c0_39], %121 {strides = array<i32>} : memref<64x32xf32, #tpu.memory_space<vmem>>, vector<8x32xf32>,
    %c48 = arith.constant 48 : index
    %c0_40 = arith.constant 0 : index
    %123 = vector.load %arg4[%c48, %c0_40] : memref<64x128xf32, #tpu.memory_space<vmem>>, vector<8x128xf32>
    %cst_41 = arith.constant dense<0.000000e+00> : vector<8x128xf32>
    %124 = tpu.matmul %121, %3, %cst_41 {dimension_numbers = #tpu.dot_dimension_numbers<[1], [0], [0], [1], [0, 0, 1, 1], [], []>} : vector<8x32xf32>, vector<32x128xf32>, vector<8x128xf32> -> vector<8x128xf32>
    %125 = arith.addf %123, %124 : vector<8x128xf32>
    %126 = arith.negf %125 : vector<8x128xf32>
    %127 = math.exp %126 : vector<8x128xf32>
    %cst_42 = arith.constant 1.000000e+00 : f32
    %128 = vector.broadcast %cst_42 : f32 to vector<8x128xf32>
    %129 = arith.addf %128, %127 : vector<8x128xf32>
    %130 = arith.divf %128, %129 : vector<8x128xf32>
    %131 = vector.extract_strided_slice %130 {offsets = [0, 0], sizes = [8, 32], strides = [1, 1]} : vector<8x128xf32> to vector<8x32xf32>
    %132 = vector.extract_strided_slice %130 {offsets = [0, 32], sizes = [8, 32], strides = [1, 1]} : vector<8x128xf32> to vector<8x32xf32>
    %133 = vector.extract_strided_slice %130 {offsets = [0, 96], sizes = [8, 32], strides = [1, 1]} : vector<8x128xf32> to vector<8x32xf32>
    %134 = vector.extract_strided_slice %125 {offsets = [0, 64], sizes = [8, 32], strides = [1, 1]} : vector<8x128xf32> to vector<8x32xf32>
    %135 = math.tanh %134 : vector<8x32xf32>
    %136 = arith.mulf %132, %119 : vector<8x32xf32>
    %137 = arith.mulf %131, %135 : vector<8x32xf32>
    %138 = arith.addf %136, %137 : vector<8x32xf32>
    %139 = math.tanh %138 : vector<8x32xf32>
    %140 = arith.mulf %133, %139 : vector<8x32xf32>
    %c48_43 = arith.constant 48 : index
    %c0_44 = arith.constant 0 : index
    %141 = vector.load %arg6[%c48_43, %c0_44] : memref<64x32xf32, #tpu.memory_space<vmem>>, vector<8x32xf32>
    tpu.vector_store %arg6[%c48_43, %c0_44], %140 {strides = array<i32>} : memref<64x32xf32, #tpu.memory_space<vmem>>, vector<8x32xf32>,
    %c56 = arith.constant 56 : index
    %c0_45 = arith.constant 0 : index
    %142 = vector.load %arg4[%c56, %c0_45] : memref<64x128xf32, #tpu.memory_space<vmem>>, vector<8x128xf32>
    %cst_46 = arith.constant dense<0.000000e+00> : vector<8x128xf32>
    %143 = tpu.matmul %140, %3, %cst_46 {dimension_numbers = #tpu.dot_dimension_numbers<[1], [0], [0], [1], [0, 0, 1, 1], [], []>} : vector<8x32xf32>, vector<32x128xf32>, vector<8x128xf32> -> vector<8x128xf32>
    %144 = arith.addf %142, %143 : vector<8x128xf32>
    %145 = arith.negf %144 : vector<8x128xf32>
    %146 = math.exp %145 : vector<8x128xf32>
    %cst_47 = arith.constant 1.000000e+00 : f32
    %147 = vector.broadcast %cst_47 : f32 to vector<8x128xf32>
    %148 = arith.addf %147, %146 : vector<8x128xf32>
    %149 = arith.divf %147, %148 : vector<8x128xf32>
    %150 = vector.extract_strided_slice %149 {offsets = [0, 0], sizes = [8, 32], strides = [1, 1]} : vector<8x128xf32> to vector<8x32xf32>
    %151 = vector.extract_strided_slice %149 {offsets = [0, 32], sizes = [8, 32], strides = [1, 1]} : vector<8x128xf32> to vector<8x32xf32>
    %152 = vector.extract_strided_slice %149 {offsets = [0, 96], sizes = [8, 32], strides = [1, 1]} : vector<8x128xf32> to vector<8x32xf32>
    %153 = vector.extract_strided_slice %144 {offsets = [0, 64], sizes = [8, 32], strides = [1, 1]} : vector<8x128xf32> to vector<8x32xf32>
    %154 = math.tanh %153 : vector<8x32xf32>
    %155 = arith.mulf %151, %138 : vector<8x32xf32>
    %156 = arith.mulf %150, %154 : vector<8x32xf32>
    %157 = arith.addf %155, %156 : vector<8x32xf32>
    %158 = math.tanh %157 : vector<8x32xf32>
    %159 = arith.mulf %152, %158 : vector<8x32xf32>
    %c56_48 = arith.constant 56 : index
    %c0_49 = arith.constant 0 : index
    %160 = vector.load %arg6[%c56_48, %c0_49] : memref<64x32xf32, #tpu.memory_space<vmem>>, vector<8x32xf32>
    tpu.vector_store %arg6[%c56_48, %c0_49], %159 {strides = array<i32>} : memref<64x32xf32, #tpu.memory_space<vmem>>, vector<8x32xf32>,
    %c0_50 = arith.constant 0 : index
    %c0_51 = arith.constant 0 : index
    %161 = vector.load %arg6[%c0_50, %c0_51] : memref<64x32xf32, #tpu.memory_space<vmem>>, vector<64x32xf32>
    %c144 = arith.constant 144 : index
    %c0_52 = arith.constant 0 : index
    %162 = vector.load %arg1[%c144, %c0_52] : memref<288x128xf32, #tpu.memory_space<vmem>>, vector<32x128xf32>
    %c176 = arith.constant 176 : index
    %c0_53 = arith.constant 0 : index
    %163 = vector.load %arg1[%c176, %c0_53] : memref<288x128xf32, #tpu.memory_space<vmem>>, vector<32x128xf32>
    %c208 = arith.constant 208 : index
    %c0_54 = arith.constant 0 : index
    %164 = vector.load %arg1[%c208, %c0_54] : memref<288x128xf32, #tpu.memory_space<vmem>>, vector<1x128xf32>
    %cst_55 = arith.constant dense<0.000000e+00> : vector<64x128xf32>
    %165 = tpu.matmul %161, %162, %cst_55 {dimension_numbers = #tpu.dot_dimension_numbers<[1], [0], [0], [1], [0, 0, 1, 1], [], []>} : vector<64x32xf32>, vector<32x128xf32>, vector<64x128xf32> -> vector<64x128xf32>
    %166 = vector.broadcast %164 : vector<1x128xf32> to vector<64x128xf32>
    %167 = arith.addf %165, %166 : vector<64x128xf32>
    %c0_56 = arith.constant 0 : index
    %c0_57 = arith.constant 0 : index
    %168 = vector.load %arg4[%c0_56, %c0_57] : memref<64x128xf32, #tpu.memory_space<vmem>>, vector<64x128xf32>
    tpu.vector_store %arg4[%c0_56, %c0_57], %167 {strides = array<i32>} : memref<64x128xf32, #tpu.memory_space<vmem>>, vector<64x128xf32>,
    %c64_58 = arith.constant 64 : index
    %c0_59 = arith.constant 0 : index
    %169 = vector.load %arg0[%c64_58, %c0_59] : memref<128x32xf32, #tpu.memory_space<vmem>>, vector<64x32xf32>
    %c72 = arith.constant 72 : index
    %c0_60 = arith.constant 0 : index
    %170 = vector.load %arg1[%c72, %c0_60] : memref<288x128xf32, #tpu.memory_space<vmem>>, vector<32x128xf32>
    %c104 = arith.constant 104 : index
    %c0_61 = arith.constant 0 : index
    %171 = vector.load %arg1[%c104, %c0_61] : memref<288x128xf32, #tpu.memory_space<vmem>>, vector<32x128xf32>
    %c136 = arith.constant 136 : index
    %c0_62 = arith.constant 0 : index
    %172 = vector.load %arg1[%c136, %c0_62] : memref<288x128xf32, #tpu.memory_space<vmem>>, vector<1x128xf32>
    %cst_63 = arith.constant dense<0.000000e+00> : vector<64x128xf32>
    %173 = tpu.matmul %169, %170, %cst_63 {dimension_numbers = #tpu.dot_dimension_numbers<[1], [0], [0], [1], [0, 0, 1, 1], [], []>} : vector<64x32xf32>, vector<32x128xf32>, vector<64x128xf32> -> vector<64x128xf32>
    %174 = vector.broadcast %172 : vector<1x128xf32> to vector<64x128xf32>
    %175 = arith.addf %173, %174 : vector<64x128xf32>
    %c0_64 = arith.constant 0 : index
    %c0_65 = arith.constant 0 : index
    %176 = vector.load %arg5[%c0_64, %c0_65] : memref<64x128xf32, #tpu.memory_space<vmem>>, vector<64x128xf32>
    tpu.vector_store %arg5[%c0_64, %c0_65], %175 {strides = array<i32>} : memref<64x128xf32, #tpu.memory_space<vmem>>, vector<64x128xf32>,
    %c0_66 = arith.constant 0 : index
    %c0_67 = arith.constant 0 : index
    %177 = vector.load %arg4[%c0_66, %c0_67] : memref<64x128xf32, #tpu.memory_space<vmem>>, vector<8x128xf32>
    %cst_68 = arith.constant dense<0.000000e+00> : vector<8x128xf32>
    %178 = tpu.matmul %0, %163, %cst_68 {dimension_numbers = #tpu.dot_dimension_numbers<[1], [0], [0], [1], [0, 0, 1, 1], [], []>} : vector<8x32xf32>, vector<32x128xf32>, vector<8x128xf32> -> vector<8x128xf32>
    %179 = arith.addf %177, %178 : vector<8x128xf32>
    %180 = arith.negf %179 : vector<8x128xf32>
    %181 = math.exp %180 : vector<8x128xf32>
    %cst_69 = arith.constant 1.000000e+00 : f32
    %182 = vector.broadcast %cst_69 : f32 to vector<8x128xf32>
    %183 = arith.addf %182, %181 : vector<8x128xf32>
    %184 = arith.divf %182, %183 : vector<8x128xf32>
    %185 = vector.extract_strided_slice %184 {offsets = [0, 0], sizes = [8, 32], strides = [1, 1]} : vector<8x128xf32> to vector<8x32xf32>
    %186 = vector.extract_strided_slice %184 {offsets = [0, 32], sizes = [8, 32], strides = [1, 1]} : vector<8x128xf32> to vector<8x32xf32>
    %187 = vector.extract_strided_slice %184 {offsets = [0, 96], sizes = [8, 32], strides = [1, 1]} : vector<8x128xf32> to vector<8x32xf32>
    %188 = vector.extract_strided_slice %179 {offsets = [0, 64], sizes = [8, 32], strides = [1, 1]} : vector<8x128xf32> to vector<8x32xf32>
    %189 = math.tanh %188 : vector<8x32xf32>
    %190 = arith.mulf %186, %0 : vector<8x32xf32>
    %191 = arith.mulf %185, %189 : vector<8x32xf32>
    %192 = arith.addf %190, %191 : vector<8x32xf32>
    %193 = math.tanh %192 : vector<8x32xf32>
    %194 = arith.mulf %187, %193 : vector<8x32xf32>
    %c0_70 = arith.constant 0 : index
    %c0_71 = arith.constant 0 : index
    %195 = vector.load %arg7[%c0_70, %c0_71] : memref<64x32xf32, #tpu.memory_space<vmem>>, vector<8x32xf32>
    tpu.vector_store %arg7[%c0_70, %c0_71], %194 {strides = array<i32>} : memref<64x32xf32, #tpu.memory_space<vmem>>, vector<8x32xf32>,
    %c0_72 = arith.constant 0 : index
    %c0_73 = arith.constant 0 : index
    %196 = vector.load %arg5[%c0_72, %c0_73] : memref<64x128xf32, #tpu.memory_space<vmem>>, vector<8x128xf32>
    %cst_74 = arith.constant dense<0.000000e+00> : vector<8x128xf32>
    %197 = tpu.matmul %159, %171, %cst_74 {dimension_numbers = #tpu.dot_dimension_numbers<[1], [0], [0], [1], [0, 0, 1, 1], [], []>} : vector<8x32xf32>, vector<32x128xf32>, vector<8x128xf32> -> vector<8x128xf32>
    %198 = arith.addf %196, %197 : vector<8x128xf32>
    %199 = arith.negf %198 : vector<8x128xf32>
    %200 = math.exp %199 : vector<8x128xf32>
    %cst_75 = arith.constant 1.000000e+00 : f32
    %201 = vector.broadcast %cst_75 : f32 to vector<8x128xf32>
    %202 = arith.addf %201, %200 : vector<8x128xf32>
    %203 = arith.divf %201, %202 : vector<8x128xf32>
    %204 = vector.extract_strided_slice %203 {offsets = [0, 0], sizes = [8, 32], strides = [1, 1]} : vector<8x128xf32> to vector<8x32xf32>
    %205 = vector.extract_strided_slice %203 {offsets = [0, 32], sizes = [8, 32], strides = [1, 1]} : vector<8x128xf32> to vector<8x32xf32>
    %206 = vector.extract_strided_slice %203 {offsets = [0, 96], sizes = [8, 32], strides = [1, 1]} : vector<8x128xf32> to vector<8x32xf32>
    %207 = vector.extract_strided_slice %198 {offsets = [0, 64], sizes = [8, 32], strides = [1, 1]} : vector<8x128xf32> to vector<8x32xf32>
    %208 = math.tanh %207 : vector<8x32xf32>
    %209 = arith.mulf %205, %157 : vector<8x32xf32>
    %210 = arith.mulf %204, %208 : vector<8x32xf32>
    %211 = arith.addf %209, %210 : vector<8x32xf32>
    %212 = math.tanh %211 : vector<8x32xf32>
    %213 = arith.mulf %206, %212 : vector<8x32xf32>
    %c0_76 = arith.constant 0 : index
    %c0_77 = arith.constant 0 : index
    %214 = vector.load %arg8[%c0_76, %c0_77] : memref<64x32xf32, #tpu.memory_space<vmem>>, vector<8x32xf32>
    tpu.vector_store %arg8[%c0_76, %c0_77], %213 {strides = array<i32>} : memref<64x32xf32, #tpu.memory_space<vmem>>, vector<8x32xf32>,
    %c8_78 = arith.constant 8 : index
    %c0_79 = arith.constant 0 : index
    %215 = vector.load %arg4[%c8_78, %c0_79] : memref<64x128xf32, #tpu.memory_space<vmem>>, vector<8x128xf32>
    %cst_80 = arith.constant dense<0.000000e+00> : vector<8x128xf32>
    %216 = tpu.matmul %194, %163, %cst_80 {dimension_numbers = #tpu.dot_dimension_numbers<[1], [0], [0], [1], [0, 0, 1, 1], [], []>} : vector<8x32xf32>, vector<32x128xf32>, vector<8x128xf32> -> vector<8x128xf32>
    %217 = arith.addf %215, %216 : vector<8x128xf32>
    %218 = arith.negf %217 : vector<8x128xf32>
    %219 = math.exp %218 : vector<8x128xf32>
    %cst_81 = arith.constant 1.000000e+00 : f32
    %220 = vector.broadcast %cst_81 : f32 to vector<8x128xf32>
    %221 = arith.addf %220, %219 : vector<8x128xf32>
    %222 = arith.divf %220, %221 : vector<8x128xf32>
    %223 = vector.extract_strided_slice %222 {offsets = [0, 0], sizes = [8, 32], strides = [1, 1]} : vector<8x128xf32> to vector<8x32xf32>
    %224 = vector.extract_strided_slice %222 {offsets = [0, 32], sizes = [8, 32], strides = [1, 1]} : vector<8x128xf32> to vector<8x32xf32>
    %225 = vector.extract_strided_slice %222 {offsets = [0, 96], sizes = [8, 32], strides = [1, 1]} : vector<8x128xf32> to vector<8x32xf32>
    %226 = vector.extract_strided_slice %217 {offsets = [0, 64], sizes = [8, 32], strides = [1, 1]} : vector<8x128xf32> to vector<8x32xf32>
    %227 = math.tanh %226 : vector<8x32xf32>
    %228 = arith.mulf %224, %192 : vector<8x32xf32>
    %229 = arith.mulf %223, %227 : vector<8x32xf32>
    %230 = arith.addf %228, %229 : vector<8x32xf32>
    %231 = math.tanh %230 : vector<8x32xf32>
    %232 = arith.mulf %225, %231 : vector<8x32xf32>
    %c8_82 = arith.constant 8 : index
    %c0_83 = arith.constant 0 : index
    %233 = vector.load %arg7[%c8_82, %c0_83] : memref<64x32xf32, #tpu.memory_space<vmem>>, vector<8x32xf32>
    tpu.vector_store %arg7[%c8_82, %c0_83], %232 {strides = array<i32>} : memref<64x32xf32, #tpu.memory_space<vmem>>, vector<8x32xf32>,
    %c8_84 = arith.constant 8 : index
    %c0_85 = arith.constant 0 : index
    %234 = vector.load %arg5[%c8_84, %c0_85] : memref<64x128xf32, #tpu.memory_space<vmem>>, vector<8x128xf32>
    %cst_86 = arith.constant dense<0.000000e+00> : vector<8x128xf32>
    %235 = tpu.matmul %213, %171, %cst_86 {dimension_numbers = #tpu.dot_dimension_numbers<[1], [0], [0], [1], [0, 0, 1, 1], [], []>} : vector<8x32xf32>, vector<32x128xf32>, vector<8x128xf32> -> vector<8x128xf32>
    %236 = arith.addf %234, %235 : vector<8x128xf32>
    %237 = arith.negf %236 : vector<8x128xf32>
    %238 = math.exp %237 : vector<8x128xf32>
    %cst_87 = arith.constant 1.000000e+00 : f32
    %239 = vector.broadcast %cst_87 : f32 to vector<8x128xf32>
    %240 = arith.addf %239, %238 : vector<8x128xf32>
    %241 = arith.divf %239, %240 : vector<8x128xf32>
    %242 = vector.extract_strided_slice %241 {offsets = [0, 0], sizes = [8, 32], strides = [1, 1]} : vector<8x128xf32> to vector<8x32xf32>
    %243 = vector.extract_strided_slice %241 {offsets = [0, 32], sizes = [8, 32], strides = [1, 1]} : vector<8x128xf32> to vector<8x32xf32>
    %244 = vector.extract_strided_slice %241 {offsets = [0, 96], sizes = [8, 32], strides = [1, 1]} : vector<8x128xf32> to vector<8x32xf32>
    %245 = vector.extract_strided_slice %236 {offsets = [0, 64], sizes = [8, 32], strides = [1, 1]} : vector<8x128xf32> to vector<8x32xf32>
    %246 = math.tanh %245 : vector<8x32xf32>
    %247 = arith.mulf %243, %211 : vector<8x32xf32>
    %248 = arith.mulf %242, %246 : vector<8x32xf32>
    %249 = arith.addf %247, %248 : vector<8x32xf32>
    %250 = math.tanh %249 : vector<8x32xf32>
    %251 = arith.mulf %244, %250 : vector<8x32xf32>
    %c8_88 = arith.constant 8 : index
    %c0_89 = arith.constant 0 : index
    %252 = vector.load %arg8[%c8_88, %c0_89] : memref<64x32xf32, #tpu.memory_space<vmem>>, vector<8x32xf32>
    tpu.vector_store %arg8[%c8_88, %c0_89], %251 {strides = array<i32>} : memref<64x32xf32, #tpu.memory_space<vmem>>, vector<8x32xf32>,
    %c16_90 = arith.constant 16 : index
    %c0_91 = arith.constant 0 : index
    %253 = vector.load %arg4[%c16_90, %c0_91] : memref<64x128xf32, #tpu.memory_space<vmem>>, vector<8x128xf32>
    %cst_92 = arith.constant dense<0.000000e+00> : vector<8x128xf32>
    %254 = tpu.matmul %232, %163, %cst_92 {dimension_numbers = #tpu.dot_dimension_numbers<[1], [0], [0], [1], [0, 0, 1, 1], [], []>} : vector<8x32xf32>, vector<32x128xf32>, vector<8x128xf32> -> vector<8x128xf32>
    %255 = arith.addf %253, %254 : vector<8x128xf32>
    %256 = arith.negf %255 : vector<8x128xf32>
    %257 = math.exp %256 : vector<8x128xf32>
    %cst_93 = arith.constant 1.000000e+00 : f32
    %258 = vector.broadcast %cst_93 : f32 to vector<8x128xf32>
    %259 = arith.addf %258, %257 : vector<8x128xf32>
    %260 = arith.divf %258, %259 : vector<8x128xf32>
    %261 = vector.extract_strided_slice %260 {offsets = [0, 0], sizes = [8, 32], strides = [1, 1]} : vector<8x128xf32> to vector<8x32xf32>
    %262 = vector.extract_strided_slice %260 {offsets = [0, 32], sizes = [8, 32], strides = [1, 1]} : vector<8x128xf32> to vector<8x32xf32>
    %263 = vector.extract_strided_slice %260 {offsets = [0, 96], sizes = [8, 32], strides = [1, 1]} : vector<8x128xf32> to vector<8x32xf32>
    %264 = vector.extract_strided_slice %255 {offsets = [0, 64], sizes = [8, 32], strides = [1, 1]} : vector<8x128xf32> to vector<8x32xf32>
    %265 = math.tanh %264 : vector<8x32xf32>
    %266 = arith.mulf %262, %230 : vector<8x32xf32>
    %267 = arith.mulf %261, %265 : vector<8x32xf32>
    %268 = arith.addf %266, %267 : vector<8x32xf32>
    %269 = math.tanh %268 : vector<8x32xf32>
    %270 = arith.mulf %263, %269 : vector<8x32xf32>
    %c16_94 = arith.constant 16 : index
    %c0_95 = arith.constant 0 : index
    %271 = vector.load %arg7[%c16_94, %c0_95] : memref<64x32xf32, #tpu.memory_space<vmem>>, vector<8x32xf32>
    tpu.vector_store %arg7[%c16_94, %c0_95], %270 {strides = array<i32>} : memref<64x32xf32, #tpu.memory_space<vmem>>, vector<8x32xf32>,
    %c16_96 = arith.constant 16 : index
    %c0_97 = arith.constant 0 : index
    %272 = vector.load %arg5[%c16_96, %c0_97] : memref<64x128xf32, #tpu.memory_space<vmem>>, vector<8x128xf32>
    %cst_98 = arith.constant dense<0.000000e+00> : vector<8x128xf32>
    %273 = tpu.matmul %251, %171, %cst_98 {dimension_numbers = #tpu.dot_dimension_numbers<[1], [0], [0], [1], [0, 0, 1, 1], [], []>} : vector<8x32xf32>, vector<32x128xf32>, vector<8x128xf32> -> vector<8x128xf32>
    %274 = arith.addf %272, %273 : vector<8x128xf32>
    %275 = arith.negf %274 : vector<8x128xf32>
    %276 = math.exp %275 : vector<8x128xf32>
    %cst_99 = arith.constant 1.000000e+00 : f32
    %277 = vector.broadcast %cst_99 : f32 to vector<8x128xf32>
    %278 = arith.addf %277, %276 : vector<8x128xf32>
    %279 = arith.divf %277, %278 : vector<8x128xf32>
    %280 = vector.extract_strided_slice %279 {offsets = [0, 0], sizes = [8, 32], strides = [1, 1]} : vector<8x128xf32> to vector<8x32xf32>
    %281 = vector.extract_strided_slice %279 {offsets = [0, 32], sizes = [8, 32], strides = [1, 1]} : vector<8x128xf32> to vector<8x32xf32>
    %282 = vector.extract_strided_slice %279 {offsets = [0, 96], sizes = [8, 32], strides = [1, 1]} : vector<8x128xf32> to vector<8x32xf32>
    %283 = vector.extract_strided_slice %274 {offsets = [0, 64], sizes = [8, 32], strides = [1, 1]} : vector<8x128xf32> to vector<8x32xf32>
    %284 = math.tanh %283 : vector<8x32xf32>
    %285 = arith.mulf %281, %249 : vector<8x32xf32>
    %286 = arith.mulf %280, %284 : vector<8x32xf32>
    %287 = arith.addf %285, %286 : vector<8x32xf32>
    %288 = math.tanh %287 : vector<8x32xf32>
    %289 = arith.mulf %282, %288 : vector<8x32xf32>
    %c16_100 = arith.constant 16 : index
    %c0_101 = arith.constant 0 : index
    %290 = vector.load %arg8[%c16_100, %c0_101] : memref<64x32xf32, #tpu.memory_space<vmem>>, vector<8x32xf32>
    tpu.vector_store %arg8[%c16_100, %c0_101], %289 {strides = array<i32>} : memref<64x32xf32, #tpu.memory_space<vmem>>, vector<8x32xf32>,
    %c24_102 = arith.constant 24 : index
    %c0_103 = arith.constant 0 : index
    %291 = vector.load %arg4[%c24_102, %c0_103] : memref<64x128xf32, #tpu.memory_space<vmem>>, vector<8x128xf32>
    %cst_104 = arith.constant dense<0.000000e+00> : vector<8x128xf32>
    %292 = tpu.matmul %270, %163, %cst_104 {dimension_numbers = #tpu.dot_dimension_numbers<[1], [0], [0], [1], [0, 0, 1, 1], [], []>} : vector<8x32xf32>, vector<32x128xf32>, vector<8x128xf32> -> vector<8x128xf32>
    %293 = arith.addf %291, %292 : vector<8x128xf32>
    %294 = arith.negf %293 : vector<8x128xf32>
    %295 = math.exp %294 : vector<8x128xf32>
    %cst_105 = arith.constant 1.000000e+00 : f32
    %296 = vector.broadcast %cst_105 : f32 to vector<8x128xf32>
    %297 = arith.addf %296, %295 : vector<8x128xf32>
    %298 = arith.divf %296, %297 : vector<8x128xf32>
    %299 = vector.extract_strided_slice %298 {offsets = [0, 0], sizes = [8, 32], strides = [1, 1]} : vector<8x128xf32> to vector<8x32xf32>
    %300 = vector.extract_strided_slice %298 {offsets = [0, 32], sizes = [8, 32], strides = [1, 1]} : vector<8x128xf32> to vector<8x32xf32>
    %301 = vector.extract_strided_slice %298 {offsets = [0, 96], sizes = [8, 32], strides = [1, 1]} : vector<8x128xf32> to vector<8x32xf32>
    %302 = vector.extract_strided_slice %293 {offsets = [0, 64], sizes = [8, 32], strides = [1, 1]} : vector<8x128xf32> to vector<8x32xf32>
    %303 = math.tanh %302 : vector<8x32xf32>
    %304 = arith.mulf %300, %268 : vector<8x32xf32>
    %305 = arith.mulf %299, %303 : vector<8x32xf32>
    %306 = arith.addf %304, %305 : vector<8x32xf32>
    %307 = math.tanh %306 : vector<8x32xf32>
    %308 = arith.mulf %301, %307 : vector<8x32xf32>
    %c24_106 = arith.constant 24 : index
    %c0_107 = arith.constant 0 : index
    %309 = vector.load %arg7[%c24_106, %c0_107] : memref<64x32xf32, #tpu.memory_space<vmem>>, vector<8x32xf32>
    tpu.vector_store %arg7[%c24_106, %c0_107], %308 {strides = array<i32>} : memref<64x32xf32, #tpu.memory_space<vmem>>, vector<8x32xf32>,
    %c24_108 = arith.constant 24 : index
    %c0_109 = arith.constant 0 : index
    %310 = vector.load %arg5[%c24_108, %c0_109] : memref<64x128xf32, #tpu.memory_space<vmem>>, vector<8x128xf32>
    %cst_110 = arith.constant dense<0.000000e+00> : vector<8x128xf32>
    %311 = tpu.matmul %289, %171, %cst_110 {dimension_numbers = #tpu.dot_dimension_numbers<[1], [0], [0], [1], [0, 0, 1, 1], [], []>} : vector<8x32xf32>, vector<32x128xf32>, vector<8x128xf32> -> vector<8x128xf32>
    %312 = arith.addf %310, %311 : vector<8x128xf32>
    %313 = arith.negf %312 : vector<8x128xf32>
    %314 = math.exp %313 : vector<8x128xf32>
    %cst_111 = arith.constant 1.000000e+00 : f32
    %315 = vector.broadcast %cst_111 : f32 to vector<8x128xf32>
    %316 = arith.addf %315, %314 : vector<8x128xf32>
    %317 = arith.divf %315, %316 : vector<8x128xf32>
    %318 = vector.extract_strided_slice %317 {offsets = [0, 0], sizes = [8, 32], strides = [1, 1]} : vector<8x128xf32> to vector<8x32xf32>
    %319 = vector.extract_strided_slice %317 {offsets = [0, 32], sizes = [8, 32], strides = [1, 1]} : vector<8x128xf32> to vector<8x32xf32>
    %320 = vector.extract_strided_slice %317 {offsets = [0, 96], sizes = [8, 32], strides = [1, 1]} : vector<8x128xf32> to vector<8x32xf32>
    %321 = vector.extract_strided_slice %312 {offsets = [0, 64], sizes = [8, 32], strides = [1, 1]} : vector<8x128xf32> to vector<8x32xf32>
    %322 = math.tanh %321 : vector<8x32xf32>
    %323 = arith.mulf %319, %287 : vector<8x32xf32>
    %324 = arith.mulf %318, %322 : vector<8x32xf32>
    %325 = arith.addf %323, %324 : vector<8x32xf32>
    %326 = math.tanh %325 : vector<8x32xf32>
    %327 = arith.mulf %320, %326 : vector<8x32xf32>
    %c24_112 = arith.constant 24 : index
    %c0_113 = arith.constant 0 : index
    %328 = vector.load %arg8[%c24_112, %c0_113] : memref<64x32xf32, #tpu.memory_space<vmem>>, vector<8x32xf32>
    tpu.vector_store %arg8[%c24_112, %c0_113], %327 {strides = array<i32>} : memref<64x32xf32, #tpu.memory_space<vmem>>, vector<8x32xf32>,
    %c32_114 = arith.constant 32 : index
    %c0_115 = arith.constant 0 : index
    %329 = vector.load %arg4[%c32_114, %c0_115] : memref<64x128xf32, #tpu.memory_space<vmem>>, vector<8x128xf32>
    %cst_116 = arith.constant dense<0.000000e+00> : vector<8x128xf32>
    %330 = tpu.matmul %308, %163, %cst_116 {dimension_numbers = #tpu.dot_dimension_numbers<[1], [0], [0], [1], [0, 0, 1, 1], [], []>} : vector<8x32xf32>, vector<32x128xf32>, vector<8x128xf32> -> vector<8x128xf32>
    %331 = arith.addf %329, %330 : vector<8x128xf32>
    %332 = arith.negf %331 : vector<8x128xf32>
    %333 = math.exp %332 : vector<8x128xf32>
    %cst_117 = arith.constant 1.000000e+00 : f32
    %334 = vector.broadcast %cst_117 : f32 to vector<8x128xf32>
    %335 = arith.addf %334, %333 : vector<8x128xf32>
    %336 = arith.divf %334, %335 : vector<8x128xf32>
    %337 = vector.extract_strided_slice %336 {offsets = [0, 0], sizes = [8, 32], strides = [1, 1]} : vector<8x128xf32> to vector<8x32xf32>
    %338 = vector.extract_strided_slice %336 {offsets = [0, 32], sizes = [8, 32], strides = [1, 1]} : vector<8x128xf32> to vector<8x32xf32>
    %339 = vector.extract_strided_slice %336 {offsets = [0, 96], sizes = [8, 32], strides = [1, 1]} : vector<8x128xf32> to vector<8x32xf32>
    %340 = vector.extract_strided_slice %331 {offsets = [0, 64], sizes = [8, 32], strides = [1, 1]} : vector<8x128xf32> to vector<8x32xf32>
    %341 = math.tanh %340 : vector<8x32xf32>
    %342 = arith.mulf %338, %306 : vector<8x32xf32>
    %343 = arith.mulf %337, %341 : vector<8x32xf32>
    %344 = arith.addf %342, %343 : vector<8x32xf32>
    %345 = math.tanh %344 : vector<8x32xf32>
    %346 = arith.mulf %339, %345 : vector<8x32xf32>
    %c32_118 = arith.constant 32 : index
    %c0_119 = arith.constant 0 : index
    %347 = vector.load %arg7[%c32_118, %c0_119] : memref<64x32xf32, #tpu.memory_space<vmem>>, vector<8x32xf32>
    tpu.vector_store %arg7[%c32_118, %c0_119], %346 {strides = array<i32>} : memref<64x32xf32, #tpu.memory_space<vmem>>, vector<8x32xf32>,
    %c32_120 = arith.constant 32 : index
    %c0_121 = arith.constant 0 : index
    %348 = vector.load %arg5[%c32_120, %c0_121] : memref<64x128xf32, #tpu.memory_space<vmem>>, vector<8x128xf32>
    %cst_122 = arith.constant dense<0.000000e+00> : vector<8x128xf32>
    %349 = tpu.matmul %327, %171, %cst_122 {dimension_numbers = #tpu.dot_dimension_numbers<[1], [0], [0], [1], [0, 0, 1, 1], [], []>} : vector<8x32xf32>, vector<32x128xf32>, vector<8x128xf32> -> vector<8x128xf32>
    %350 = arith.addf %348, %349 : vector<8x128xf32>
    %351 = arith.negf %350 : vector<8x128xf32>
    %352 = math.exp %351 : vector<8x128xf32>
    %cst_123 = arith.constant 1.000000e+00 : f32
    %353 = vector.broadcast %cst_123 : f32 to vector<8x128xf32>
    %354 = arith.addf %353, %352 : vector<8x128xf32>
    %355 = arith.divf %353, %354 : vector<8x128xf32>
    %356 = vector.extract_strided_slice %355 {offsets = [0, 0], sizes = [8, 32], strides = [1, 1]} : vector<8x128xf32> to vector<8x32xf32>
    %357 = vector.extract_strided_slice %355 {offsets = [0, 32], sizes = [8, 32], strides = [1, 1]} : vector<8x128xf32> to vector<8x32xf32>
    %358 = vector.extract_strided_slice %355 {offsets = [0, 96], sizes = [8, 32], strides = [1, 1]} : vector<8x128xf32> to vector<8x32xf32>
    %359 = vector.extract_strided_slice %350 {offsets = [0, 64], sizes = [8, 32], strides = [1, 1]} : vector<8x128xf32> to vector<8x32xf32>
    %360 = math.tanh %359 : vector<8x32xf32>
    %361 = arith.mulf %357, %325 : vector<8x32xf32>
    %362 = arith.mulf %356, %360 : vector<8x32xf32>
    %363 = arith.addf %361, %362 : vector<8x32xf32>
    %364 = math.tanh %363 : vector<8x32xf32>
    %365 = arith.mulf %358, %364 : vector<8x32xf32>
    %c32_124 = arith.constant 32 : index
    %c0_125 = arith.constant 0 : index
    %366 = vector.load %arg8[%c32_124, %c0_125] : memref<64x32xf32, #tpu.memory_space<vmem>>, vector<8x32xf32>
    tpu.vector_store %arg8[%c32_124, %c0_125], %365 {strides = array<i32>} : memref<64x32xf32, #tpu.memory_space<vmem>>, vector<8x32xf32>,
    %c40_126 = arith.constant 40 : index
    %c0_127 = arith.constant 0 : index
    %367 = vector.load %arg4[%c40_126, %c0_127] : memref<64x128xf32, #tpu.memory_space<vmem>>, vector<8x128xf32>
    %cst_128 = arith.constant dense<0.000000e+00> : vector<8x128xf32>
    %368 = tpu.matmul %346, %163, %cst_128 {dimension_numbers = #tpu.dot_dimension_numbers<[1], [0], [0], [1], [0, 0, 1, 1], [], []>} : vector<8x32xf32>, vector<32x128xf32>, vector<8x128xf32> -> vector<8x128xf32>
    %369 = arith.addf %367, %368 : vector<8x128xf32>
    %370 = arith.negf %369 : vector<8x128xf32>
    %371 = math.exp %370 : vector<8x128xf32>
    %cst_129 = arith.constant 1.000000e+00 : f32
    %372 = vector.broadcast %cst_129 : f32 to vector<8x128xf32>
    %373 = arith.addf %372, %371 : vector<8x128xf32>
    %374 = arith.divf %372, %373 : vector<8x128xf32>
    %375 = vector.extract_strided_slice %374 {offsets = [0, 0], sizes = [8, 32], strides = [1, 1]} : vector<8x128xf32> to vector<8x32xf32>
    %376 = vector.extract_strided_slice %374 {offsets = [0, 32], sizes = [8, 32], strides = [1, 1]} : vector<8x128xf32> to vector<8x32xf32>
    %377 = vector.extract_strided_slice %374 {offsets = [0, 96], sizes = [8, 32], strides = [1, 1]} : vector<8x128xf32> to vector<8x32xf32>
    %378 = vector.extract_strided_slice %369 {offsets = [0, 64], sizes = [8, 32], strides = [1, 1]} : vector<8x128xf32> to vector<8x32xf32>
    %379 = math.tanh %378 : vector<8x32xf32>
    %380 = arith.mulf %376, %344 : vector<8x32xf32>
    %381 = arith.mulf %375, %379 : vector<8x32xf32>
    %382 = arith.addf %380, %381 : vector<8x32xf32>
    %383 = math.tanh %382 : vector<8x32xf32>
    %384 = arith.mulf %377, %383 : vector<8x32xf32>
    %c40_130 = arith.constant 40 : index
    %c0_131 = arith.constant 0 : index
    %385 = vector.load %arg7[%c40_130, %c0_131] : memref<64x32xf32, #tpu.memory_space<vmem>>, vector<8x32xf32>
    tpu.vector_store %arg7[%c40_130, %c0_131], %384 {strides = array<i32>} : memref<64x32xf32, #tpu.memory_space<vmem>>, vector<8x32xf32>,
    %c40_132 = arith.constant 40 : index
    %c0_133 = arith.constant 0 : index
    %386 = vector.load %arg5[%c40_132, %c0_133] : memref<64x128xf32, #tpu.memory_space<vmem>>, vector<8x128xf32>
    %cst_134 = arith.constant dense<0.000000e+00> : vector<8x128xf32>
    %387 = tpu.matmul %365, %171, %cst_134 {dimension_numbers = #tpu.dot_dimension_numbers<[1], [0], [0], [1], [0, 0, 1, 1], [], []>} : vector<8x32xf32>, vector<32x128xf32>, vector<8x128xf32> -> vector<8x128xf32>
    %388 = arith.addf %386, %387 : vector<8x128xf32>
    %389 = arith.negf %388 : vector<8x128xf32>
    %390 = math.exp %389 : vector<8x128xf32>
    %cst_135 = arith.constant 1.000000e+00 : f32
    %391 = vector.broadcast %cst_135 : f32 to vector<8x128xf32>
    %392 = arith.addf %391, %390 : vector<8x128xf32>
    %393 = arith.divf %391, %392 : vector<8x128xf32>
    %394 = vector.extract_strided_slice %393 {offsets = [0, 0], sizes = [8, 32], strides = [1, 1]} : vector<8x128xf32> to vector<8x32xf32>
    %395 = vector.extract_strided_slice %393 {offsets = [0, 32], sizes = [8, 32], strides = [1, 1]} : vector<8x128xf32> to vector<8x32xf32>
    %396 = vector.extract_strided_slice %393 {offsets = [0, 96], sizes = [8, 32], strides = [1, 1]} : vector<8x128xf32> to vector<8x32xf32>
    %397 = vector.extract_strided_slice %388 {offsets = [0, 64], sizes = [8, 32], strides = [1, 1]} : vector<8x128xf32> to vector<8x32xf32>
    %398 = math.tanh %397 : vector<8x32xf32>
    %399 = arith.mulf %395, %363 : vector<8x32xf32>
    %400 = arith.mulf %394, %398 : vector<8x32xf32>
    %401 = arith.addf %399, %400 : vector<8x32xf32>
    %402 = math.tanh %401 : vector<8x32xf32>
    %403 = arith.mulf %396, %402 : vector<8x32xf32>
    %c40_136 = arith.constant 40 : index
    %c0_137 = arith.constant 0 : index
    %404 = vector.load %arg8[%c40_136, %c0_137] : memref<64x32xf32, #tpu.memory_space<vmem>>, vector<8x32xf32>
    tpu.vector_store %arg8[%c40_136, %c0_137], %403 {strides = array<i32>} : memref<64x32xf32, #tpu.memory_space<vmem>>, vector<8x32xf32>,
    %c48_138 = arith.constant 48 : index
    %c0_139 = arith.constant 0 : index
    %405 = vector.load %arg4[%c48_138, %c0_139] : memref<64x128xf32, #tpu.memory_space<vmem>>, vector<8x128xf32>
    %cst_140 = arith.constant dense<0.000000e+00> : vector<8x128xf32>
    %406 = tpu.matmul %384, %163, %cst_140 {dimension_numbers = #tpu.dot_dimension_numbers<[1], [0], [0], [1], [0, 0, 1, 1], [], []>} : vector<8x32xf32>, vector<32x128xf32>, vector<8x128xf32> -> vector<8x128xf32>
    %407 = arith.addf %405, %406 : vector<8x128xf32>
    %408 = arith.negf %407 : vector<8x128xf32>
    %409 = math.exp %408 : vector<8x128xf32>
    %cst_141 = arith.constant 1.000000e+00 : f32
    %410 = vector.broadcast %cst_141 : f32 to vector<8x128xf32>
    %411 = arith.addf %410, %409 : vector<8x128xf32>
    %412 = arith.divf %410, %411 : vector<8x128xf32>
    %413 = vector.extract_strided_slice %412 {offsets = [0, 0], sizes = [8, 32], strides = [1, 1]} : vector<8x128xf32> to vector<8x32xf32>
    %414 = vector.extract_strided_slice %412 {offsets = [0, 32], sizes = [8, 32], strides = [1, 1]} : vector<8x128xf32> to vector<8x32xf32>
    %415 = vector.extract_strided_slice %412 {offsets = [0, 96], sizes = [8, 32], strides = [1, 1]} : vector<8x128xf32> to vector<8x32xf32>
    %416 = vector.extract_strided_slice %407 {offsets = [0, 64], sizes = [8, 32], strides = [1, 1]} : vector<8x128xf32> to vector<8x32xf32>
    %417 = math.tanh %416 : vector<8x32xf32>
    %418 = arith.mulf %414, %382 : vector<8x32xf32>
    %419 = arith.mulf %413, %417 : vector<8x32xf32>
    %420 = arith.addf %418, %419 : vector<8x32xf32>
    %421 = math.tanh %420 : vector<8x32xf32>
    %422 = arith.mulf %415, %421 : vector<8x32xf32>
    %c48_142 = arith.constant 48 : index
    %c0_143 = arith.constant 0 : index
    %423 = vector.load %arg7[%c48_142, %c0_143] : memref<64x32xf32, #tpu.memory_space<vmem>>, vector<8x32xf32>
    tpu.vector_store %arg7[%c48_142, %c0_143], %422 {strides = array<i32>} : memref<64x32xf32, #tpu.memory_space<vmem>>, vector<8x32xf32>,
    %c48_144 = arith.constant 48 : index
    %c0_145 = arith.constant 0 : index
    %424 = vector.load %arg5[%c48_144, %c0_145] : memref<64x128xf32, #tpu.memory_space<vmem>>, vector<8x128xf32>
    %cst_146 = arith.constant dense<0.000000e+00> : vector<8x128xf32>
    %425 = tpu.matmul %403, %171, %cst_146 {dimension_numbers = #tpu.dot_dimension_numbers<[1], [0], [0], [1], [0, 0, 1, 1], [], []>} : vector<8x32xf32>, vector<32x128xf32>, vector<8x128xf32> -> vector<8x128xf32>
    %426 = arith.addf %424, %425 : vector<8x128xf32>
    %427 = arith.negf %426 : vector<8x128xf32>
    %428 = math.exp %427 : vector<8x128xf32>
    %cst_147 = arith.constant 1.000000e+00 : f32
    %429 = vector.broadcast %cst_147 : f32 to vector<8x128xf32>
    %430 = arith.addf %429, %428 : vector<8x128xf32>
    %431 = arith.divf %429, %430 : vector<8x128xf32>
    %432 = vector.extract_strided_slice %431 {offsets = [0, 0], sizes = [8, 32], strides = [1, 1]} : vector<8x128xf32> to vector<8x32xf32>
    %433 = vector.extract_strided_slice %431 {offsets = [0, 32], sizes = [8, 32], strides = [1, 1]} : vector<8x128xf32> to vector<8x32xf32>
    %434 = vector.extract_strided_slice %431 {offsets = [0, 96], sizes = [8, 32], strides = [1, 1]} : vector<8x128xf32> to vector<8x32xf32>
    %435 = vector.extract_strided_slice %426 {offsets = [0, 64], sizes = [8, 32], strides = [1, 1]} : vector<8x128xf32> to vector<8x32xf32>
    %436 = math.tanh %435 : vector<8x32xf32>
    %437 = arith.mulf %433, %401 : vector<8x32xf32>
    %438 = arith.mulf %432, %436 : vector<8x32xf32>
    %439 = arith.addf %437, %438 : vector<8x32xf32>
    %440 = math.tanh %439 : vector<8x32xf32>
    %441 = arith.mulf %434, %440 : vector<8x32xf32>
    %c48_148 = arith.constant 48 : index
    %c0_149 = arith.constant 0 : index
    %442 = vector.load %arg8[%c48_148, %c0_149] : memref<64x32xf32, #tpu.memory_space<vmem>>, vector<8x32xf32>
    tpu.vector_store %arg8[%c48_148, %c0_149], %441 {strides = array<i32>} : memref<64x32xf32, #tpu.memory_space<vmem>>, vector<8x32xf32>,
    %c56_150 = arith.constant 56 : index
    %c0_151 = arith.constant 0 : index
    %443 = vector.load %arg4[%c56_150, %c0_151] : memref<64x128xf32, #tpu.memory_space<vmem>>, vector<8x128xf32>
    %cst_152 = arith.constant dense<0.000000e+00> : vector<8x128xf32>
    %444 = tpu.matmul %422, %163, %cst_152 {dimension_numbers = #tpu.dot_dimension_numbers<[1], [0], [0], [1], [0, 0, 1, 1], [], []>} : vector<8x32xf32>, vector<32x128xf32>, vector<8x128xf32> -> vector<8x128xf32>
    %445 = arith.addf %443, %444 : vector<8x128xf32>
    %446 = arith.negf %445 : vector<8x128xf32>
    %447 = math.exp %446 : vector<8x128xf32>
    %cst_153 = arith.constant 1.000000e+00 : f32
    %448 = vector.broadcast %cst_153 : f32 to vector<8x128xf32>
    %449 = arith.addf %448, %447 : vector<8x128xf32>
    %450 = arith.divf %448, %449 : vector<8x128xf32>
    %451 = vector.extract_strided_slice %450 {offsets = [0, 0], sizes = [8, 32], strides = [1, 1]} : vector<8x128xf32> to vector<8x32xf32>
    %452 = vector.extract_strided_slice %450 {offsets = [0, 32], sizes = [8, 32], strides = [1, 1]} : vector<8x128xf32> to vector<8x32xf32>
    %453 = vector.extract_strided_slice %450 {offsets = [0, 96], sizes = [8, 32], strides = [1, 1]} : vector<8x128xf32> to vector<8x32xf32>
    %454 = vector.extract_strided_slice %445 {offsets = [0, 64], sizes = [8, 32], strides = [1, 1]} : vector<8x128xf32> to vector<8x32xf32>
    %455 = math.tanh %454 : vector<8x32xf32>
    %456 = arith.mulf %452, %420 : vector<8x32xf32>
    %457 = arith.mulf %451, %455 : vector<8x32xf32>
    %458 = arith.addf %456, %457 : vector<8x32xf32>
    %459 = math.tanh %458 : vector<8x32xf32>
    %460 = arith.mulf %453, %459 : vector<8x32xf32>
    %c56_154 = arith.constant 56 : index
    %c0_155 = arith.constant 0 : index
    %461 = vector.load %arg7[%c56_154, %c0_155] : memref<64x32xf32, #tpu.memory_space<vmem>>, vector<8x32xf32>
    tpu.vector_store %arg7[%c56_154, %c0_155], %460 {strides = array<i32>} : memref<64x32xf32, #tpu.memory_space<vmem>>, vector<8x32xf32>,
    %c56_156 = arith.constant 56 : index
    %c0_157 = arith.constant 0 : index
    %462 = vector.load %arg5[%c56_156, %c0_157] : memref<64x128xf32, #tpu.memory_space<vmem>>, vector<8x128xf32>
    %cst_158 = arith.constant dense<0.000000e+00> : vector<8x128xf32>
    %463 = tpu.matmul %441, %171, %cst_158 {dimension_numbers = #tpu.dot_dimension_numbers<[1], [0], [0], [1], [0, 0, 1, 1], [], []>} : vector<8x32xf32>, vector<32x128xf32>, vector<8x128xf32> -> vector<8x128xf32>
    %464 = arith.addf %462, %463 : vector<8x128xf32>
    %465 = arith.negf %464 : vector<8x128xf32>
    %466 = math.exp %465 : vector<8x128xf32>
    %cst_159 = arith.constant 1.000000e+00 : f32
    %467 = vector.broadcast %cst_159 : f32 to vector<8x128xf32>
    %468 = arith.addf %467, %466 : vector<8x128xf32>
    %469 = arith.divf %467, %468 : vector<8x128xf32>
    %470 = vector.extract_strided_slice %469 {offsets = [0, 0], sizes = [8, 32], strides = [1, 1]} : vector<8x128xf32> to vector<8x32xf32>
    %471 = vector.extract_strided_slice %469 {offsets = [0, 32], sizes = [8, 32], strides = [1, 1]} : vector<8x128xf32> to vector<8x32xf32>
    %472 = vector.extract_strided_slice %469 {offsets = [0, 96], sizes = [8, 32], strides = [1, 1]} : vector<8x128xf32> to vector<8x32xf32>
    %473 = vector.extract_strided_slice %464 {offsets = [0, 64], sizes = [8, 32], strides = [1, 1]} : vector<8x128xf32> to vector<8x32xf32>
    %474 = math.tanh %473 : vector<8x32xf32>
    %475 = arith.mulf %471, %439 : vector<8x32xf32>
    %476 = arith.mulf %470, %474 : vector<8x32xf32>
    %477 = arith.addf %475, %476 : vector<8x32xf32>
    %478 = math.tanh %477 : vector<8x32xf32>
    %479 = arith.mulf %472, %478 : vector<8x32xf32>
    %c56_160 = arith.constant 56 : index
    %c0_161 = arith.constant 0 : index
    %480 = vector.load %arg8[%c56_160, %c0_161] : memref<64x32xf32, #tpu.memory_space<vmem>>, vector<8x32xf32>
    tpu.vector_store %arg8[%c56_160, %c0_161], %479 {strides = array<i32>} : memref<64x32xf32, #tpu.memory_space<vmem>>, vector<8x32xf32>,
    %c0_162 = arith.constant 0 : index
    %c0_163 = arith.constant 0 : index
    %481 = vector.load %arg8[%c0_162, %c0_163] : memref<64x32xf32, #tpu.memory_space<vmem>>, vector<64x32xf32>
    %c216 = arith.constant 216 : index
    %c0_164 = arith.constant 0 : index
    %482 = vector.load %arg1[%c216, %c0_164] : memref<288x128xf32, #tpu.memory_space<vmem>>, vector<32x128xf32>
    %c248 = arith.constant 248 : index
    %c0_165 = arith.constant 0 : index
    %483 = vector.load %arg1[%c248, %c0_165] : memref<288x128xf32, #tpu.memory_space<vmem>>, vector<32x128xf32>
    %c280 = arith.constant 280 : index
    %c0_166 = arith.constant 0 : index
    %484 = vector.load %arg1[%c280, %c0_166] : memref<288x128xf32, #tpu.memory_space<vmem>>, vector<1x128xf32>
    %cst_167 = arith.constant dense<0.000000e+00> : vector<64x128xf32>
    %485 = tpu.matmul %481, %482, %cst_167 {dimension_numbers = #tpu.dot_dimension_numbers<[1], [0], [0], [1], [0, 0, 1, 1], [], []>} : vector<64x32xf32>, vector<32x128xf32>, vector<64x128xf32> -> vector<64x128xf32>
    %486 = vector.broadcast %484 : vector<1x128xf32> to vector<64x128xf32>
    %487 = arith.addf %485, %486 : vector<64x128xf32>
    %c0_168 = arith.constant 0 : index
    %c0_169 = arith.constant 0 : index
    %488 = vector.load %arg5[%c0_168, %c0_169] : memref<64x128xf32, #tpu.memory_space<vmem>>, vector<64x128xf32>
    tpu.vector_store %arg5[%c0_168, %c0_169], %487 {strides = array<i32>} : memref<64x128xf32, #tpu.memory_space<vmem>>, vector<64x128xf32>,
    %c0_170 = arith.constant 0 : index
    %c0_171 = arith.constant 0 : index
    %489 = vector.load %arg5[%c0_170, %c0_171] : memref<64x128xf32, #tpu.memory_space<vmem>>, vector<8x128xf32>
    %cst_172 = arith.constant dense<0.000000e+00> : vector<8x128xf32>
    %490 = tpu.matmul %460, %483, %cst_172 {dimension_numbers = #tpu.dot_dimension_numbers<[1], [0], [0], [1], [0, 0, 1, 1], [], []>} : vector<8x32xf32>, vector<32x128xf32>, vector<8x128xf32> -> vector<8x128xf32>
    %491 = arith.addf %489, %490 : vector<8x128xf32>
    %492 = arith.negf %491 : vector<8x128xf32>
    %493 = math.exp %492 : vector<8x128xf32>
    %cst_173 = arith.constant 1.000000e+00 : f32
    %494 = vector.broadcast %cst_173 : f32 to vector<8x128xf32>
    %495 = arith.addf %494, %493 : vector<8x128xf32>
    %496 = arith.divf %494, %495 : vector<8x128xf32>
    %497 = vector.extract_strided_slice %496 {offsets = [0, 0], sizes = [8, 32], strides = [1, 1]} : vector<8x128xf32> to vector<8x32xf32>
    %498 = vector.extract_strided_slice %496 {offsets = [0, 32], sizes = [8, 32], strides = [1, 1]} : vector<8x128xf32> to vector<8x32xf32>
    %499 = vector.extract_strided_slice %496 {offsets = [0, 96], sizes = [8, 32], strides = [1, 1]} : vector<8x128xf32> to vector<8x32xf32>
    %500 = vector.extract_strided_slice %491 {offsets = [0, 64], sizes = [8, 32], strides = [1, 1]} : vector<8x128xf32> to vector<8x32xf32>
    %501 = math.tanh %500 : vector<8x32xf32>
    %502 = arith.mulf %498, %458 : vector<8x32xf32>
    %503 = arith.mulf %497, %501 : vector<8x32xf32>
    %504 = arith.addf %502, %503 : vector<8x32xf32>
    %505 = math.tanh %504 : vector<8x32xf32>
    %506 = arith.mulf %499, %505 : vector<8x32xf32>
    %c0_174 = arith.constant 0 : index
    %c0_175 = arith.constant 0 : index
    %507 = vector.load %arg9[%c0_174, %c0_175] : memref<64x32xf32, #tpu.memory_space<vmem>>, vector<8x32xf32>
    tpu.vector_store %arg9[%c0_174, %c0_175], %506 {strides = array<i32>} : memref<64x32xf32, #tpu.memory_space<vmem>>, vector<8x32xf32>,
    %c8_176 = arith.constant 8 : index
    %c0_177 = arith.constant 0 : index
    %508 = vector.load %arg5[%c8_176, %c0_177] : memref<64x128xf32, #tpu.memory_space<vmem>>, vector<8x128xf32>
    %cst_178 = arith.constant dense<0.000000e+00> : vector<8x128xf32>
    %509 = tpu.matmul %506, %483, %cst_178 {dimension_numbers = #tpu.dot_dimension_numbers<[1], [0], [0], [1], [0, 0, 1, 1], [], []>} : vector<8x32xf32>, vector<32x128xf32>, vector<8x128xf32> -> vector<8x128xf32>
    %510 = arith.addf %508, %509 : vector<8x128xf32>
    %511 = arith.negf %510 : vector<8x128xf32>
    %512 = math.exp %511 : vector<8x128xf32>
    %cst_179 = arith.constant 1.000000e+00 : f32
    %513 = vector.broadcast %cst_179 : f32 to vector<8x128xf32>
    %514 = arith.addf %513, %512 : vector<8x128xf32>
    %515 = arith.divf %513, %514 : vector<8x128xf32>
    %516 = vector.extract_strided_slice %515 {offsets = [0, 0], sizes = [8, 32], strides = [1, 1]} : vector<8x128xf32> to vector<8x32xf32>
    %517 = vector.extract_strided_slice %515 {offsets = [0, 32], sizes = [8, 32], strides = [1, 1]} : vector<8x128xf32> to vector<8x32xf32>
    %518 = vector.extract_strided_slice %515 {offsets = [0, 96], sizes = [8, 32], strides = [1, 1]} : vector<8x128xf32> to vector<8x32xf32>
    %519 = vector.extract_strided_slice %510 {offsets = [0, 64], sizes = [8, 32], strides = [1, 1]} : vector<8x128xf32> to vector<8x32xf32>
    %520 = math.tanh %519 : vector<8x32xf32>
    %521 = arith.mulf %517, %504 : vector<8x32xf32>
    %522 = arith.mulf %516, %520 : vector<8x32xf32>
    %523 = arith.addf %521, %522 : vector<8x32xf32>
    %524 = math.tanh %523 : vector<8x32xf32>
    %525 = arith.mulf %518, %524 : vector<8x32xf32>
    %c8_180 = arith.constant 8 : index
    %c0_181 = arith.constant 0 : index
    %526 = vector.load %arg9[%c8_180, %c0_181] : memref<64x32xf32, #tpu.memory_space<vmem>>, vector<8x32xf32>
    tpu.vector_store %arg9[%c8_180, %c0_181], %525 {strides = array<i32>} : memref<64x32xf32, #tpu.memory_space<vmem>>, vector<8x32xf32>,
    %c16_182 = arith.constant 16 : index
    %c0_183 = arith.constant 0 : index
    %527 = vector.load %arg5[%c16_182, %c0_183] : memref<64x128xf32, #tpu.memory_space<vmem>>, vector<8x128xf32>
    %cst_184 = arith.constant dense<0.000000e+00> : vector<8x128xf32>
    %528 = tpu.matmul %525, %483, %cst_184 {dimension_numbers = #tpu.dot_dimension_numbers<[1], [0], [0], [1], [0, 0, 1, 1], [], []>} : vector<8x32xf32>, vector<32x128xf32>, vector<8x128xf32> -> vector<8x128xf32>
    %529 = arith.addf %527, %528 : vector<8x128xf32>
    %530 = arith.negf %529 : vector<8x128xf32>
    %531 = math.exp %530 : vector<8x128xf32>
    %cst_185 = arith.constant 1.000000e+00 : f32
    %532 = vector.broadcast %cst_185 : f32 to vector<8x128xf32>
    %533 = arith.addf %532, %531 : vector<8x128xf32>
    %534 = arith.divf %532, %533 : vector<8x128xf32>
    %535 = vector.extract_strided_slice %534 {offsets = [0, 0], sizes = [8, 32], strides = [1, 1]} : vector<8x128xf32> to vector<8x32xf32>
    %536 = vector.extract_strided_slice %534 {offsets = [0, 32], sizes = [8, 32], strides = [1, 1]} : vector<8x128xf32> to vector<8x32xf32>
    %537 = vector.extract_strided_slice %534 {offsets = [0, 96], sizes = [8, 32], strides = [1, 1]} : vector<8x128xf32> to vector<8x32xf32>
    %538 = vector.extract_strided_slice %529 {offsets = [0, 64], sizes = [8, 32], strides = [1, 1]} : vector<8x128xf32> to vector<8x32xf32>
    %539 = math.tanh %538 : vector<8x32xf32>
    %540 = arith.mulf %536, %523 : vector<8x32xf32>
    %541 = arith.mulf %535, %539 : vector<8x32xf32>
    %542 = arith.addf %540, %541 : vector<8x32xf32>
    %543 = math.tanh %542 : vector<8x32xf32>
    %544 = arith.mulf %537, %543 : vector<8x32xf32>
    %c16_186 = arith.constant 16 : index
    %c0_187 = arith.constant 0 : index
    %545 = vector.load %arg9[%c16_186, %c0_187] : memref<64x32xf32, #tpu.memory_space<vmem>>, vector<8x32xf32>
    tpu.vector_store %arg9[%c16_186, %c0_187], %544 {strides = array<i32>} : memref<64x32xf32, #tpu.memory_space<vmem>>, vector<8x32xf32>,
    %c24_188 = arith.constant 24 : index
    %c0_189 = arith.constant 0 : index
    %546 = vector.load %arg5[%c24_188, %c0_189] : memref<64x128xf32, #tpu.memory_space<vmem>>, vector<8x128xf32>
    %cst_190 = arith.constant dense<0.000000e+00> : vector<8x128xf32>
    %547 = tpu.matmul %544, %483, %cst_190 {dimension_numbers = #tpu.dot_dimension_numbers<[1], [0], [0], [1], [0, 0, 1, 1], [], []>} : vector<8x32xf32>, vector<32x128xf32>, vector<8x128xf32> -> vector<8x128xf32>
    %548 = arith.addf %546, %547 : vector<8x128xf32>
    %549 = arith.negf %548 : vector<8x128xf32>
    %550 = math.exp %549 : vector<8x128xf32>
    %cst_191 = arith.constant 1.000000e+00 : f32
    %551 = vector.broadcast %cst_191 : f32 to vector<8x128xf32>
    %552 = arith.addf %551, %550 : vector<8x128xf32>
    %553 = arith.divf %551, %552 : vector<8x128xf32>
    %554 = vector.extract_strided_slice %553 {offsets = [0, 0], sizes = [8, 32], strides = [1, 1]} : vector<8x128xf32> to vector<8x32xf32>
    %555 = vector.extract_strided_slice %553 {offsets = [0, 32], sizes = [8, 32], strides = [1, 1]} : vector<8x128xf32> to vector<8x32xf32>
    %556 = vector.extract_strided_slice %553 {offsets = [0, 96], sizes = [8, 32], strides = [1, 1]} : vector<8x128xf32> to vector<8x32xf32>
    %557 = vector.extract_strided_slice %548 {offsets = [0, 64], sizes = [8, 32], strides = [1, 1]} : vector<8x128xf32> to vector<8x32xf32>
    %558 = math.tanh %557 : vector<8x32xf32>
    %559 = arith.mulf %555, %542 : vector<8x32xf32>
    %560 = arith.mulf %554, %558 : vector<8x32xf32>
    %561 = arith.addf %559, %560 : vector<8x32xf32>
    %562 = math.tanh %561 : vector<8x32xf32>
    %563 = arith.mulf %556, %562 : vector<8x32xf32>
    %c24_192 = arith.constant 24 : index
    %c0_193 = arith.constant 0 : index
    %564 = vector.load %arg9[%c24_192, %c0_193] : memref<64x32xf32, #tpu.memory_space<vmem>>, vector<8x32xf32>
    tpu.vector_store %arg9[%c24_192, %c0_193], %563 {strides = array<i32>} : memref<64x32xf32, #tpu.memory_space<vmem>>, vector<8x32xf32>,
    %c32_194 = arith.constant 32 : index
    %c0_195 = arith.constant 0 : index
    %565 = vector.load %arg5[%c32_194, %c0_195] : memref<64x128xf32, #tpu.memory_space<vmem>>, vector<8x128xf32>
    %cst_196 = arith.constant dense<0.000000e+00> : vector<8x128xf32>
    %566 = tpu.matmul %563, %483, %cst_196 {dimension_numbers = #tpu.dot_dimension_numbers<[1], [0], [0], [1], [0, 0, 1, 1], [], []>} : vector<8x32xf32>, vector<32x128xf32>, vector<8x128xf32> -> vector<8x128xf32>
    %567 = arith.addf %565, %566 : vector<8x128xf32>
    %568 = arith.negf %567 : vector<8x128xf32>
    %569 = math.exp %568 : vector<8x128xf32>
    %cst_197 = arith.constant 1.000000e+00 : f32
    %570 = vector.broadcast %cst_197 : f32 to vector<8x128xf32>
    %571 = arith.addf %570, %569 : vector<8x128xf32>
    %572 = arith.divf %570, %571 : vector<8x128xf32>
    %573 = vector.extract_strided_slice %572 {offsets = [0, 0], sizes = [8, 32], strides = [1, 1]} : vector<8x128xf32> to vector<8x32xf32>
    %574 = vector.extract_strided_slice %572 {offsets = [0, 32], sizes = [8, 32], strides = [1, 1]} : vector<8x128xf32> to vector<8x32xf32>
    %575 = vector.extract_strided_slice %572 {offsets = [0, 96], sizes = [8, 32], strides = [1, 1]} : vector<8x128xf32> to vector<8x32xf32>
    %576 = vector.extract_strided_slice %567 {offsets = [0, 64], sizes = [8, 32], strides = [1, 1]} : vector<8x128xf32> to vector<8x32xf32>
    %577 = math.tanh %576 : vector<8x32xf32>
    %578 = arith.mulf %574, %561 : vector<8x32xf32>
    %579 = arith.mulf %573, %577 : vector<8x32xf32>
    %580 = arith.addf %578, %579 : vector<8x32xf32>
    %581 = math.tanh %580 : vector<8x32xf32>
    %582 = arith.mulf %575, %581 : vector<8x32xf32>
    %c32_198 = arith.constant 32 : index
    %c0_199 = arith.constant 0 : index
    %583 = vector.load %arg9[%c32_198, %c0_199] : memref<64x32xf32, #tpu.memory_space<vmem>>, vector<8x32xf32>
    tpu.vector_store %arg9[%c32_198, %c0_199], %582 {strides = array<i32>} : memref<64x32xf32, #tpu.memory_space<vmem>>, vector<8x32xf32>,
    %c40_200 = arith.constant 40 : index
    %c0_201 = arith.constant 0 : index
    %584 = vector.load %arg5[%c40_200, %c0_201] : memref<64x128xf32, #tpu.memory_space<vmem>>, vector<8x128xf32>
    %cst_202 = arith.constant dense<0.000000e+00> : vector<8x128xf32>
    %585 = tpu.matmul %582, %483, %cst_202 {dimension_numbers = #tpu.dot_dimension_numbers<[1], [0], [0], [1], [0, 0, 1, 1], [], []>} : vector<8x32xf32>, vector<32x128xf32>, vector<8x128xf32> -> vector<8x128xf32>
    %586 = arith.addf %584, %585 : vector<8x128xf32>
    %587 = arith.negf %586 : vector<8x128xf32>
    %588 = math.exp %587 : vector<8x128xf32>
    %cst_203 = arith.constant 1.000000e+00 : f32
    %589 = vector.broadcast %cst_203 : f32 to vector<8x128xf32>
    %590 = arith.addf %589, %588 : vector<8x128xf32>
    %591 = arith.divf %589, %590 : vector<8x128xf32>
    %592 = vector.extract_strided_slice %591 {offsets = [0, 0], sizes = [8, 32], strides = [1, 1]} : vector<8x128xf32> to vector<8x32xf32>
    %593 = vector.extract_strided_slice %591 {offsets = [0, 32], sizes = [8, 32], strides = [1, 1]} : vector<8x128xf32> to vector<8x32xf32>
    %594 = vector.extract_strided_slice %591 {offsets = [0, 96], sizes = [8, 32], strides = [1, 1]} : vector<8x128xf32> to vector<8x32xf32>
    %595 = vector.extract_strided_slice %586 {offsets = [0, 64], sizes = [8, 32], strides = [1, 1]} : vector<8x128xf32> to vector<8x32xf32>
    %596 = math.tanh %595 : vector<8x32xf32>
    %597 = arith.mulf %593, %580 : vector<8x32xf32>
    %598 = arith.mulf %592, %596 : vector<8x32xf32>
    %599 = arith.addf %597, %598 : vector<8x32xf32>
    %600 = math.tanh %599 : vector<8x32xf32>
    %601 = arith.mulf %594, %600 : vector<8x32xf32>
    %c40_204 = arith.constant 40 : index
    %c0_205 = arith.constant 0 : index
    %602 = vector.load %arg9[%c40_204, %c0_205] : memref<64x32xf32, #tpu.memory_space<vmem>>, vector<8x32xf32>
    tpu.vector_store %arg9[%c40_204, %c0_205], %601 {strides = array<i32>} : memref<64x32xf32, #tpu.memory_space<vmem>>, vector<8x32xf32>,
    %c48_206 = arith.constant 48 : index
    %c0_207 = arith.constant 0 : index
    %603 = vector.load %arg5[%c48_206, %c0_207] : memref<64x128xf32, #tpu.memory_space<vmem>>, vector<8x128xf32>
    %cst_208 = arith.constant dense<0.000000e+00> : vector<8x128xf32>
    %604 = tpu.matmul %601, %483, %cst_208 {dimension_numbers = #tpu.dot_dimension_numbers<[1], [0], [0], [1], [0, 0, 1, 1], [], []>} : vector<8x32xf32>, vector<32x128xf32>, vector<8x128xf32> -> vector<8x128xf32>
    %605 = arith.addf %603, %604 : vector<8x128xf32>
    %606 = arith.negf %605 : vector<8x128xf32>
    %607 = math.exp %606 : vector<8x128xf32>
    %cst_209 = arith.constant 1.000000e+00 : f32
    %608 = vector.broadcast %cst_209 : f32 to vector<8x128xf32>
    %609 = arith.addf %608, %607 : vector<8x128xf32>
    %610 = arith.divf %608, %609 : vector<8x128xf32>
    %611 = vector.extract_strided_slice %610 {offsets = [0, 0], sizes = [8, 32], strides = [1, 1]} : vector<8x128xf32> to vector<8x32xf32>
    %612 = vector.extract_strided_slice %610 {offsets = [0, 32], sizes = [8, 32], strides = [1, 1]} : vector<8x128xf32> to vector<8x32xf32>
    %613 = vector.extract_strided_slice %610 {offsets = [0, 96], sizes = [8, 32], strides = [1, 1]} : vector<8x128xf32> to vector<8x32xf32>
    %614 = vector.extract_strided_slice %605 {offsets = [0, 64], sizes = [8, 32], strides = [1, 1]} : vector<8x128xf32> to vector<8x32xf32>
    %615 = math.tanh %614 : vector<8x32xf32>
    %616 = arith.mulf %612, %599 : vector<8x32xf32>
    %617 = arith.mulf %611, %615 : vector<8x32xf32>
    %618 = arith.addf %616, %617 : vector<8x32xf32>
    %619 = math.tanh %618 : vector<8x32xf32>
    %620 = arith.mulf %613, %619 : vector<8x32xf32>
    %c48_210 = arith.constant 48 : index
    %c0_211 = arith.constant 0 : index
    %621 = vector.load %arg9[%c48_210, %c0_211] : memref<64x32xf32, #tpu.memory_space<vmem>>, vector<8x32xf32>
    tpu.vector_store %arg9[%c48_210, %c0_211], %620 {strides = array<i32>} : memref<64x32xf32, #tpu.memory_space<vmem>>, vector<8x32xf32>,
    %c56_212 = arith.constant 56 : index
    %c0_213 = arith.constant 0 : index
    %622 = vector.load %arg5[%c56_212, %c0_213] : memref<64x128xf32, #tpu.memory_space<vmem>>, vector<8x128xf32>
    %cst_214 = arith.constant dense<0.000000e+00> : vector<8x128xf32>
    %623 = tpu.matmul %620, %483, %cst_214 {dimension_numbers = #tpu.dot_dimension_numbers<[1], [0], [0], [1], [0, 0, 1, 1], [], []>} : vector<8x32xf32>, vector<32x128xf32>, vector<8x128xf32> -> vector<8x128xf32>
    %624 = arith.addf %622, %623 : vector<8x128xf32>
    %625 = arith.negf %624 : vector<8x128xf32>
    %626 = math.exp %625 : vector<8x128xf32>
    %cst_215 = arith.constant 1.000000e+00 : f32
    %627 = vector.broadcast %cst_215 : f32 to vector<8x128xf32>
    %628 = arith.addf %627, %626 : vector<8x128xf32>
    %629 = arith.divf %627, %628 : vector<8x128xf32>
    %630 = vector.extract_strided_slice %629 {offsets = [0, 0], sizes = [8, 32], strides = [1, 1]} : vector<8x128xf32> to vector<8x32xf32>
    %631 = vector.extract_strided_slice %629 {offsets = [0, 32], sizes = [8, 32], strides = [1, 1]} : vector<8x128xf32> to vector<8x32xf32>
    %632 = vector.extract_strided_slice %629 {offsets = [0, 96], sizes = [8, 32], strides = [1, 1]} : vector<8x128xf32> to vector<8x32xf32>
    %633 = vector.extract_strided_slice %624 {offsets = [0, 64], sizes = [8, 32], strides = [1, 1]} : vector<8x128xf32> to vector<8x32xf32>
    %634 = math.tanh %633 : vector<8x32xf32>
    %635 = arith.mulf %631, %618 : vector<8x32xf32>
    %636 = arith.mulf %630, %634 : vector<8x32xf32>
    %637 = arith.addf %635, %636 : vector<8x32xf32>
    %638 = math.tanh %637 : vector<8x32xf32>
    %639 = arith.mulf %632, %638 : vector<8x32xf32>
    %c56_216 = arith.constant 56 : index
    %c0_217 = arith.constant 0 : index
    %640 = vector.load %arg9[%c56_216, %c0_217] : memref<64x32xf32, #tpu.memory_space<vmem>>, vector<8x32xf32>
    tpu.vector_store %arg9[%c56_216, %c0_217], %639 {strides = array<i32>} : memref<64x32xf32, #tpu.memory_space<vmem>>, vector<8x32xf32>,
    %c0_218 = arith.constant 0 : index
    %c0_219 = arith.constant 0 : index
    %641 = vector.load %arg7[%c0_218, %c0_219] : memref<64x32xf32, #tpu.memory_space<vmem>>, vector<64x32xf32>
    %c0_220 = arith.constant 0 : index
    %c0_221 = arith.constant 0 : index
    %642 = vector.load %arg9[%c0_220, %c0_221] : memref<64x32xf32, #tpu.memory_space<vmem>>, vector<64x32xf32>
    %cst_222 = arith.constant dense<0.000000e+00> : vector<64x64xf32>
    %643 = tpu.matmul %642, %641, %cst_222 {dimension_numbers = #tpu.dot_dimension_numbers<[1], [1], [0], [0], [0, 0, 1, 0], [], []>} : vector<64x32xf32>, vector<64x32xf32>, vector<64x64xf32> -> vector<64x64xf32>
    %644 = tpu.iota {dimensions = array<i32: 0>} : vector<64x64xi32>
    %c8_i32 = arith.constant 8 : i32
    %c0_i32 = arith.constant 0 : i32
    %645 = arith.cmpi eq, %c8_i32, %c0_i32 : i32
    %c1_i32 = arith.constant 1 : i32
    %646 = arith.select %645, %c1_i32, %c8_i32 : i32
    %647 = vector.broadcast %646 : i32 to vector<64x64xi32>
    %648 = arith.remsi %644, %647 : vector<64x64xi32>
    %c0_i32_223 = arith.constant 0 : i32
    %649 = vector.broadcast %c0_i32_223 : i32 to vector<64x64xi32>
    %650 = arith.cmpi ne, %648, %649 : vector<64x64xi32>
    %c0_i32_224 = arith.constant 0 : i32
    %651 = vector.broadcast %c0_i32_224 : i32 to vector<64x64xi32>
    %652 = arith.cmpi slt, %648, %651 : vector<64x64xi32>
    %c0_i32_225 = arith.constant 0 : i32
    %653 = arith.cmpi slt, %646, %c0_i32_225 : i32
    %654 = vector.broadcast %653 : i1 to vector<64x64xi1>
    %655 = vector.broadcast %654 : vector<64x64xi1> to vector<64x64xi1>
    %656 = arith.xori %652, %655 : vector<64x64xi1>
    %657 = arith.andi %656, %650 : vector<64x64xi1>
    %658 = vector.broadcast %646 : i32 to vector<64x64xi32>
    %659 = arith.addi %648, %658 : vector<64x64xi32>
    %660 = arith.select %657, %659, %648 : vector<64x64xi1>, vector<64x64xi32>
    %661 = tpu.iota {dimensions = array<i32: 1>} : vector<64x64xi32>
    %c8_i32_226 = arith.constant 8 : i32
    %c0_i32_227 = arith.constant 0 : i32
    %662 = arith.cmpi eq, %c8_i32_226, %c0_i32_227 : i32
    %c1_i32_228 = arith.constant 1 : i32
    %663 = arith.select %662, %c1_i32_228, %c8_i32_226 : i32
    %664 = vector.broadcast %663 : i32 to vector<64x64xi32>
    %665 = arith.remsi %661, %664 : vector<64x64xi32>
    %c0_i32_229 = arith.constant 0 : i32
    %666 = vector.broadcast %c0_i32_229 : i32 to vector<64x64xi32>
    %667 = arith.cmpi ne, %665, %666 : vector<64x64xi32>
    %c0_i32_230 = arith.constant 0 : i32
    %668 = vector.broadcast %c0_i32_230 : i32 to vector<64x64xi32>
    %669 = arith.cmpi slt, %665, %668 : vector<64x64xi32>
    %c0_i32_231 = arith.constant 0 : i32
    %670 = arith.cmpi slt, %663, %c0_i32_231 : i32
    %671 = vector.broadcast %670 : i1 to vector<64x64xi1>
    %672 = vector.broadcast %671 : vector<64x64xi1> to vector<64x64xi1>
    %673 = arith.xori %669, %672 : vector<64x64xi1>
    %674 = arith.andi %673, %667 : vector<64x64xi1>
    %675 = vector.broadcast %663 : i32 to vector<64x64xi32>
    %676 = arith.addi %665, %675 : vector<64x64xi32>
    %677 = arith.select %674, %676, %665 : vector<64x64xi1>, vector<64x64xi32>
    %678 = arith.cmpi eq, %660, %677 : vector<64x64xi32>
    %cst_232 = arith.constant -1.000000e+30 : f32
    %679 = vector.broadcast %cst_232 : f32 to vector<64x64xf32>
    %680 = arith.select %678, %643, %679 : vector<64x64xi1>, vector<64x64xf32>
    %cst_233 = arith.constant dense<0xFF800000> : vector<64xf32>
    %681 = vector.multi_reduction <maximumf>, %680, %cst_233 [1] : vector<64x64xf32> to vector<64xf32>
    %682 = vector.shape_cast %681 : vector<64xf32> to vector<64x1xf32>
    %683 = vector.broadcast %682 : vector<64x1xf32> to vector<64x64xf32>
    %684 = arith.subf %680, %683 : vector<64x64xf32>
    %685 = math.exp %684 : vector<64x64xf32>
    %cst_234 = arith.constant dense<0.000000e+00> : vector<64xf32>
    %686 = vector.multi_reduction <add>, %685, %cst_234 [1] : vector<64x64xf32> to vector<64xf32>
    %687 = vector.shape_cast %686 : vector<64xf32> to vector<64x1xf32>
    %688 = tpu.reciprocal %687 : vector<64x1xf32> -> vector<64x1xf32>
    %689 = vector.broadcast %688 : vector<64x1xf32> to vector<64x64xf32>
    %690 = arith.mulf %685, %689 : vector<64x64xf32>
    %cst_235 = arith.constant dense<0.000000e+00> : vector<64x32xf32>
    %691 = tpu.matmul %690, %641, %cst_235 {dimension_numbers = #tpu.dot_dimension_numbers<[1], [0], [0], [1], [0, 0, 1, 1], [], []>} : vector<64x64xf32>, vector<64x32xf32>, vector<64x32xf32> -> vector<64x32xf32>
    %692 = tpu.concatenate %642, %691 in 1 : vector<64x32xf32>, vector<64x32xf32> -> vector<64x64xf32>
    %c0_236 = arith.constant 0 : index
    %c0_237 = arith.constant 0 : index
    %693 = vector.load %arg2[%c0_236, %c0_237] : memref<72x128xf32, #tpu.memory_space<vmem>>, vector<64x128xf32>
    %c64_238 = arith.constant 64 : index
    %c0_239 = arith.constant 0 : index
    %694 = vector.load %arg2[%c64_238, %c0_239] : memref<72x128xf32, #tpu.memory_space<vmem>>, vector<1x128xf32>
    %cst_240 = arith.constant dense<0.000000e+00> : vector<64x128xf32>
    %695 = tpu.matmul %692, %693, %cst_240 {dimension_numbers = #tpu.dot_dimension_numbers<[1], [0], [0], [1], [0, 0, 1, 1], [], []>} : vector<64x64xf32>, vector<64x128xf32>, vector<64x128xf32> -> vector<64x128xf32>
    %696 = vector.broadcast %694 : vector<1x128xf32> to vector<64x128xf32>
    %697 = arith.addf %695, %696 : vector<64x128xf32>
    %c0_241 = arith.constant 0 : index
    %c0_242 = arith.constant 0 : index
    %698 = vector.load %arg3[%c0_241, %c0_242] : memref<64x128xf32, #tpu.memory_space<vmem>>, vector<64x128xf32>
    tpu.vector_store %arg3[%c0_241, %c0_242], %697 {strides = array<i32>} : memref<64x128xf32, #tpu.memory_space<vmem>>, vector<64x128xf32>,
    return
  }
}

</mosaic_0001>

<llo_original>
// kernel: model_forward.1
$region0: #{model_forward.1}
  #allocation0 [shape = 'u32[]', space=smem, size = 0x4, offset = 0x4, fixed_abs, tag = 'smem constant byte address 0x4 - core index']
  #allocation1 [shape = 'u32[144,128]{1,0:T(1,128)}', space=vmem, size = 0x12000, scoped, tag = 'internal scratch']
  #allocation2 [shape = 'f32[64,128]{1,0:T(8,128)}', space=vmem, size = 0x8000, scoped, tag = 'scratch operand']
  #allocation3 [shape = 'f32[64,128]{1,0:T(8,128)}', space=vmem, size = 0x8000, scoped, tag = 'scratch operand']
  #allocation4 [shape = 'f32[64,32]{1,0:T(8,128)}', space=vmem, size = 0x8000, scoped, tag = 'scratch operand']
  #allocation5 [shape = 'f32[64,32]{1,0:T(8,128)}', space=vmem, size = 0x8000, scoped, tag = 'scratch operand']
  #allocation6 [shape = 'f32[64,32]{1,0:T(8,128)}', space=vmem, size = 0x8000, scoped, tag = 'scratch operand']
  #allocation7 [shape = 'f32[64,32]{1,0:T(8,128)}', space=vmem, size = 0x8000, scoped, tag = 'scratch operand']
  %s0 = inlined_call_operand.vmem [shape: f32[128,32], index: 0, kind: input, shape index: {}]
  %s1 = inlined_call_operand.vmem [shape: f32[288,128], index: 1, kind: input, shape index: {}]
  %s2 = inlined_call_operand.vmem [shape: f32[72,128], index: 2, kind: input, shape index: {}]
  %s3 = inlined_call_operand.vmem [shape: f32[64,128], index: 3, kind: output, shape index: {}]
  %s4 = sld [smem:[#allocation0]]
  $region22: #{model_forward.1} parent=0
    _
  %s6 = ssub.s32 1, %s4
  %s7 = scalar_select 0, %s6, %s4
  // Predicated region
  $region2: #{model_forward.1} parent=0 // pred_check
    _
  $region3: #{model_forward.1} parent=0 // pred_check_branch
    %9 = sbr.rel (0) target = $region5
  $region4: #{model_forward.1} parent=0 // pred_region
    _
  $region5: #{model_forward.1} parent=0 // pred_fallthru
    _
  // Predicated region
  $region6: #{model_forward.1} parent=0 // pred_check
    _
  $region7: #{model_forward.1} parent=0 // pred_check_branch
    %11 = sbr.rel (0) target = $region9
  $region8: #{model_forward.1} parent=0 // pred_region
    _
  $region9: #{model_forward.1} parent=0 // pred_fallthru
    _
  // Predicated region
  $region10: #{model_forward.1} parent=0 // pred_check
    _
  $region11: #{model_forward.1} parent=0 // pred_check_branch
    %13 = sbr.rel (0) target = $region13
  $region12: #{model_forward.1} parent=0 // pred_region
    _
  $region13: #{model_forward.1} parent=0 // pred_fallthru
    _
  %v14 = vld [vmem:[%s0] sm:$0xff]
  %v15 = vld [vmem:[%s0 + $0x8] sm:$0xff]
  %v16 = vld [vmem:[%s0 + $0x10] sm:$0xff]
  %v17 = vld [vmem:[%s0 + $0x18] sm:$0xff]
  %v18 = vld [vmem:[%s0 + $0x20] sm:$0xff]
  %v19 = vld [vmem:[%s0 + $0x28] sm:$0xff]
  %v20 = vld [vmem:[%s0 + $0x30] sm:$0xff]
  %v21 = vld [vmem:[%s0 + $0x38] sm:$0xff]
  %v22 = vld [vmem:[%s1] sm:$0xff]
  %v23 = vld [vmem:[%s1 + $0x8] sm:$0xff]
  %v24 = vld [vmem:[%s1 + $0x10] sm:$0xff]
  %v25 = vld [vmem:[%s1 + $0x18] sm:$0xff]
  %v26 = vld [vmem:[%s1 + $0x20] sm:$0xff]
  %v27 = vld [vmem:[%s1 + $0x28] sm:$0xff]
  %v28 = vld [vmem:[%s1 + $0x30] sm:$0xff]
  %v29 = vld [vmem:[%s1 + $0x38] sm:$0xff]
  %v30 = vld [vmem:[%s1 + $0x40] sm:$0x1]
  %v31 = vlaneseq
  %v32 = vshrl.u32 %v31, 7
  %v33 = vsub.s32 0, %v32
  %v34 = vrot.slane %v30, %v33
  %vm35 = vcmask 261120
  %v37 = vsel %vm35, %v14, 0
  %v40 = vsel %vm35, %v15, 0
  %v43 = vsel %vm35, %v16, 0
  %v46 = vsel %vm35, %v17, 0
  %v49 = vsel %vm35, %v18, 0
  %v52 = vsel %vm35, %v19, 0
  %v55 = vsel %vm35, %v20, 0
  %v58 = vsel %vm35, %v21, 0
  %60 = vmatprep.subr.mxu0 0.0
  %61 = vmatpush1.msra.mxu0 %v22
  %62 = vmatprep.subr.mxu0 0.0
  %63 = vmatpush1.msra.mxu0 %v23
  %64 = vmatprep.subr.mxu0 0.0
  %65 = vmatpush1.msra.mxu0 %v24
  %66 = vmatprep.subr.mxu0 0.0
  %67 = vmatpush1.msra.mxu0 %v25
  %68 = vmatprep.subr.mxu0 0.0
  %69 = vmatpush1.msra.mxu0 0.0
  %70 = vmatprep.subr.mxu0 0.0
  %71 = vmatpush1.msra.mxu0 0.0
  %72 = vmatprep.subr.mxu0 0.0
  %73 = vmatpush1.msra.mxu0 0.0
  %74 = vmatprep.subr.mxu0 0.0
  %75 = vmatpush1.msra.mxu0 0.0
  %76 = vmatprep.subr.mxu0 0.0
  %77 = vmatpush1.msra.mxu0 0.0
  %78 = vmatprep.subr.mxu0 0.0
  %79 = vmatpush1.msra.mxu0 0.0
  %80 = vmatprep.subr.mxu0 0.0
  %81 = vmatpush1.msra.mxu0 0.0
  %82 = vmatprep.subr.mxu0 0.0
  %83 = vmatpush1.msra.mxu0 0.0
  %84 = vmatprep.subr.mxu0 0.0
  %85 = vmatpush1.msra.mxu0 0.0
  %86 = vmatprep.subr.mxu0 0.0
  %87 = vmatpush1.msra.mxu0 0.0
  %88 = vmatprep.subr.mxu0 0.0
  %89 = vmatpush1.msra.mxu0 0.0
  %90 = vmatprep.subr.mxu0 0.0
  %91 = vmatpush1.msra.mxu0 0.0
  %92 = vmatprep.subr.mxu0 0.0
  %93 = vmatpush1.msra.mxu0 0.0
  %94 = vmatprep.subr.mxu0 0.0
  %95 = vmatpush1.msra.mxu0 0.0
  %96 = vmatprep.subr.mxu0 0.0
  %97 = vmatpush1.msra.mxu0 0.0
  %98 = vmatprep.subr.mxu0 0.0
  %99 = vmatpush1.msra.mxu0 0.0
  %100 = vmatprep.subr.mxu0 0.0
  %101 = vmatpush1.msra.mxu0 0.0
  %102 = vmatprep.subr.mxu0 0.0
  %103 = vmatpush1.msra.mxu0 0.0
  %104 = vmatprep.subr.mxu0 0.0
  %105 = vmatpush1.msra.mxu0 0.0
  %106 = vmatprep.subr.mxu0 0.0
  %107 = vmatpush1.msra.mxu0 0.0
  %108 = vmatprep.subr.mxu0 0.0
  %109 = vmatpush1.msra.mxu0 0.0
  %110 = vmatprep.subr.mxu0 0.0
  %111 = vmatpush1.msra.mxu0 0.0
  %112 = vmatprep.subr.mxu0 0.0
  %113 = vmatpush1.msra.mxu0 0.0
  %114 = vmatprep.subr.mxu0 0.0
  %115 = vmatpush1.msra.mxu0 0.0
  %116 = vmatprep.subr.mxu0 0.0
  %117 = vmatpush1.msra.mxu0 0.0
  %118 = vmatprep.subr.mxu0 0.0
  %119 = vmatpush1.msra.mxu0 0.0
  %120 = vmatprep.subr.mxu0 0.0
  %121 = vmatpush1.msra.mxu0 0.0
  %122 = vmatprep.subr.mxu0 0.0
  %123 = vmatpush1.msra.mxu0 0.0
  %124 = vmatprep.mubr.f32.mxu0 0.0
  %125 = vmatmul.mubr.f32.gmra.mrb[0].mxu0 %v37
  %v126 = vpop.f32.mrb[0].mxu0
  %v127 = vadd.f32 %v34, %v126
  %v128 = vpop.f32.mrb[0].mxu0
  %129 = vmatprep.mubr.f32.mxu0 0.0
  %130 = vmatmul.mubr.f32.gmra.mrb[0].mxu0 %v40
  %v131 = vpop.f32.mrb[0].mxu0
  %v132 = vadd.f32 %v34, %v131
  %v133 = vpop.f32.mrb[0].mxu0
  %134 = vmatprep.mubr.f32.mxu0 0.0
  %135 = vmatmul.mubr.f32.gmra.mrb[0].mxu0 %v43
  %v136 = vpop.f32.mrb[0].mxu0
  %v137 = vadd.f32 %v34, %v136
  %v138 = vpop.f32.mrb[0].mxu0
  %139 = vmatprep.mubr.f32.mxu0 0.0
  %140 = vmatmul.mubr.f32.gmra.mrb[0].mxu0 %v46
  %v141 = vpop.f32.mrb[0].mxu0
  %v142 = vadd.f32 %v34, %v141
  %v143 = vpop.f32.mrb[0].mxu0
  %144 = vmatprep.mubr.f32.mxu0 0.0
  %145 = vmatmul.mubr.f32.gmra.mrb[0].mxu0 %v49
  %v146 = vpop.f32.mrb[0].mxu0
  %v147 = vadd.f32 %v34, %v146
  %v148 = vpop.f32.mrb[0].mxu0
  %149 = vmatprep.mubr.f32.mxu0 0.0
  %150 = vmatmul.mubr.f32.gmra.mrb[0].mxu0 %v52
  %v151 = vpop.f32.mrb[0].mxu0
  %v152 = vadd.f32 %v34, %v151
  %v153 = vpop.f32.mrb[0].mxu0
  %154 = vmatprep.mubr.f32.mxu0 0.0
  %155 = vmatmul.mubr.f32.gmra.mrb[0].mxu0 %v55
  %v156 = vpop.f32.mrb[0].mxu0
  %v157 = vadd.f32 %v34, %v156
  %v158 = vpop.f32.mrb[0].mxu0
  %159 = vmatprep.mubr.f32.mxu0 0.0
  %160 = vmatmul.mubr.f32.gmra.mrb[0].mxu0 %v58
  %v161 = vpop.f32.mrb[0].mxu0
  %v162 = vadd.f32 %v34, %v161
  %v163 = vpop.f32.mrb[0].mxu0
  %164 = vdwg.mxu0
  %165 = vst [vmem:[#allocation2] sm:$0xff] %v127
  %166 = vst [vmem:[#allocation2 + $0x8] sm:$0xff] %v132
  %167 = vst [vmem:[#allocation2 + $0x10] sm:$0xff] %v137
  %168 = vst [vmem:[#allocation2 + $0x18] sm:$0xff] %v142
  %169 = vst [vmem:[#allocation2 + $0x20] sm:$0xff] %v147
  %170 = vst [vmem:[#allocation2 + $0x28] sm:$0xff] %v152
  %171 = vst [vmem:[#allocation2 + $0x30] sm:$0xff] %v157
  %172 = vst [vmem:[#allocation2 + $0x38] sm:$0xff] %v162
  %v173 = vld [vmem:[#allocation2] sm:$0xff]
  %v175 = vsel %vm35, 0.0, 0
  %177 = vmatprep.subr.mxu0 0.0
  %178 = vmatpush1.msra.mxu0 %v26
  %179 = vmatprep.subr.mxu0 0.0
  %180 = vmatpush1.msra.mxu0 %v27
  %181 = vmatprep.subr.mxu0 0.0
  %182 = vmatpush1.msra.mxu0 %v28
  %183 = vmatprep.subr.mxu0 0.0
  %184 = vmatpush1.msra.mxu0 %v29
  %185 = vmatprep.subr.mxu0 0.0
  %186 = vmatpush1.msra.mxu0 0.0
  %187 = vmatprep.subr.mxu0 0.0
  %188 = vmatpush1.msra.mxu0 0.0
  %189 = vmatprep.subr.mxu0 0.0
  %190 = vmatpush1.msra.mxu0 0.0
  %191 = vmatprep.subr.mxu0 0.0
  %192 = vmatpush1.msra.mxu0 0.0
  %193 = vmatprep.subr.mxu0 0.0
  %194 = vmatpush1.msra.mxu0 0.0
  %195 = vmatprep.subr.mxu0 0.0
  %196 = vmatpush1.msra.mxu0 0.0
  %197 = vmatprep.subr.mxu0 0.0
  %198 = vmatpush1.msra.mxu0 0.0
  %199 = vmatprep.subr.mxu0 0.0
  %200 = vmatpush1.msra.mxu0 0.0
  %201 = vmatprep.subr.mxu0 0.0
  %202 = vmatpush1.msra.mxu0 0.0
  %203 = vmatprep.subr.mxu0 0.0
  %204 = vmatpush1.msra.mxu0 0.0
  %205 = vmatprep.subr.mxu0 0.0
  %206 = vmatpush1.msra.mxu0 0.0
  %207 = vmatprep.subr.mxu0 0.0
  %208 = vmatpush1.msra.mxu0 0.0
  %209 = vmatprep.subr.mxu0 0.0
  %210 = vmatpush1.msra.mxu0 0.0
  %211 = vmatprep.subr.mxu0 0.0
  %212 = vmatpush1.msra.mxu0 0.0
  %213 = vmatprep.subr.mxu0 0.0
  %214 = vmatpush1.msra.mxu0 0.0
  %215 = vmatprep.subr.mxu0 0.0
  %216 = vmatpush1.msra.mxu0 0.0
  %217 = vmatprep.subr.mxu0 0.0
  %218 = vmatpush1.msra.mxu0 0.0
  %219 = vmatprep.subr.mxu0 0.0
  %220 = vmatpush1.msra.mxu0 0.0
  %221 = vmatprep.subr.mxu0 0.0
  %222 = vmatpush1.msra.mxu0 0.0
  %223 = vmatprep.subr.mxu0 0.0
  %224 = vmatpush1.msra.mxu0 0.0
  %225 = vmatprep.subr.mxu0 0.0
  %226 = vmatpush1.msra.mxu0 0.0
  %227 = vmatprep.subr.mxu0 0.0
  %228 = vmatpush1.msra.mxu0 0.0
  %229 = vmatprep.subr.mxu0 0.0
  %230 = vmatpush1.msra.mxu0 0.0
  %231 = vmatprep.subr.mxu0 0.0
  %232 = vmatpush1.msra.mxu0 0.0
  %233 = vmatprep.subr.mxu0 0.0
  %234 = vmatpush1.msra.mxu0 0.0
  %235 = vmatprep.subr.mxu0 0.0
  %236 = vmatpush1.msra.mxu0 0.0
  %237 = vmatprep.subr.mxu0 0.0
  %238 = vmatpush1.msra.mxu0 0.0
  %239 = vmatprep.subr.mxu0 0.0
  %240 = vmatpush1.msra.mxu0 0.0
  %241 = vmatprep.mubr.f32.mxu0 0.0
  %242 = vmatmul.mubr.f32.gmra.mrb[0].mxu0 %v175
  %v243 = vpop.f32.mrb[0].mxu0
  %v244 = vadd.f32 0.0, %v243
  %v245 = vpop.f32.mrb[0].mxu0
  %246 = vdwg.mxu0
  %v247 = vadd.f32 %v173, %v244
  %v248 = vxor.u32 %v247, 2147483648
  %v249 = vmul.f32 %v248, 1.442695
  %v250 = vpow.pop %v249
  %v251 = vadd.f32 %v250, 1.0
  %v252 = vrcp.pop %v251
  %v253 = vmul.f32 1.0, %v252
  %v254 = vtanh.pop %v247
  %v255 = vmul.f32 %v253, 0.0
  %257 = vrot.lane.b32.xlu0 %v254, 64
  %v258 = vpop.permute.xlu0 %257
  %v260 = vmul.f32 %v253, %v258
  %262 = vrot.lane.b32.xlu0 %v260, 32
  %v263 = vpop.permute.xlu0 %262
  %v265 = vadd.f32 %v255, %v263
  %v266 = vtanh.pop %v265
  %268 = vrot.lane.b32.xlu0 %v266, 64
  %v269 = vpop.permute.xlu0 %268
  %v271 = vmul.f32 %v253, %v269
  %273 = vrot.lane.b32.xlu0 %v271, 32
  %v274 = vpop.permute.xlu0 %273
  %276 = vst.msk [vmem:[#allocation4] sm:$0xff] %vm35, %v274
  %v277 = vld [vmem:[#allocation2 + $0x8] sm:$0xff]
  %v278 = vsel %vm35, %v274, 0
  %280 = vmatprep.subr.mxu0 0.0
  %281 = vmatpush1.msra.mxu0 %v26
  %282 = vmatprep.subr.mxu0 0.0
  %283 = vmatpush1.msra.mxu0 %v27
  %284 = vmatprep.subr.mxu0 0.0
  %285 = vmatpush1.msra.mxu0 %v28
  %286 = vmatprep.subr.mxu0 0.0
  %287 = vmatpush1.msra.mxu0 %v29
  %288 = vmatprep.subr.mxu0 0.0
  %289 = vmatpush1.msra.mxu0 0.0
  %290 = vmatprep.subr.mxu0 0.0
  %291 = vmatpush1.msra.mxu0 0.0
  %292 = vmatprep.subr.mxu0 0.0
  %293 = vmatpush1.msra.mxu0 0.0
  %294 = vmatprep.subr.mxu0 0.0
  %295 = vmatpush1.msra.mxu0 0.0
  %296 = vmatprep.subr.mxu0 0.0
  %297 = vmatpush1.msra.mxu0 0.0
  %298 = vmatprep.subr.mxu0 0.0
  %299 = vmatpush1.msra.mxu0 0.0
  %300 = vmatprep.subr.mxu0 0.0
  %301 = vmatpush1.msra.mxu0 0.0
  %302 = vmatprep.subr.mxu0 0.0
  %303 = vmatpush1.msra.mxu0 0.0
  %304 = vmatprep.subr.mxu0 0.0
  %305 = vmatpush1.msra.mxu0 0.0
  %306 = vmatprep.subr.mxu0 0.0
  %307 = vmatpush1.msra.mxu0 0.0
  %308 = vmatprep.subr.mxu0 0.0
  %309 = vmatpush1.msra.mxu0 0.0
  %310 = vmatprep.subr.mxu0 0.0
  %311 = vmatpush1.msra.mxu0 0.0
  %312 = vmatprep.subr.mxu0 0.0
  %313 = vmatpush1.msra.mxu0 0.0
  %314 = vmatprep.subr.mxu0 0.0
  %315 = vmatpush1.msra.mxu0 0.0
  %316 = vmatprep.subr.mxu0 0.0
  %317 = vmatpush1.msra.mxu0 0.0
  %318 = vmatprep.subr.mxu0 0.0
  %319 = vmatpush1.msra.mxu0 0.0
  %320 = vmatprep.subr.mxu0 0.0
  %321 = vmatpush1.msra.mxu0 0.0
  %322 = vmatprep.subr.mxu0 0.0
  %323 = vmatpush1.msra.mxu0 0.0
  %324 = vmatprep.subr.mxu0 0.0
  %325 = vmatpush1.msra.mxu0 0.0
  %326 = vmatprep.subr.mxu0 0.0
  %327 = vmatpush1.msra.mxu0 0.0
  %328 = vmatprep.subr.mxu0 0.0
  %329 = vmatpush1.msra.mxu0 0.0
  %330 = vmatprep.subr.mxu0 0.0
  %331 = vmatpush1.msra.mxu0 0.0
  %332 = vmatprep.subr.mxu0 0.0
  %333 = vmatpush1.msra.mxu0 0.0
  %334 = vmatprep.subr.mxu0 0.0
  %335 = vmatpush1.msra.mxu0 0.0
  %336 = vmatprep.subr.mxu0 0.0
  %337 = vmatpush1.msra.mxu0 0.0
  %338 = vmatprep.subr.mxu0 0.0
  %339 = vmatpush1.msra.mxu0 0.0
  %340 = vmatprep.subr.mxu0 0.0
  %341 = vmatpush1.msra.mxu0 0.0
  %342 = vmatprep.subr.mxu0 0.0
  %343 = vmatpush1.msra.mxu0 0.0
  %344 = vmatprep.mubr.f32.mxu0 0.0
  %345 = vmatmul.mubr.f32.gmra.mrb[0].mxu0 %v278
  %v346 = vpop.f32.mrb[0].mxu0
  %v347 = vadd.f32 0.0, %v346
  %v348 = vpop.f32.mrb[0].mxu0
  %349 = vdwg.mxu0
  %v350 = vadd.f32 %v277, %v347
  %v351 = vxor.u32 %v350, 2147483648
  %v352 = vmul.f32 %v351, 1.442695
  %v353 = vpow.pop %v352
  %v354 = vadd.f32 %v353, 1.0
  %v355 = vrcp.pop %v354
  %v356 = vmul.f32 1.0, %v355
  %v357 = vtanh.pop %v350
  %v358 = vmul.f32 %v356, %v265
  %360 = vrot.lane.b32.xlu0 %v357, 64
  %v361 = vpop.permute.xlu0 %360
  %v363 = vmul.f32 %v356, %v361
  %365 = vrot.lane.b32.xlu0 %v363, 32
  %v366 = vpop.permute.xlu0 %365
  %v368 = vadd.f32 %v358, %v366
  %v369 = vtanh.pop %v368
  %371 = vrot.lane.b32.xlu0 %v369, 64
  %v372 = vpop.permute.xlu0 %371
  %v374 = vmul.f32 %v356, %v372
  %376 = vrot.lane.b32.xlu0 %v374, 32
  %v377 = vpop.permute.xlu0 %376
  %379 = vst.msk [vmem:[#allocation4 + $0x8] sm:$0xff] %vm35, %v377
  %v380 = vld [vmem:[#allocation2 + $0x10] sm:$0xff]
  %v381 = vsel %vm35, %v377, 0
  %383 = vmatprep.subr.mxu0 0.0
  %384 = vmatpush1.msra.mxu0 %v26
  %385 = vmatprep.subr.mxu0 0.0
  %386 = vmatpush1.msra.mxu0 %v27
  %387 = vmatprep.subr.mxu0 0.0
  %388 = vmatpush1.msra.mxu0 %v28
  %389 = vmatprep.subr.mxu0 0.0
  %390 = vmatpush1.msra.mxu0 %v29
  %391 = vmatprep.subr.mxu0 0.0
  %392 = vmatpush1.msra.mxu0 0.0
  %393 = vmatprep.subr.mxu0 0.0
  %394 = vmatpush1.msra.mxu0 0.0
  %395 = vmatprep.subr.mxu0 0.0
  %396 = vmatpush1.msra.mxu0 0.0
  %397 = vmatprep.subr.mxu0 0.0
  %398 = vmatpush1.msra.mxu0 0.0
  %399 = vmatprep.subr.mxu0 0.0
  %400 = vmatpush1.msra.mxu0 0.0
  %401 = vmatprep.subr.mxu0 0.0
  %402 = vmatpush1.msra.mxu0 0.0
  %403 = vmatprep.subr.mxu0 0.0
  %404 = vmatpush1.msra.mxu0 0.0
  %405 = vmatprep.subr.mxu0 0.0
  %406 = vmatpush1.msra.mxu0 0.0
  %407 = vmatprep.subr.mxu0 0.0
  %408 = vmatpush1.msra.mxu0 0.0
  %409 = vmatprep.subr.mxu0 0.0
  %410 = vmatpush1.msra.mxu0 0.0
  %411 = vmatprep.subr.mxu0 0.0
  %412 = vmatpush1.msra.mxu0 0.0
  %413 = vmatprep.subr.mxu0 0.0
  %414 = vmatpush1.msra.mxu0 0.0
  %415 = vmatprep.subr.mxu0 0.0
  %416 = vmatpush1.msra.mxu0 0.0
  %417 = vmatprep.subr.mxu0 0.0
  %418 = vmatpush1.msra.mxu0 0.0
  %419 = vmatprep.subr.mxu0 0.0
  %420 = vmatpush1.msra.mxu0 0.0
  %421 = vmatprep.subr.mxu0 0.0
  %422 = vmatpush1.msra.mxu0 0.0
  %423 = vmatprep.subr.mxu0 0.0
  %424 = vmatpush1.msra.mxu0 0.0
  %425 = vmatprep.subr.mxu0 0.0
  %426 = vmatpush1.msra.mxu0 0.0
  %427 = vmatprep.subr.mxu0 0.0
  %428 = vmatpush1.msra.mxu0 0.0
  %429 = vmatprep.subr.mxu0 0.0
  %430 = vmatpush1.msra.mxu0 0.0
  %431 = vmatprep.subr.mxu0 0.0
  %432 = vmatpush1.msra.mxu0 0.0
  %433 = vmatprep.subr.mxu0 0.0
  %434 = vmatpush1.msra.mxu0 0.0
  %435 = vmatprep.subr.mxu0 0.0
  %436 = vmatpush1.msra.mxu0 0.0
  %437 = vmatprep.subr.mxu0 0.0
  %438 = vmatpush1.msra.mxu0 0.0
  %439 = vmatprep.subr.mxu0 0.0
  %440 = vmatpush1.msra.mxu0 0.0
  %441 = vmatprep.subr.mxu0 0.0
  %442 = vmatpush1.msra.mxu0 0.0
  %443 = vmatprep.subr.mxu0 0.0
  %444 = vmatpush1.msra.mxu0 0.0
  %445 = vmatprep.subr.mxu0 0.0
  %446 = vmatpush1.msra.mxu0 0.0
  %447 = vmatprep.mubr.f32.mxu0 0.0
  %448 = vmatmul.mubr.f32.gmra.mrb[0].mxu0 %v381
  %v449 = vpop.f32.mrb[0].mxu0
  %v450 = vadd.f32 0.0, %v449
  %v451 = vpop.f32.mrb[0].mxu0
  %452 = vdwg.mxu0
  %v453 = vadd.f32 %v380, %v450
  %v454 = vxor.u32 %v453, 2147483648
  %v455 = vmul.f32 %v454, 1.442695
  %v456 = vpow.pop %v455
  %v457 = vadd.f32 %v456, 1.0
  %v458 = vrcp.pop %v457
  %v459 = vmul.f32 1.0, %v458
  %v460 = vtanh.pop %v453
  %v461 = vmul.f32 %v459, %v368
  %463 = vrot.lane.b32.xlu0 %v460, 64
  %v464 = vpop.permute.xlu0 %463
  %v466 = vmul.f32 %v459, %v464
  %468 = vrot.lane.b32.xlu0 %v466, 32
  %v469 = vpop.permute.xlu0 %468
  %v471 = vadd.f32 %v461, %v469
  %v472 = vtanh.pop %v471
  %474 = vrot.lane.b32.xlu0 %v472, 64
  %v475 = vpop.permute.xlu0 %474
  %v477 = vmul.f32 %v459, %v475
  %479 = vrot.lane.b32.xlu0 %v477, 32
  %v480 = vpop.permute.xlu0 %479
  %482 = vst.msk [vmem:[#allocation4 + $0x10] sm:$0xff] %vm35, %v480
  %v483 = vld [vmem:[#allocation2 + $0x18] sm:$0xff]
  %v484 = vsel %vm35, %v480, 0
  %486 = vmatprep.subr.mxu0 0.0
  %487 = vmatpush1.msra.mxu0 %v26
  %488 = vmatprep.subr.mxu0 0.0
  %489 = vmatpush1.msra.mxu0 %v27
  %490 = vmatprep.subr.mxu0 0.0
  %491 = vmatpush1.msra.mxu0 %v28
  %492 = vmatprep.subr.mxu0 0.0
  %493 = vmatpush1.msra.mxu0 %v29
  %494 = vmatprep.subr.mxu0 0.0
  %495 = vmatpush1.msra.mxu0 0.0
  %496 = vmatprep.subr.mxu0 0.0
  %497 = vmatpush1.msra.mxu0 0.0
  %498 = vmatprep.subr.mxu0 0.0
  %499 = vmatpush1.msra.mxu0 0.0
  %500 = vmatprep.subr.mxu0 0.0
  %501 = vmatpush1.msra.mxu0 0.0
  %502 = vmatprep.subr.mxu0 0.0
  %503 = vmatpush1.msra.mxu0 0.0
  %504 = vmatprep.subr.mxu0 0.0
  %505 = vmatpush1.msra.mxu0 0.0
  %506 = vmatprep.subr.mxu0 0.0
  %507 = vmatpush1.msra.mxu0 0.0
  %508 = vmatprep.subr.mxu0 0.0
  %509 = vmatpush1.msra.mxu0 0.0
  %510 = vmatprep.subr.mxu0 0.0
  %511 = vmatpush1.msra.mxu0 0.0
  %512 = vmatprep.subr.mxu0 0.0
  %513 = vmatpush1.msra.mxu0 0.0
  %514 = vmatprep.subr.mxu0 0.0
  %515 = vmatpush1.msra.mxu0 0.0
  %516 = vmatprep.subr.mxu0 0.0
  %517 = vmatpush1.msra.mxu0 0.0
  %518 = vmatprep.subr.mxu0 0.0
  %519 = vmatpush1.msra.mxu0 0.0
  %520 = vmatprep.subr.mxu0 0.0
  %521 = vmatpush1.msra.mxu0 0.0
  %522 = vmatprep.subr.mxu0 0.0
  %523 = vmatpush1.msra.mxu0 0.0
  %524 = vmatprep.subr.mxu0 0.0
  %525 = vmatpush1.msra.mxu0 0.0
  %526 = vmatprep.subr.mxu0 0.0
  %527 = vmatpush1.msra.mxu0 0.0
  %528 = vmatprep.subr.mxu0 0.0
  %529 = vmatpush1.msra.mxu0 0.0
  %530 = vmatprep.subr.mxu0 0.0
  %531 = vmatpush1.msra.mxu0 0.0
  %532 = vmatprep.subr.mxu0 0.0
  %533 = vmatpush1.msra.mxu0 0.0
  %534 = vmatprep.subr.mxu0 0.0
  %535 = vmatpush1.msra.mxu0 0.0
  %536 = vmatprep.subr.mxu0 0.0
  %537 = vmatpush1.msra.mxu0 0.0
  %538 = vmatprep.subr.mxu0 0.0
  %539 = vmatpush1.msra.mxu0 0.0
  %540 = vmatprep.subr.mxu0 0.0
  %541 = vmatpush1.msra.mxu0 0.0
  %542 = vmatprep.subr.mxu0 0.0
  %543 = vmatpush1.msra.mxu0 0.0
  %544 = vmatprep.subr.mxu0 0.0
  %545 = vmatpush1.msra.mxu0 0.0
  %546 = vmatprep.subr.mxu0 0.0
  %547 = vmatpush1.msra.mxu0 0.0
  %548 = vmatprep.subr.mxu0 0.0
  %549 = vmatpush1.msra.mxu0 0.0
  %550 = vmatprep.mubr.f32.mxu0 0.0
  %551 = vmatmul.mubr.f32.gmra.mrb[0].mxu0 %v484
  %v552 = vpop.f32.mrb[0].mxu0
  %v553 = vadd.f32 0.0, %v552
  %v554 = vpop.f32.mrb[0].mxu0
  %555 = vdwg.mxu0
  %v556 = vadd.f32 %v483, %v553
  %v557 = vxor.u32 %v556, 2147483648
  %v558 = vmul.f32 %v557, 1.442695
  %v559 = vpow.pop %v558
  %v560 = vadd.f32 %v559, 1.0
  %v561 = vrcp.pop %v560
  %v562 = vmul.f32 1.0, %v561
  %v563 = vtanh.pop %v556
  %v564 = vmul.f32 %v562, %v471
  %566 = vrot.lane.b32.xlu0 %v563, 64
  %v567 = vpop.permute.xlu0 %566
  %v569 = vmul.f32 %v562, %v567
  %571 = vrot.lane.b32.xlu0 %v569, 32
  %v572 = vpop.permute.xlu0 %571
  %v574 = vadd.f32 %v564, %v572
  %v575 = vtanh.pop %v574
  %577 = vrot.lane.b32.xlu0 %v575, 64
  %v578 = vpop.permute.xlu0 %577
  %v580 = vmul.f32 %v562, %v578
  %582 = vrot.lane.b32.xlu0 %v580, 32
  %v583 = vpop.permute.xlu0 %582
  %585 = vst.msk [vmem:[#allocation4 + $0x18] sm:$0xff] %vm35, %v583
  %v586 = vld [vmem:[#allocation2 + $0x20] sm:$0xff]
  %v587 = vsel %vm35, %v583, 0
  %589 = vmatprep.subr.mxu0 0.0
  %590 = vmatpush1.msra.mxu0 %v26
  %591 = vmatprep.subr.mxu0 0.0
  %592 = vmatpush1.msra.mxu0 %v27
  %593 = vmatprep.subr.mxu0 0.0
  %594 = vmatpush1.msra.mxu0 %v28
  %595 = vmatprep.subr.mxu0 0.0
  %596 = vmatpush1.msra.mxu0 %v29
  %597 = vmatprep.subr.mxu0 0.0
  %598 = vmatpush1.msra.mxu0 0.0
  %599 = vmatprep.subr.mxu0 0.0
  %600 = vmatpush1.msra.mxu0 0.0
  %601 = vmatprep.subr.mxu0 0.0
  %602 = vmatpush1.msra.mxu0 0.0
  %603 = vmatprep.subr.mxu0 0.0
  %604 = vmatpush1.msra.mxu0 0.0
  %605 = vmatprep.subr.mxu0 0.0
  %606 = vmatpush1.msra.mxu0 0.0
  %607 = vmatprep.subr.mxu0 0.0
  %608 = vmatpush1.msra.mxu0 0.0
  %609 = vmatprep.subr.mxu0 0.0
  %610 = vmatpush1.msra.mxu0 0.0
  %611 = vmatprep.subr.mxu0 0.0
  %612 = vmatpush1.msra.mxu0 0.0
  %613 = vmatprep.subr.mxu0 0.0
  %614 = vmatpush1.msra.mxu0 0.0
  %615 = vmatprep.subr.mxu0 0.0
  %616 = vmatpush1.msra.mxu0 0.0
  %617 = vmatprep.subr.mxu0 0.0
  %618 = vmatpush1.msra.mxu0 0.0
  %619 = vmatprep.subr.mxu0 0.0
  %620 = vmatpush1.msra.mxu0 0.0
  %621 = vmatprep.subr.mxu0 0.0
  %622 = vmatpush1.msra.mxu0 0.0
  %623 = vmatprep.subr.mxu0 0.0
  %624 = vmatpush1.msra.mxu0 0.0
  %625 = vmatprep.subr.mxu0 0.0
  %626 = vmatpush1.msra.mxu0 0.0
  %627 = vmatprep.subr.mxu0 0.0
  %628 = vmatpush1.msra.mxu0 0.0
  %629 = vmatprep.subr.mxu0 0.0
  %630 = vmatpush1.msra.mxu0 0.0
  %631 = vmatprep.subr.mxu0 0.0
  %632 = vmatpush1.msra.mxu0 0.0
  %633 = vmatprep.subr.mxu0 0.0
  %634 = vmatpush1.msra.mxu0 0.0
  %635 = vmatprep.subr.mxu0 0.0
  %636 = vmatpush1.msra.mxu0 0.0
  %637 = vmatprep.subr.mxu0 0.0
  %638 = vmatpush1.msra.mxu0 0.0
  %639 = vmatprep.subr.mxu0 0.0
  %640 = vmatpush1.msra.mxu0 0.0
  %641 = vmatprep.subr.mxu0 0.0
  %642 = vmatpush1.msra.mxu0 0.0
  %643 = vmatprep.subr.mxu0 0.0
  %644 = vmatpush1.msra.mxu0 0.0
  %645 = vmatprep.subr.mxu0 0.0
  %646 = vmatpush1.msra.mxu0 0.0
  %647 = vmatprep.subr.mxu0 0.0
  %648 = vmatpush1.msra.mxu0 0.0
  %649 = vmatprep.subr.mxu0 0.0
  %650 = vmatpush1.msra.mxu0 0.0
  %651 = vmatprep.subr.mxu0 0.0
  %652 = vmatpush1.msra.mxu0 0.0
  %653 = vmatprep.mubr.f32.mxu0 0.0
  %654 = vmatmul.mubr.f32.gmra.mrb[0].mxu0 %v587
  %v655 = vpop.f32.mrb[0].mxu0
  %v656 = vadd.f32 0.0, %v655
  %v657 = vpop.f32.mrb[0].mxu0
  %658 = vdwg.mxu0
  %v659 = vadd.f32 %v586, %v656
  %v660 = vxor.u32 %v659, 2147483648
  %v661 = vmul.f32 %v660, 1.442695
  %v662 = vpow.pop %v661
  %v663 = vadd.f32 %v662, 1.0
  %v664 = vrcp.pop %v663
  %v665 = vmul.f32 1.0, %v664
  %v666 = vtanh.pop %v659
  %v667 = vmul.f32 %v665, %v574
  %669 = vrot.lane.b32.xlu0 %v666, 64
  %v670 = vpop.permute.xlu0 %669
  %v672 = vmul.f32 %v665, %v670
  %674 = vrot.lane.b32.xlu0 %v672, 32
  %v675 = vpop.permute.xlu0 %674
  %v677 = vadd.f32 %v667, %v675
  %v678 = vtanh.pop %v677
  %680 = vrot.lane.b32.xlu0 %v678, 64
  %v681 = vpop.permute.xlu0 %680
  %v683 = vmul.f32 %v665, %v681
  %685 = vrot.lane.b32.xlu0 %v683, 32
  %v686 = vpop.permute.xlu0 %685
  %688 = vst.msk [vmem:[#allocation4 + $0x20] sm:$0xff] %vm35, %v686
  %v689 = vld [vmem:[#allocation2 + $0x28] sm:$0xff]
  %v690 = vsel %vm35, %v686, 0
  %692 = vmatprep.subr.mxu0 0.0
  %693 = vmatpush1.msra.mxu0 %v26
  %694 = vmatprep.subr.mxu0 0.0
  %695 = vmatpush1.msra.mxu0 %v27
  %696 = vmatprep.subr.mxu0 0.0
  %697 = vmatpush1.msra.mxu0 %v28
  %698 = vmatprep.subr.mxu0 0.0
  %699 = vmatpush1.msra.mxu0 %v29
  %700 = vmatprep.subr.mxu0 0.0
  %701 = vmatpush1.msra.mxu0 0.0
  %702 = vmatprep.subr.mxu0 0.0
  %703 = vmatpush1.msra.mxu0 0.0
  %704 = vmatprep.subr.mxu0 0.0
  %705 = vmatpush1.msra.mxu0 0.0
  %706 = vmatprep.subr.mxu0 0.0
  %707 = vmatpush1.msra.mxu0 0.0
  %708 = vmatprep.subr.mxu0 0.0
  %709 = vmatpush1.msra.mxu0 0.0
  %710 = vmatprep.subr.mxu0 0.0
  %711 = vmatpush1.msra.mxu0 0.0
  %712 = vmatprep.subr.mxu0 0.0
  %713 = vmatpush1.msra.mxu0 0.0
  %714 = vmatprep.subr.mxu0 0.0
  %715 = vmatpush1.msra.mxu0 0.0
  %716 = vmatprep.subr.mxu0 0.0
  %717 = vmatpush1.msra.mxu0 0.0
  %718 = vmatprep.subr.mxu0 0.0
  %719 = vmatpush1.msra.mxu0 0.0
  %720 = vmatprep.subr.mxu0 0.0
  %721 = vmatpush1.msra.mxu0 0.0
  %722 = vmatprep.subr.mxu0 0.0
  %723 = vmatpush1.msra.mxu0 0.0
  %724 = vmatprep.subr.mxu0 0.0
  %725 = vmatpush1.msra.mxu0 0.0
  %726 = vmatprep.subr.mxu0 0.0
  %727 = vmatpush1.msra.mxu0 0.0
  %728 = vmatprep.subr.mxu0 0.0
  %729 = vmatpush1.msra.mxu0 0.0
  %730 = vmatprep.subr.mxu0 0.0
  %731 = vmatpush1.msra.mxu0 0.0
  %732 = vmatprep.subr.mxu0 0.0
  %733 = vmatpush1.msra.mxu0 0.0
  %734 = vmatprep.subr.mxu0 0.0
  %735 = vmatpush1.msra.mxu0 0.0
  %736 = vmatprep.subr.mxu0 0.0
  %737 = vmatpush1.msra.mxu0 0.0
  %738 = vmatprep.subr.mxu0 0.0
  %739 = vmatpush1.msra.mxu0 0.0
  %740 = vmatprep.subr.mxu0 0.0
  %741 = vmatpush1.msra.mxu0 0.0
  %742 = vmatprep.subr.mxu0 0.0
  %743 = vmatpush1.msra.mxu0 0.0
  %744 = vmatprep.subr.mxu0 0.0
  %745 = vmatpush1.msra.mxu0 0.0
  %746 = vmatprep.subr.mxu0 0.0
  %747 = vmatpush1.msra.mxu0 0.0
  %748 = vmatprep.subr.mxu0 0.0
  %749 = vmatpush1.msra.mxu0 0.0
  %750 = vmatprep.subr.mxu0 0.0
  %751 = vmatpush1.msra.mxu0 0.0
  %752 = vmatprep.subr.mxu0 0.0
  %753 = vmatpush1.msra.mxu0 0.0
  %754 = vmatprep.subr.mxu0 0.0
  %755 = vmatpush1.msra.mxu0 0.0
  %756 = vmatprep.mubr.f32.mxu0 0.0
  %757 = vmatmul.mubr.f32.gmra.mrb[0].mxu0 %v690
  %v758 = vpop.f32.mrb[0].mxu0
  %v759 = vadd.f32 0.0, %v758
  %v760 = vpop.f32.mrb[0].mxu0
  %761 = vdwg.mxu0
  %v762 = vadd.f32 %v689, %v759
  %v763 = vxor.u32 %v762, 2147483648
  %v764 = vmul.f32 %v763, 1.442695
  %v765 = vpow.pop %v764
  %v766 = vadd.f32 %v765, 1.0
  %v767 = vrcp.pop %v766
  %v768 = vmul.f32 1.0, %v767
  %v769 = vtanh.pop %v762
  %v770 = vmul.f32 %v768, %v677
  %772 = vrot.lane.b32.xlu0 %v769, 64
  %v773 = vpop.permute.xlu0 %772
  %v775 = vmul.f32 %v768, %v773
  %777 = vrot.lane.b32.xlu0 %v775, 32
  %v778 = vpop.permute.xlu0 %777
  %v780 = vadd.f32 %v770, %v778
  %v781 = vtanh.pop %v780
  %783 = vrot.lane.b32.xlu0 %v781, 64
  %v784 = vpop.permute.xlu0 %783
  %v786 = vmul.f32 %v768, %v784
  %788 = vrot.lane.b32.xlu0 %v786, 32
  %v789 = vpop.permute.xlu0 %788
  %791 = vst.msk [vmem:[#allocation4 + $0x28] sm:$0xff] %vm35, %v789
  %v792 = vld [vmem:[#allocation2 + $0x30] sm:$0xff]
  %v793 = vsel %vm35, %v789, 0
  %795 = vmatprep.subr.mxu0 0.0
  %796 = vmatpush1.msra.mxu0 %v26
  %797 = vmatprep.subr.mxu0 0.0
  %798 = vmatpush1.msra.mxu0 %v27
  %799 = vmatprep.subr.mxu0 0.0
  %800 = vmatpush1.msra.mxu0 %v28
  %801 = vmatprep.subr.mxu0 0.0
  %802 = vmatpush1.msra.mxu0 %v29
  %803 = vmatprep.subr.mxu0 0.0
  %804 = vmatpush1.msra.mxu0 0.0
  %805 = vmatprep.subr.mxu0 0.0
  %806 = vmatpush1.msra.mxu0 0.0
  %807 = vmatprep.subr.mxu0 0.0
  %808 = vmatpush1.msra.mxu0 0.0
  %809 = vmatprep.subr.mxu0 0.0
  %810 = vmatpush1.msra.mxu0 0.0
  %811 = vmatprep.subr.mxu0 0.0
  %812 = vmatpush1.msra.mxu0 0.0
  %813 = vmatprep.subr.mxu0 0.0
  %814 = vmatpush1.msra.mxu0 0.0
  %815 = vmatprep.subr.mxu0 0.0
  %816 = vmatpush1.msra.mxu0 0.0
  %817 = vmatprep.subr.mxu0 0.0
  %818 = vmatpush1.msra.mxu0 0.0
  %819 = vmatprep.subr.mxu0 0.0
  %820 = vmatpush1.msra.mxu0 0.0
  %821 = vmatprep.subr.mxu0 0.0
  %822 = vmatpush1.msra.mxu0 0.0
  %823 = vmatprep.subr.mxu0 0.0
  %824 = vmatpush1.msra.mxu0 0.0
  %825 = vmatprep.subr.mxu0 0.0
  %826 = vmatpush1.msra.mxu0 0.0
  %827 = vmatprep.subr.mxu0 0.0
  %828 = vmatpush1.msra.mxu0 0.0
  %829 = vmatprep.subr.mxu0 0.0
  %830 = vmatpush1.msra.mxu0 0.0
  %831 = vmatprep.subr.mxu0 0.0
  %832 = vmatpush1.msra.mxu0 0.0
  %833 = vmatprep.subr.mxu0 0.0
  %834 = vmatpush1.msra.mxu0 0.0
  %835 = vmatprep.subr.mxu0 0.0
  %836 = vmatpush1.msra.mxu0 0.0
  %837 = vmatprep.subr.mxu0 0.0
  %838 = vmatpush1.msra.mxu0 0.0
  %839 = vmatprep.subr.mxu0 0.0
  %840 = vmatpush1.msra.mxu0 0.0
  %841 = vmatprep.subr.mxu0 0.0
  %842 = vmatpush1.msra.mxu0 0.0
  %843 = vmatprep.subr.mxu0 0.0
  %844 = vmatpush1.msra.mxu0 0.0
  %845 = vmatprep.subr.mxu0 0.0
  %846 = vmatpush1.msra.mxu0 0.0
  %847 = vmatprep.subr.mxu0 0.0
  %848 = vmatpush1.msra.mxu0 0.0
  %849 = vmatprep.subr.mxu0 0.0
  %850 = vmatpush1.msra.mxu0 0.0
  %851 = vmatprep.subr.mxu0 0.0
  %852 = vmatpush1.msra.mxu0 0.0
  %853 = vmatprep.subr.mxu0 0.0
  %854 = vmatpush1.msra.mxu0 0.0
  %855 = vmatprep.subr.mxu0 0.0
  %856 = vmatpush1.msra.mxu0 0.0
  %857 = vmatprep.subr.mxu0 0.0
  %858 = vmatpush1.msra.mxu0 0.0
  %859 = vmatprep.mubr.f32.mxu0 0.0
  %860 = vmatmul.mubr.f32.gmra.mrb[0].mxu0 %v793
  %v861 = vpop.f32.mrb[0].mxu0
  %v862 = vadd.f32 0.0, %v861
  %v863 = vpop.f32.mrb[0].mxu0
  %864 = vdwg.mxu0
  %v865 = vadd.f32 %v792, %v862
  %v866 = vxor.u32 %v865, 2147483648
  %v867 = vmul.f32 %v866, 1.442695
  %v868 = vpow.pop %v867
  %v869 = vadd.f32 %v868, 1.0
  %v870 = vrcp.pop %v869
  %v871 = vmul.f32 1.0, %v870
  %v872 = vtanh.pop %v865
  %v873 = vmul.f32 %v871, %v780
  %875 = vrot.lane.b32.xlu0 %v872, 64
  %v876 = vpop.permute.xlu0 %875
  %v878 = vmul.f32 %v871, %v876
  %880 = vrot.lane.b32.xlu0 %v878, 32
  %v881 = vpop.permute.xlu0 %880
  %v883 = vadd.f32 %v873, %v881
  %v884 = vtanh.pop %v883
  %886 = vrot.lane.b32.xlu0 %v884, 64
  %v887 = vpop.permute.xlu0 %886
  %v889 = vmul.f32 %v871, %v887
  %891 = vrot.lane.b32.xlu0 %v889, 32
  %v892 = vpop.permute.xlu0 %891
  %894 = vst.msk [vmem:[#allocation4 + $0x30] sm:$0xff] %vm35, %v892
  %v895 = vld [vmem:[#allocation2 + $0x38] sm:$0xff]
  %v896 = vsel %vm35, %v892, 0
  %898 = vmatprep.subr.mxu0 0.0
  %899 = vmatpush1.msra.mxu0 %v26
  %900 = vmatprep.subr.mxu0 0.0
  %901 = vmatpush1.msra.mxu0 %v27
  %902 = vmatprep.subr.mxu0 0.0
  %903 = vmatpush1.msra.mxu0 %v28
  %904 = vmatprep.subr.mxu0 0.0
  %905 = vmatpush1.msra.mxu0 %v29
  %906 = vmatprep.subr.mxu0 0.0
  %907 = vmatpush1.msra.mxu0 0.0
  %908 = vmatprep.subr.mxu0 0.0
  %909 = vmatpush1.msra.mxu0 0.0
  %910 = vmatprep.subr.mxu0 0.0
  %911 = vmatpush1.msra.mxu0 0.0
  %912 = vmatprep.subr.mxu0 0.0
  %913 = vmatpush1.msra.mxu0 0.0
  %914 = vmatprep.subr.mxu0 0.0
  %915 = vmatpush1.msra.mxu0 0.0
  %916 = vmatprep.subr.mxu0 0.0
  %917 = vmatpush1.msra.mxu0 0.0
  %918 = vmatprep.subr.mxu0 0.0
  %919 = vmatpush1.msra.mxu0 0.0
  %920 = vmatprep.subr.mxu0 0.0
  %921 = vmatpush1.msra.mxu0 0.0
  %922 = vmatprep.subr.mxu0 0.0
  %923 = vmatpush1.msra.mxu0 0.0
  %924 = vmatprep.subr.mxu0 0.0
  %925 = vmatpush1.msra.mxu0 0.0
  %926 = vmatprep.subr.mxu0 0.0
  %927 = vmatpush1.msra.mxu0 0.0
  %928 = vmatprep.subr.mxu0 0.0
  %929 = vmatpush1.msra.mxu0 0.0
  %930 = vmatprep.subr.mxu0 0.0
  %931 = vmatpush1.msra.mxu0 0.0
  %932 = vmatprep.subr.mxu0 0.0
  %933 = vmatpush1.msra.mxu0 0.0
  %934 = vmatprep.subr.mxu0 0.0
  %935 = vmatpush1.msra.mxu0 0.0
  %936 = vmatprep.subr.mxu0 0.0
  %937 = vmatpush1.msra.mxu0 0.0
  %938 = vmatprep.subr.mxu0 0.0
  %939 = vmatpush1.msra.mxu0 0.0
  %940 = vmatprep.subr.mxu0 0.0
  %941 = vmatpush1.msra.mxu0 0.0
  %942 = vmatprep.subr.mxu0 0.0
  %943 = vmatpush1.msra.mxu0 0.0
  %944 = vmatprep.subr.mxu0 0.0
  %945 = vmatpush1.msra.mxu0 0.0
  %946 = vmatprep.subr.mxu0 0.0
  %947 = vmatpush1.msra.mxu0 0.0
  %948 = vmatprep.subr.mxu0 0.0
  %949 = vmatpush1.msra.mxu0 0.0
  %950 = vmatprep.subr.mxu0 0.0
  %951 = vmatpush1.msra.mxu0 0.0
  %952 = vmatprep.subr.mxu0 0.0
  %953 = vmatpush1.msra.mxu0 0.0
  %954 = vmatprep.subr.mxu0 0.0
  %955 = vmatpush1.msra.mxu0 0.0
  %956 = vmatprep.subr.mxu0 0.0
  %957 = vmatpush1.msra.mxu0 0.0
  %958 = vmatprep.subr.mxu0 0.0
  %959 = vmatpush1.msra.mxu0 0.0
  %960 = vmatprep.subr.mxu0 0.0
  %961 = vmatpush1.msra.mxu0 0.0
  %962 = vmatprep.mubr.f32.mxu0 0.0
  %963 = vmatmul.mubr.f32.gmra.mrb[0].mxu0 %v896
  %v964 = vpop.f32.mrb[0].mxu0
  %v965 = vadd.f32 0.0, %v964
  %v966 = vpop.f32.mrb[0].mxu0
  %967 = vdwg.mxu0
  %v968 = vadd.f32 %v895, %v965
  %v969 = vxor.u32 %v968, 2147483648
  %v970 = vmul.f32 %v969, 1.442695
  %v971 = vpow.pop %v970
  %v972 = vadd.f32 %v971, 1.0
  %v973 = vrcp.pop %v972
  %v974 = vmul.f32 1.0, %v973
  %v975 = vtanh.pop %v968
  %v976 = vmul.f32 %v974, %v883
  %978 = vrot.lane.b32.xlu0 %v975, 64
  %v979 = vpop.permute.xlu0 %978
  %v981 = vmul.f32 %v974, %v979
  %983 = vrot.lane.b32.xlu0 %v981, 32
  %v984 = vpop.permute.xlu0 %983
  %v986 = vadd.f32 %v976, %v984
  %v987 = vtanh.pop %v986
  %989 = vrot.lane.b32.xlu0 %v987, 64
  %v990 = vpop.permute.xlu0 %989
  %v992 = vmul.f32 %v974, %v990
  %994 = vrot.lane.b32.xlu0 %v992, 32
  %v995 = vpop.permute.xlu0 %994
  %997 = vst.msk [vmem:[#allocation4 + $0x38] sm:$0xff] %vm35, %v995
  %v998 = vld [vmem:[#allocation4] sm:$0xff]
  %v999 = vld [vmem:[#allocation4 + $0x8] sm:$0xff]
  %v1000 = vld [vmem:[#allocation4 + $0x10] sm:$0xff]
  %v1001 = vld [vmem:[#allocation4 + $0x18] sm:$0xff]
  %v1002 = vld [vmem:[#allocation4 + $0x20] sm:$0xff]
  %v1003 = vld [vmem:[#allocation4 + $0x28] sm:$0xff]
  %v1004 = vld [vmem:[#allocation4 + $0x30] sm:$0xff]
  %v1005 = vld [vmem:[#allocation4 + $0x38] sm:$0xff]
  %v1006 = vld [vmem:[%s1 + $0x90] sm:$0xff]
  %v1007 = vld [vmem:[%s1 + $0x98] sm:$0xff]
  %v1008 = vld [vmem:[%s1 + $0xa0] sm:$0xff]
  %v1009 = vld [vmem:[%s1 + $0xa8] sm:$0xff]
  %v1010 = vld [vmem:[%s1 + $0xb0] sm:$0xff]
  %v1011 = vld [vmem:[%s1 + $0xb8] sm:$0xff]
  %v1012 = vld [vmem:[%s1 + $0xc0] sm:$0xff]
  %v1013 = vld [vmem:[%s1 + $0xc8] sm:$0xff]
  %v1014 = vld [vmem:[%s1 + $0xd0] sm:$0x1]
  %v1015 = vlaneseq
  %v1016 = vshrl.u32 %v1015, 7
  %v1017 = vsub.s32 0, %v1016
  %v1018 = vrot.slane %v1014, %v1017
  %v1020 = vsel %vm35, %v998, 0
  %v1023 = vsel %vm35, %v999, 0
  %v1026 = vsel %vm35, %v1000, 0
  %v1029 = vsel %vm35, %v1001, 0
  %v1032 = vsel %vm35, %v1002, 0
  %v1035 = vsel %vm35, %v1003, 0
  %v1038 = vsel %vm35, %v1004, 0
  %v1041 = vsel %vm35, %v1005, 0
  %1043 = vmatprep.subr.mxu0 0.0
  %1044 = vmatpush1.msra.mxu0 %v1006
  %1045 = vmatprep.subr.mxu0 0.0
  %1046 = vmatpush1.msra.mxu0 %v1007
  %1047 = vmatprep.subr.mxu0 0.0
  %1048 = vmatpush1.msra.mxu0 %v1008
  %1049 = vmatprep.subr.mxu0 0.0
  %1050 = vmatpush1.msra.mxu0 %v1009
  %1051 = vmatprep.subr.mxu0 0.0
  %1052 = vmatpush1.msra.mxu0 0.0
  %1053 = vmatprep.subr.mxu0 0.0
  %1054 = vmatpush1.msra.mxu0 0.0
  %1055 = vmatprep.subr.mxu0 0.0
  %1056 = vmatpush1.msra.mxu0 0.0
  %1057 = vmatprep.subr.mxu0 0.0
  %1058 = vmatpush1.msra.mxu0 0.0
  %1059 = vmatprep.subr.mxu0 0.0
  %1060 = vmatpush1.msra.mxu0 0.0
  %1061 = vmatprep.subr.mxu0 0.0
  %1062 = vmatpush1.msra.mxu0 0.0
  %1063 = vmatprep.subr.mxu0 0.0
  %1064 = vmatpush1.msra.mxu0 0.0
  %1065 = vmatprep.subr.mxu0 0.0
  %1066 = vmatpush1.msra.mxu0 0.0
  %1067 = vmatprep.subr.mxu0 0.0
  %1068 = vmatpush1.msra.mxu0 0.0
  %1069 = vmatprep.subr.mxu0 0.0
  %1070 = vmatpush1.msra.mxu0 0.0
  %1071 = vmatprep.subr.mxu0 0.0
  %1072 = vmatpush1.msra.mxu0 0.0
  %1073 = vmatprep.subr.mxu0 0.0
  %1074 = vmatpush1.msra.mxu0 0.0
  %1075 = vmatprep.subr.mxu0 0.0
  %1076 = vmatpush1.msra.mxu0 0.0
  %1077 = vmatprep.subr.mxu0 0.0
  %1078 = vmatpush1.msra.mxu0 0.0
  %1079 = vmatprep.subr.mxu0 0.0
  %1080 = vmatpush1.msra.mxu0 0.0
  %1081 = vmatprep.subr.mxu0 0.0
  %1082 = vmatpush1.msra.mxu0 0.0
  %1083 = vmatprep.subr.mxu0 0.0
  %1084 = vmatpush1.msra.mxu0 0.0
  %1085 = vmatprep.subr.mxu0 0.0
  %1086 = vmatpush1.msra.mxu0 0.0
  %1087 = vmatprep.subr.mxu0 0.0
  %1088 = vmatpush1.msra.mxu0 0.0
  %1089 = vmatprep.subr.mxu0 0.0
  %1090 = vmatpush1.msra.mxu0 0.0
  %1091 = vmatprep.subr.mxu0 0.0
  %1092 = vmatpush1.msra.mxu0 0.0
  %1093 = vmatprep.subr.mxu0 0.0
  %1094 = vmatpush1.msra.mxu0 0.0
  %1095 = vmatprep.subr.mxu0 0.0
  %1096 = vmatpush1.msra.mxu0 0.0
  %1097 = vmatprep.subr.mxu0 0.0
  %1098 = vmatpush1.msra.mxu0 0.0
  %1099 = vmatprep.subr.mxu0 0.0
  %1100 = vmatpush1.msra.mxu0 0.0
  %1101 = vmatprep.subr.mxu0 0.0
  %1102 = vmatpush1.msra.mxu0 0.0
  %1103 = vmatprep.subr.mxu0 0.0
  %1104 = vmatpush1.msra.mxu0 0.0
  %1105 = vmatprep.subr.mxu0 0.0
  %1106 = vmatpush1.msra.mxu0 0.0
  %1107 = vmatprep.mubr.f32.mxu0 0.0
  %1108 = vmatmul.mubr.f32.gmra.mrb[0].mxu0 %v1020
  %v1109 = vpop.f32.mrb[0].mxu0
  %v1110 = vadd.f32 %v1018, %v1109
  %v1111 = vpop.f32.mrb[0].mxu0
  %1112 = vmatprep.mubr.f32.mxu0 0.0
  %1113 = vmatmul.mubr.f32.gmra.mrb[0].mxu0 %v1023
  %v1114 = vpop.f32.mrb[0].mxu0
  %v1115 = vadd.f32 %v1018, %v1114
  %v1116 = vpop.f32.mrb[0].mxu0
  %1117 = vmatprep.mubr.f32.mxu0 0.0
  %1118 = vmatmul.mubr.f32.gmra.mrb[0].mxu0 %v1026
  %v1119 = vpop.f32.mrb[0].mxu0
  %v1120 = vadd.f32 %v1018, %v1119
  %v1121 = vpop.f32.mrb[0].mxu0
  %1122 = vmatprep.mubr.f32.mxu0 0.0
  %1123 = vmatmul.mubr.f32.gmra.mrb[0].mxu0 %v1029
  %v1124 = vpop.f32.mrb[0].mxu0
  %v1125 = vadd.f32 %v1018, %v1124
  %v1126 = vpop.f32.mrb[0].mxu0
  %1127 = vmatprep.mubr.f32.mxu0 0.0
  %1128 = vmatmul.mubr.f32.gmra.mrb[0].mxu0 %v1032
  %v1129 = vpop.f32.mrb[0].mxu0
  %v1130 = vadd.f32 %v1018, %v1129
  %v1131 = vpop.f32.mrb[0].mxu0
  %1132 = vmatprep.mubr.f32.mxu0 0.0
  %1133 = vmatmul.mubr.f32.gmra.mrb[0].mxu0 %v1035
  %v1134 = vpop.f32.mrb[0].mxu0
  %v1135 = vadd.f32 %v1018, %v1134
  %v1136 = vpop.f32.mrb[0].mxu0
  %1137 = vmatprep.mubr.f32.mxu0 0.0
  %1138 = vmatmul.mubr.f32.gmra.mrb[0].mxu0 %v1038
  %v1139 = vpop.f32.mrb[0].mxu0
  %v1140 = vadd.f32 %v1018, %v1139
  %v1141 = vpop.f32.mrb[0].mxu0
  %1142 = vmatprep.mubr.f32.mxu0 0.0
  %1143 = vmatmul.mubr.f32.gmra.mrb[0].mxu0 %v1041
  %v1144 = vpop.f32.mrb[0].mxu0
  %v1145 = vadd.f32 %v1018, %v1144
  %v1146 = vpop.f32.mrb[0].mxu0
  %1147 = vdwg.mxu0
  %1148 = vst [vmem:[#allocation2] sm:$0xff] %v1110
  %1149 = vst [vmem:[#allocation2 + $0x8] sm:$0xff] %v1115
  %1150 = vst [vmem:[#allocation2 + $0x10] sm:$0xff] %v1120
  %1151 = vst [vmem:[#allocation2 + $0x18] sm:$0xff] %v1125
  %1152 = vst [vmem:[#allocation2 + $0x20] sm:$0xff] %v1130
  %1153 = vst [vmem:[#allocation2 + $0x28] sm:$0xff] %v1135
  %1154 = vst [vmem:[#allocation2 + $0x30] sm:$0xff] %v1140
  %1155 = vst [vmem:[#allocation2 + $0x38] sm:$0xff] %v1145
  %v1156 = vld [vmem:[%s0 + $0x40] sm:$0xff]
  %v1157 = vld [vmem:[%s0 + $0x48] sm:$0xff]
  %v1158 = vld [vmem:[%s0 + $0x50] sm:$0xff]
  %v1159 = vld [vmem:[%s0 + $0x58] sm:$0xff]
  %v1160 = vld [vmem:[%s0 + $0x60] sm:$0xff]
  %v1161 = vld [vmem:[%s0 + $0x68] sm:$0xff]
  %v1162 = vld [vmem:[%s0 + $0x70] sm:$0xff]
  %v1163 = vld [vmem:[%s0 + $0x78] sm:$0xff]
  %v1164 = vld [vmem:[%s1 + $0x48] sm:$0xff]
  %v1165 = vld [vmem:[%s1 + $0x50] sm:$0xff]
  %v1166 = vld [vmem:[%s1 + $0x58] sm:$0xff]
  %v1167 = vld [vmem:[%s1 + $0x60] sm:$0xff]
  %v1168 = vld [vmem:[%s1 + $0x68] sm:$0xff]
  %v1169 = vld [vmem:[%s1 + $0x70] sm:$0xff]
  %v1170 = vld [vmem:[%s1 + $0x78] sm:$0xff]
  %v1171 = vld [vmem:[%s1 + $0x80] sm:$0xff]
  %v1172 = vld [vmem:[%s1 + $0x88] sm:$0x1]
  %v1173 = vlaneseq
  %v1174 = vshrl.u32 %v1173, 7
  %v1175 = vsub.s32 0, %v1174
  %v1176 = vrot.slane %v1172, %v1175
  %v1178 = vsel %vm35, %v1156, 0
  %v1181 = vsel %vm35, %v1157, 0
  %v1184 = vsel %vm35, %v1158, 0
  %v1187 = vsel %vm35, %v1159, 0
  %v1190 = vsel %vm35, %v1160, 0
  %v1193 = vsel %vm35, %v1161, 0
  %v1196 = vsel %vm35, %v1162, 0
  %v1199 = vsel %vm35, %v1163, 0
  %1201 = vmatprep.subr.mxu0 0.0
  %1202 = vmatpush1.msra.mxu0 %v1164
  %1203 = vmatprep.subr.mxu0 0.0
  %1204 = vmatpush1.msra.mxu0 %v1165
  %1205 = vmatprep.subr.mxu0 0.0
  %1206 = vmatpush1.msra.mxu0 %v1166
  %1207 = vmatprep.subr.mxu0 0.0
  %1208 = vmatpush1.msra.mxu0 %v1167
  %1209 = vmatprep.subr.mxu0 0.0
  %1210 = vmatpush1.msra.mxu0 0.0
  %1211 = vmatprep.subr.mxu0 0.0
  %1212 = vmatpush1.msra.mxu0 0.0
  %1213 = vmatprep.subr.mxu0 0.0
  %1214 = vmatpush1.msra.mxu0 0.0
  %1215 = vmatprep.subr.mxu0 0.0
  %1216 = vmatpush1.msra.mxu0 0.0
  %1217 = vmatprep.subr.mxu0 0.0
  %1218 = vmatpush1.msra.mxu0 0.0
  %1219 = vmatprep.subr.mxu0 0.0
  %1220 = vmatpush1.msra.mxu0 0.0
  %1221 = vmatprep.subr.mxu0 0.0
  %1222 = vmatpush1.msra.mxu0 0.0
  %1223 = vmatprep.subr.mxu0 0.0
  %1224 = vmatpush1.msra.mxu0 0.0
  %1225 = vmatprep.subr.mxu0 0.0
  %1226 = vmatpush1.msra.mxu0 0.0
  %1227 = vmatprep.subr.mxu0 0.0
  %1228 = vmatpush1.msra.mxu0 0.0
  %1229 = vmatprep.subr.mxu0 0.0
  %1230 = vmatpush1.msra.mxu0 0.0
  %1231 = vmatprep.subr.mxu0 0.0
  %1232 = vmatpush1.msra.mxu0 0.0
  %1233 = vmatprep.subr.mxu0 0.0
  %1234 = vmatpush1.msra.mxu0 0.0
  %1235 = vmatprep.subr.mxu0 0.0
  %1236 = vmatpush1.msra.mxu0 0.0
  %1237 = vmatprep.subr.mxu0 0.0
  %1238 = vmatpush1.msra.mxu0 0.0
  %1239 = vmatprep.subr.mxu0 0.0
  %1240 = vmatpush1.msra.mxu0 0.0
  %1241 = vmatprep.subr.mxu0 0.0
  %1242 = vmatpush1.msra.mxu0 0.0
  %1243 = vmatprep.subr.mxu0 0.0
  %1244 = vmatpush1.msra.mxu0 0.0
  %1245 = vmatprep.subr.mxu0 0.0
  %1246 = vmatpush1.msra.mxu0 0.0
  %1247 = vmatprep.subr.mxu0 0.0
  %1248 = vmatpush1.msra.mxu0 0.0
  %1249 = vmatprep.subr.mxu0 0.0
  %1250 = vmatpush1.msra.mxu0 0.0
  %1251 = vmatprep.subr.mxu0 0.0
  %1252 = vmatpush1.msra.mxu0 0.0
  %1253 = vmatprep.subr.mxu0 0.0
  %1254 = vmatpush1.msra.mxu0 0.0
  %1255 = vmatprep.subr.mxu0 0.0
  %1256 = vmatpush1.msra.mxu0 0.0
  %1257 = vmatprep.subr.mxu0 0.0
  %1258 = vmatpush1.msra.mxu0 0.0
  %1259 = vmatprep.subr.mxu0 0.0
  %1260 = vmatpush1.msra.mxu0 0.0
  %1261 = vmatprep.subr.mxu0 0.0
  %1262 = vmatpush1.msra.mxu0 0.0
  %1263 = vmatprep.subr.mxu0 0.0
  %1264 = vmatpush1.msra.mxu0 0.0
  %1265 = vmatprep.mubr.f32.mxu0 0.0
  %1266 = vmatmul.mubr.f32.gmra.mrb[0].mxu0 %v1178
  %v1267 = vpop.f32.mrb[0].mxu0
  %v1268 = vadd.f32 %v1176, %v1267
  %v1269 = vpop.f32.mrb[0].mxu0
  %1270 = vmatprep.mubr.f32.mxu0 0.0
  %1271 = vmatmul.mubr.f32.gmra.mrb[0].mxu0 %v1181
  %v1272 = vpop.f32.mrb[0].mxu0
  %v1273 = vadd.f32 %v1176, %v1272
  %v1274 = vpop.f32.mrb[0].mxu0
  %1275 = vmatprep.mubr.f32.mxu0 0.0
  %1276 = vmatmul.mubr.f32.gmra.mrb[0].mxu0 %v1184
  %v1277 = vpop.f32.mrb[0].mxu0
  %v1278 = vadd.f32 %v1176, %v1277
  %v1279 = vpop.f32.mrb[0].mxu0
  %1280 = vmatprep.mubr.f32.mxu0 0.0
  %1281 = vmatmul.mubr.f32.gmra.mrb[0].mxu0 %v1187
  %v1282 = vpop.f32.mrb[0].mxu0
  %v1283 = vadd.f32 %v1176, %v1282
  %v1284 = vpop.f32.mrb[0].mxu0
  %1285 = vmatprep.mubr.f32.mxu0 0.0
  %1286 = vmatmul.mubr.f32.gmra.mrb[0].mxu0 %v1190
  %v1287 = vpop.f32.mrb[0].mxu0
  %v1288 = vadd.f32 %v1176, %v1287
  %v1289 = vpop.f32.mrb[0].mxu0
  %1290 = vmatprep.mubr.f32.mxu0 0.0
  %1291 = vmatmul.mubr.f32.gmra.mrb[0].mxu0 %v1193
  %v1292 = vpop.f32.mrb[0].mxu0
  %v1293 = vadd.f32 %v1176, %v1292
  %v1294 = vpop.f32.mrb[0].mxu0
  %1295 = vmatprep.mubr.f32.mxu0 0.0
  %1296 = vmatmul.mubr.f32.gmra.mrb[0].mxu0 %v1196
  %v1297 = vpop.f32.mrb[0].mxu0
  %v1298 = vadd.f32 %v1176, %v1297
  %v1299 = vpop.f32.mrb[0].mxu0
  %1300 = vmatprep.mubr.f32.mxu0 0.0
  %1301 = vmatmul.mubr.f32.gmra.mrb[0].mxu0 %v1199
  %v1302 = vpop.f32.mrb[0].mxu0
  %v1303 = vadd.f32 %v1176, %v1302
  %v1304 = vpop.f32.mrb[0].mxu0
  %1305 = vdwg.mxu0
  %1306 = vst [vmem:[#allocation3] sm:$0xff] %v1268
  %1307 = vst [vmem:[#allocation3 + $0x8] sm:$0xff] %v1273
  %1308 = vst [vmem:[#allocation3 + $0x10] sm:$0xff] %v1278
  %1309 = vst [vmem:[#allocation3 + $0x18] sm:$0xff] %v1283
  %1310 = vst [vmem:[#allocation3 + $0x20] sm:$0xff] %v1288
  %1311 = vst [vmem:[#allocation3 + $0x28] sm:$0xff] %v1293
  %1312 = vst [vmem:[#allocation3 + $0x30] sm:$0xff] %v1298
  %1313 = vst [vmem:[#allocation3 + $0x38] sm:$0xff] %v1303
  %v1314 = vld [vmem:[#allocation2] sm:$0xff]
  %1315 = vmatprep.subr.mxu0 0.0
  %1316 = vmatpush1.msra.mxu0 %v1010
  %1317 = vmatprep.subr.mxu0 0.0
  %1318 = vmatpush1.msra.mxu0 %v1011
  %1319 = vmatprep.subr.mxu0 0.0
  %1320 = vmatpush1.msra.mxu0 %v1012
  %1321 = vmatprep.subr.mxu0 0.0
  %1322 = vmatpush1.msra.mxu0 %v1013
  %1323 = vmatprep.subr.mxu0 0.0
  %1324 = vmatpush1.msra.mxu0 0.0
  %1325 = vmatprep.subr.mxu0 0.0
  %1326 = vmatpush1.msra.mxu0 0.0
  %1327 = vmatprep.subr.mxu0 0.0
  %1328 = vmatpush1.msra.mxu0 0.0
  %1329 = vmatprep.subr.mxu0 0.0
  %1330 = vmatpush1.msra.mxu0 0.0
  %1331 = vmatprep.subr.mxu0 0.0
  %1332 = vmatpush1.msra.mxu0 0.0
  %1333 = vmatprep.subr.mxu0 0.0
  %1334 = vmatpush1.msra.mxu0 0.0
  %1335 = vmatprep.subr.mxu0 0.0
  %1336 = vmatpush1.msra.mxu0 0.0
  %1337 = vmatprep.subr.mxu0 0.0
  %1338 = vmatpush1.msra.mxu0 0.0
  %1339 = vmatprep.subr.mxu0 0.0
  %1340 = vmatpush1.msra.mxu0 0.0
  %1341 = vmatprep.subr.mxu0 0.0
  %1342 = vmatpush1.msra.mxu0 0.0
  %1343 = vmatprep.subr.mxu0 0.0
  %1344 = vmatpush1.msra.mxu0 0.0
  %1345 = vmatprep.subr.mxu0 0.0
  %1346 = vmatpush1.msra.mxu0 0.0
  %1347 = vmatprep.subr.mxu0 0.0
  %1348 = vmatpush1.msra.mxu0 0.0
  %1349 = vmatprep.subr.mxu0 0.0
  %1350 = vmatpush1.msra.mxu0 0.0
  %1351 = vmatprep.subr.mxu0 0.0
  %1352 = vmatpush1.msra.mxu0 0.0
  %1353 = vmatprep.subr.mxu0 0.0
  %1354 = vmatpush1.msra.mxu0 0.0
  %1355 = vmatprep.subr.mxu0 0.0
  %1356 = vmatpush1.msra.mxu0 0.0
  %1357 = vmatprep.subr.mxu0 0.0
  %1358 = vmatpush1.msra.mxu0 0.0
  %1359 = vmatprep.subr.mxu0 0.0
  %1360 = vmatpush1.msra.mxu0 0.0
  %1361 = vmatprep.subr.mxu0 0.0
  %1362 = vmatpush1.msra.mxu0 0.0
  %1363 = vmatprep.subr.mxu0 0.0
  %1364 = vmatpush1.msra.mxu0 0.0
  %1365 = vmatprep.subr.mxu0 0.0
  %1366 = vmatpush1.msra.mxu0 0.0
  %1367 = vmatprep.subr.mxu0 0.0
  %1368 = vmatpush1.msra.mxu0 0.0
  %1369 = vmatprep.subr.mxu0 0.0
  %1370 = vmatpush1.msra.mxu0 0.0
  %1371 = vmatprep.subr.mxu0 0.0
  %1372 = vmatpush1.msra.mxu0 0.0
  %1373 = vmatprep.subr.mxu0 0.0
  %1374 = vmatpush1.msra.mxu0 0.0
  %1375 = vmatprep.subr.mxu0 0.0
  %1376 = vmatpush1.msra.mxu0 0.0
  %1377 = vmatprep.subr.mxu0 0.0
  %1378 = vmatpush1.msra.mxu0 0.0
  %1379 = vmatprep.mubr.f32.mxu0 0.0
  %1380 = vmatmul.mubr.f32.gmra.mrb[0].mxu0 %v175
  %v1381 = vpop.f32.mrb[0].mxu0
  %v1382 = vadd.f32 0.0, %v1381
  %v1383 = vpop.f32.mrb[0].mxu0
  %1384 = vdwg.mxu0
  %v1385 = vadd.f32 %v1314, %v1382
  %v1386 = vxor.u32 %v1385, 2147483648
  %v1387 = vmul.f32 %v1386, 1.442695
  %v1388 = vpow.pop %v1387
  %v1389 = vadd.f32 %v1388, 1.0
  %v1390 = vrcp.pop %v1389
  %v1391 = vmul.f32 1.0, %v1390
  %v1392 = vtanh.pop %v1385
  %v1393 = vmul.f32 %v1391, 0.0
  %1395 = vrot.lane.b32.xlu0 %v1392, 64
  %v1396 = vpop.permute.xlu0 %1395
  %v1398 = vmul.f32 %v1391, %v1396
  %1400 = vrot.lane.b32.xlu0 %v1398, 32
  %v1401 = vpop.permute.xlu0 %1400
  %v1403 = vadd.f32 %v1393, %v1401
  %v1404 = vtanh.pop %v1403
  %1406 = vrot.lane.b32.xlu0 %v1404, 64
  %v1407 = vpop.permute.xlu0 %1406
  %v1409 = vmul.f32 %v1391, %v1407
  %1411 = vrot.lane.b32.xlu0 %v1409, 32
  %v1412 = vpop.permute.xlu0 %1411
  %1414 = vst.msk [vmem:[#allocation5] sm:$0xff] %vm35, %v1412
  %v1415 = vld [vmem:[#allocation3] sm:$0xff]
  %v1416 = vsel %vm35, %v995, 0
  %1418 = vmatprep.subr.mxu0 0.0
  %1419 = vmatpush1.msra.mxu0 %v1168
  %1420 = vmatprep.subr.mxu0 0.0
  %1421 = vmatpush1.msra.mxu0 %v1169
  %1422 = vmatprep.subr.mxu0 0.0
  %1423 = vmatpush1.msra.mxu0 %v1170
  %1424 = vmatprep.subr.mxu0 0.0
  %1425 = vmatpush1.msra.mxu0 %v1171
  %1426 = vmatprep.subr.mxu0 0.0
  %1427 = vmatpush1.msra.mxu0 0.0
  %1428 = vmatprep.subr.mxu0 0.0
  %1429 = vmatpush1.msra.mxu0 0.0
  %1430 = vmatprep.subr.mxu0 0.0
  %1431 = vmatpush1.msra.mxu0 0.0
  %1432 = vmatprep.subr.mxu0 0.0
  %1433 = vmatpush1.msra.mxu0 0.0
  %1434 = vmatprep.subr.mxu0 0.0
  %1435 = vmatpush1.msra.mxu0 0.0
  %1436 = vmatprep.subr.mxu0 0.0
  %1437 = vmatpush1.msra.mxu0 0.0
  %1438 = vmatprep.subr.mxu0 0.0
  %1439 = vmatpush1.msra.mxu0 0.0
  %1440 = vmatprep.subr.mxu0 0.0
  %1441 = vmatpush1.msra.mxu0 0.0
  %1442 = vmatprep.subr.mxu0 0.0
  %1443 = vmatpush1.msra.mxu0 0.0
  %1444 = vmatprep.subr.mxu0 0.0
  %1445 = vmatpush1.msra.mxu0 0.0
  %1446 = vmatprep.subr.mxu0 0.0
  %1447 = vmatpush1.msra.mxu0 0.0
  %1448 = vmatprep.subr.mxu0 0.0
  %1449 = vmatpush1.msra.mxu0 0.0
  %1450 = vmatprep.subr.mxu0 0.0
  %1451 = vmatpush1.msra.mxu0 0.0
  %1452 = vmatprep.subr.mxu0 0.0
  %1453 = vmatpush1.msra.mxu0 0.0
  %1454 = vmatprep.subr.mxu0 0.0
  %1455 = vmatpush1.msra.mxu0 0.0
  %1456 = vmatprep.subr.mxu0 0.0
  %1457 = vmatpush1.msra.mxu0 0.0
  %1458 = vmatprep.subr.mxu0 0.0
  %1459 = vmatpush1.msra.mxu0 0.0
  %1460 = vmatprep.subr.mxu0 0.0
  %1461 = vmatpush1.msra.mxu0 0.0
  %1462 = vmatprep.subr.mxu0 0.0
  %1463 = vmatpush1.msra.mxu0 0.0
  %1464 = vmatprep.subr.mxu0 0.0
  %1465 = vmatpush1.msra.mxu0 0.0
  %1466 = vmatprep.subr.mxu0 0.0
  %1467 = vmatpush1.msra.mxu0 0.0
  %1468 = vmatprep.subr.mxu0 0.0
  %1469 = vmatpush1.msra.mxu0 0.0
  %1470 = vmatprep.subr.mxu0 0.0
  %1471 = vmatpush1.msra.mxu0 0.0
  %1472 = vmatprep.subr.mxu0 0.0
  %1473 = vmatpush1.msra.mxu0 0.0
  %1474 = vmatprep.subr.mxu0 0.0
  %1475 = vmatpush1.msra.mxu0 0.0
  %1476 = vmatprep.subr.mxu0 0.0
  %1477 = vmatpush1.msra.mxu0 0.0
  %1478 = vmatprep.subr.mxu0 0.0
  %1479 = vmatpush1.msra.mxu0 0.0
  %1480 = vmatprep.subr.mxu0 0.0
  %1481 = vmatpush1.msra.mxu0 0.0
  %1482 = vmatprep.mubr.f32.mxu0 0.0
  %1483 = vmatmul.mubr.f32.gmra.mrb[0].mxu0 %v1416
  %v1484 = vpop.f32.mrb[0].mxu0
  %v1485 = vadd.f32 0.0, %v1484
  %v1486 = vpop.f32.mrb[0].mxu0
  %1487 = vdwg.mxu0
  %v1488 = vadd.f32 %v1415, %v1485
  %v1489 = vxor.u32 %v1488, 2147483648
  %v1490 = vmul.f32 %v1489, 1.442695
  %v1491 = vpow.pop %v1490
  %v1492 = vadd.f32 %v1491, 1.0
  %v1493 = vrcp.pop %v1492
  %v1494 = vmul.f32 1.0, %v1493
  %v1495 = vtanh.pop %v1488
  %v1496 = vmul.f32 %v1494, %v986
  %1498 = vrot.lane.b32.xlu0 %v1495, 64
  %v1499 = vpop.permute.xlu0 %1498
  %v1501 = vmul.f32 %v1494, %v1499
  %1503 = vrot.lane.b32.xlu0 %v1501, 32
  %v1504 = vpop.permute.xlu0 %1503
  %v1506 = vadd.f32 %v1496, %v1504
  %v1507 = vtanh.pop %v1506
  %1509 = vrot.lane.b32.xlu0 %v1507, 64
  %v1510 = vpop.permute.xlu0 %1509
  %v1512 = vmul.f32 %v1494, %v1510
  %1514 = vrot.lane.b32.xlu0 %v1512, 32
  %v1515 = vpop.permute.xlu0 %1514
  %1517 = vst.msk [vmem:[#allocation6] sm:$0xff] %vm35, %v1515
  %v1518 = vld [vmem:[#allocation2 + $0x8] sm:$0xff]
  %v1519 = vsel %vm35, %v1412, 0
  %1521 = vmatprep.subr.mxu0 0.0
  %1522 = vmatpush1.msra.mxu0 %v1010
  %1523 = vmatprep.subr.mxu0 0.0
  %1524 = vmatpush1.msra.mxu0 %v1011
  %1525 = vmatprep.subr.mxu0 0.0
  %1526 = vmatpush1.msra.mxu0 %v1012
  %1527 = vmatprep.subr.mxu0 0.0
  %1528 = vmatpush1.msra.mxu0 %v1013
  %1529 = vmatprep.subr.mxu0 0.0
  %1530 = vmatpush1.msra.mxu0 0.0
  %1531 = vmatprep.subr.mxu0 0.0
  %1532 = vmatpush1.msra.mxu0 0.0
  %1533 = vmatprep.subr.mxu0 0.0
  %1534 = vmatpush1.msra.mxu0 0.0
  %1535 = vmatprep.subr.mxu0 0.0
  %1536 = vmatpush1.msra.mxu0 0.0
  %1537 = vmatprep.subr.mxu0 0.0
  %1538 = vmatpush1.msra.mxu0 0.0
  %1539 = vmatprep.subr.mxu0 0.0
  %1540 = vmatpush1.msra.mxu0 0.0
  %1541 = vmatprep.subr.mxu0 0.0
  %1542 = vmatpush1.msra.mxu0 0.0
  %1543 = vmatprep.subr.mxu0 0.0
  %1544 = vmatpush1.msra.mxu0 0.0
  %1545 = vmatprep.subr.mxu0 0.0
  %1546 = vmatpush1.msra.mxu0 0.0
  %1547 = vmatprep.subr.mxu0 0.0
  %1548 = vmatpush1.msra.mxu0 0.0
  %1549 = vmatprep.subr.mxu0 0.0
  %1550 = vmatpush1.msra.mxu0 0.0
  %1551 = vmatprep.subr.mxu0 0.0
  %1552 = vmatpush1.msra.mxu0 0.0
  %1553 = vmatprep.subr.mxu0 0.0
  %1554 = vmatpush1.msra.mxu0 0.0
  %1555 = vmatprep.subr.mxu0 0.0
  %1556 = vmatpush1.msra.mxu0 0.0
  %1557 = vmatprep.subr.mxu0 0.0
  %1558 = vmatpush1.msra.mxu0 0.0
  %1559 = vmatprep.subr.mxu0 0.0
  %1560 = vmatpush1.msra.mxu0 0.0
  %1561 = vmatprep.subr.mxu0 0.0
  %1562 = vmatpush1.msra.mxu0 0.0
  %1563 = vmatprep.subr.mxu0 0.0
  %1564 = vmatpush1.msra.mxu0 0.0
  %1565 = vmatprep.subr.mxu0 0.0
  %1566 = vmatpush1.msra.mxu0 0.0
  %1567 = vmatprep.subr.mxu0 0.0
  %1568 = vmatpush1.msra.mxu0 0.0
  %1569 = vmatprep.subr.mxu0 0.0
  %1570 = vmatpush1.msra.mxu0 0.0
  %1571 = vmatprep.subr.mxu0 0.0
  %1572 = vmatpush1.msra.mxu0 0.0
  %1573 = vmatprep.subr.mxu0 0.0
  %1574 = vmatpush1.msra.mxu0 0.0
  %1575 = vmatprep.subr.mxu0 0.0
  %1576 = vmatpush1.msra.mxu0 0.0
  %1577 = vmatprep.subr.mxu0 0.0
  %1578 = vmatpush1.msra.mxu0 0.0
  %1579 = vmatprep.subr.mxu0 0.0
  %1580 = vmatpush1.msra.mxu0 0.0
  %1581 = vmatprep.subr.mxu0 0.0
  %1582 = vmatpush1.msra.mxu0 0.0
  %1583 = vmatprep.subr.mxu0 0.0
  %1584 = vmatpush1.msra.mxu0 0.0
  %1585 = vmatprep.mubr.f32.mxu0 0.0
  %1586 = vmatmul.mubr.f32.gmra.mrb[0].mxu0 %v1519
  %v1587 = vpop.f32.mrb[0].mxu0
  %v1588 = vadd.f32 0.0, %v1587
  %v1589 = vpop.f32.mrb[0].mxu0
  %1590 = vdwg.mxu0
  %v1591 = vadd.f32 %v1518, %v1588
  %v1592 = vxor.u32 %v1591, 2147483648
  %v1593 = vmul.f32 %v1592, 1.442695
  %v1594 = vpow.pop %v1593
  %v1595 = vadd.f32 %v1594, 1.0
  %v1596 = vrcp.pop %v1595
  %v1597 = vmul.f32 1.0, %v1596
  %v1598 = vtanh.pop %v1591
  %v1599 = vmul.f32 %v1597, %v1403
  %1601 = vrot.lane.b32.xlu0 %v1598, 64
  %v1602 = vpop.permute.xlu0 %1601
  %v1604 = vmul.f32 %v1597, %v1602
  %1606 = vrot.lane.b32.xlu0 %v1604, 32
  %v1607 = vpop.permute.xlu0 %1606
  %v1609 = vadd.f32 %v1599, %v1607
  %v1610 = vtanh.pop %v1609
  %1612 = vrot.lane.b32.xlu0 %v1610, 64
  %v1613 = vpop.permute.xlu0 %1612
  %v1615 = vmul.f32 %v1597, %v1613
  %1617 = vrot.lane.b32.xlu0 %v1615, 32
  %v1618 = vpop.permute.xlu0 %1617
  %1620 = vst.msk [vmem:[#allocation5 + $0x8] sm:$0xff] %vm35, %v1618
  %v1621 = vld [vmem:[#allocation3 + $0x8] sm:$0xff]
  %v1622 = vsel %vm35, %v1515, 0
  %1624 = vmatprep.subr.mxu0 0.0
  %1625 = vmatpush1.msra.mxu0 %v1168
  %1626 = vmatprep.subr.mxu0 0.0
  %1627 = vmatpush1.msra.mxu0 %v1169
  %1628 = vmatprep.subr.mxu0 0.0
  %1629 = vmatpush1.msra.mxu0 %v1170
  %1630 = vmatprep.subr.mxu0 0.0
  %1631 = vmatpush1.msra.mxu0 %v1171
  %1632 = vmatprep.subr.mxu0 0.0
  %1633 = vmatpush1.msra.mxu0 0.0
  %1634 = vmatprep.subr.mxu0 0.0
  %1635 = vmatpush1.msra.mxu0 0.0
  %1636 = vmatprep.subr.mxu0 0.0
  %1637 = vmatpush1.msra.mxu0 0.0
  %1638 = vmatprep.subr.mxu0 0.0
  %1639 = vmatpush1.msra.mxu0 0.0
  %1640 = vmatprep.subr.mxu0 0.0
  %1641 = vmatpush1.msra.mxu0 0.0
  %1642 = vmatprep.subr.mxu0 0.0
  %1643 = vmatpush1.msra.mxu0 0.0
  %1644 = vmatprep.subr.mxu0 0.0
  %1645 = vmatpush1.msra.mxu0 0.0
  %1646 = vmatprep.subr.mxu0 0.0
  %1647 = vmatpush1.msra.mxu0 0.0
  %1648 = vmatprep.subr.mxu0 0.0
  %1649 = vmatpush1.msra.mxu0 0.0
  %1650 = vmatprep.subr.mxu0 0.0
  %1651 = vmatpush1.msra.mxu0 0.0
  %1652 = vmatprep.subr.mxu0 0.0
  %1653 = vmatpush1.msra.mxu0 0.0
  %1654 = vmatprep.subr.mxu0 0.0
  %1655 = vmatpush1.msra.mxu0 0.0
  %1656 = vmatprep.subr.mxu0 0.0
  %1657 = vmatpush1.msra.mxu0 0.0
  %1658 = vmatprep.subr.mxu0 0.0
  %1659 = vmatpush1.msra.mxu0 0.0
  %1660 = vmatprep.subr.mxu0 0.0
  %1661 = vmatpush1.msra.mxu0 0.0
  %1662 = vmatprep.subr.mxu0 0.0
  %1663 = vmatpush1.msra.mxu0 0.0
  %1664 = vmatprep.subr.mxu0 0.0
  %1665 = vmatpush1.msra.mxu0 0.0
  %1666 = vmatprep.subr.mxu0 0.0
  %1667 = vmatpush1.msra.mxu0 0.0
  %1668 = vmatprep.subr.mxu0 0.0
  %1669 = vmatpush1.msra.mxu0 0.0
  %1670 = vmatprep.subr.mxu0 0.0
  %1671 = vmatpush1.msra.mxu0 0.0
  %1672 = vmatprep.subr.mxu0 0.0
  %1673 = vmatpush1.msra.mxu0 0.0
  %1674 = vmatprep.subr.mxu0 0.0
  %1675 = vmatpush1.msra.mxu0 0.0
  %1676 = vmatprep.subr.mxu0 0.0
  %1677 = vmatpush1.msra.mxu0 0.0
  %1678 = vmatprep.subr.mxu0 0.0
  %1679 = vmatpush1.msra.mxu0 0.0
  %1680 = vmatprep.subr.mxu0 0.0
  %1681 = vmatpush1.msra.mxu0 0.0
  %1682 = vmatprep.subr.mxu0 0.0
  %1683 = vmatpush1.msra.mxu0 0.0
  %1684 = vmatprep.subr.mxu0 0.0
  %1685 = vmatpush1.msra.mxu0 0.0
  %1686 = vmatprep.subr.mxu0 0.0
  %1687 = vmatpush1.msra.mxu0 0.0
  %1688 = vmatprep.mubr.f32.mxu0 0.0
  %1689 = vmatmul.mubr.f32.gmra.mrb[0].mxu0 %v1622
  %v1690 = vpop.f32.mrb[0].mxu0
  %v1691 = vadd.f32 0.0, %v1690
  %v1692 = vpop.f32.mrb[0].mxu0
  %1693 = vdwg.mxu0
  %v1694 = vadd.f32 %v1621, %v1691
  %v1695 = vxor.u32 %v1694, 2147483648
  %v1696 = vmul.f32 %v1695, 1.442695
  %v1697 = vpow.pop %v1696
  %v1698 = vadd.f32 %v1697, 1.0
  %v1699 = vrcp.pop %v1698
  %v1700 = vmul.f32 1.0, %v1699
  %v1701 = vtanh.pop %v1694
  %v1702 = vmul.f32 %v1700, %v1506
  %1704 = vrot.lane.b32.xlu0 %v1701, 64
  %v1705 = vpop.permute.xlu0 %1704
  %v1707 = vmul.f32 %v1700, %v1705
  %1709 = vrot.lane.b32.xlu0 %v1707, 32
  %v1710 = vpop.permute.xlu0 %1709
  %v1712 = vadd.f32 %v1702, %v1710
  %v1713 = vtanh.pop %v1712
  %1715 = vrot.lane.b32.xlu0 %v1713, 64
  %v1716 = vpop.permute.xlu0 %1715
  %v1718 = vmul.f32 %v1700, %v1716
  %1720 = vrot.lane.b32.xlu0 %v1718, 32
  %v1721 = vpop.permute.xlu0 %1720
  %1723 = vst.msk [vmem:[#allocation6 + $0x8] sm:$0xff] %vm35, %v1721
  %v1724 = vld [vmem:[#allocation2 + $0x10] sm:$0xff]
  %v1725 = vsel %vm35, %v1618, 0
  %1727 = vmatprep.subr.mxu0 0.0
  %1728 = vmatpush1.msra.mxu0 %v1010
  %1729 = vmatprep.subr.mxu0 0.0
  %1730 = vmatpush1.msra.mxu0 %v1011
  %1731 = vmatprep.subr.mxu0 0.0
  %1732 = vmatpush1.msra.mxu0 %v1012
  %1733 = vmatprep.subr.mxu0 0.0
  %1734 = vmatpush1.msra.mxu0 %v1013
  %1735 = vmatprep.subr.mxu0 0.0
  %1736 = vmatpush1.msra.mxu0 0.0
  %1737 = vmatprep.subr.mxu0 0.0
  %1738 = vmatpush1.msra.mxu0 0.0
  %1739 = vmatprep.subr.mxu0 0.0
  %1740 = vmatpush1.msra.mxu0 0.0
  %1741 = vmatprep.subr.mxu0 0.0
  %1742 = vmatpush1.msra.mxu0 0.0
  %1743 = vmatprep.subr.mxu0 0.0
  %1744 = vmatpush1.msra.mxu0 0.0
  %1745 = vmatprep.subr.mxu0 0.0
  %1746 = vmatpush1.msra.mxu0 0.0
  %1747 = vmatprep.subr.mxu0 0.0
  %1748 = vmatpush1.msra.mxu0 0.0
  %1749 = vmatprep.subr.mxu0 0.0
  %1750 = vmatpush1.msra.mxu0 0.0
  %1751 = vmatprep.subr.mxu0 0.0
  %1752 = vmatpush1.msra.mxu0 0.0
  %1753 = vmatprep.subr.mxu0 0.0
  %1754 = vmatpush1.msra.mxu0 0.0
  %1755 = vmatprep.subr.mxu0 0.0
  %1756 = vmatpush1.msra.mxu0 0.0
  %1757 = vmatprep.subr.mxu0 0.0
  %1758 = vmatpush1.msra.mxu0 0.0
  %1759 = vmatprep.subr.mxu0 0.0
  %1760 = vmatpush1.msra.mxu0 0.0
  %1761 = vmatprep.subr.mxu0 0.0
  %1762 = vmatpush1.msra.mxu0 0.0
  %1763 = vmatprep.subr.mxu0 0.0
  %1764 = vmatpush1.msra.mxu0 0.0
  %1765 = vmatprep.subr.mxu0 0.0
  %1766 = vmatpush1.msra.mxu0 0.0
  %1767 = vmatprep.subr.mxu0 0.0
  %1768 = vmatpush1.msra.mxu0 0.0
  %1769 = vmatprep.subr.mxu0 0.0
  %1770 = vmatpush1.msra.mxu0 0.0
  %1771 = vmatprep.subr.mxu0 0.0
  %1772 = vmatpush1.msra.mxu0 0.0
  %1773 = vmatprep.subr.mxu0 0.0
  %1774 = vmatpush1.msra.mxu0 0.0
  %1775 = vmatprep.subr.mxu0 0.0
  %1776 = vmatpush1.msra.mxu0 0.0
  %1777 = vmatprep.subr.mxu0 0.0
  %1778 = vmatpush1.msra.mxu0 0.0
  %1779 = vmatprep.subr.mxu0 0.0
  %1780 = vmatpush1.msra.mxu0 0.0
  %1781 = vmatprep.subr.mxu0 0.0
  %1782 = vmatpush1.msra.mxu0 0.0
  %1783 = vmatprep.subr.mxu0 0.0
  %1784 = vmatpush1.msra.mxu0 0.0
  %1785 = vmatprep.subr.mxu0 0.0
  %1786 = vmatpush1.msra.mxu0 0.0
  %1787 = vmatprep.subr.mxu0 0.0
  %1788 = vmatpush1.msra.mxu0 0.0
  %1789 = vmatprep.subr.mxu0 0.0
  %1790 = vmatpush1.msra.mxu0 0.0
  %1791 = vmatprep.mubr.f32.mxu0 0.0
  %1792 = vmatmul.mubr.f32.gmra.mrb[0].mxu0 %v1725
  %v1793 = vpop.f32.mrb[0].mxu0
  %v1794 = vadd.f32 0.0, %v1793
  %v1795 = vpop.f32.mrb[0].mxu0
  %1796 = vdwg.mxu0
  %v1797 = vadd.f32 %v1724, %v1794
  %v1798 = vxor.u32 %v1797, 2147483648
  %v1799 = vmul.f32 %v1798, 1.442695
  %v1800 = vpow.pop %v1799
  %v1801 = vadd.f32 %v1800, 1.0
  %v1802 = vrcp.pop %v1801
  %v1803 = vmul.f32 1.0, %v1802
  %v1804 = vtanh.pop %v1797
  %v1805 = vmul.f32 %v1803, %v1609
  %1807 = vrot.lane.b32.xlu0 %v1804, 64
  %v1808 = vpop.permute.xlu0 %1807
  %v1810 = vmul.f32 %v1803, %v1808
  %1812 = vrot.lane.b32.xlu0 %v1810, 32
  %v1813 = vpop.permute.xlu0 %1812
  %v1815 = vadd.f32 %v1805, %v1813
  %v1816 = vtanh.pop %v1815
  %1818 = vrot.lane.b32.xlu0 %v1816, 64
  %v1819 = vpop.permute.xlu0 %1818
  %v1821 = vmul.f32 %v1803, %v1819
  %1823 = vrot.lane.b32.xlu0 %v1821, 32
  %v1824 = vpop.permute.xlu0 %1823
  %1826 = vst.msk [vmem:[#allocation5 + $0x10] sm:$0xff] %vm35, %v1824
  %v1827 = vld [vmem:[#allocation3 + $0x10] sm:$0xff]
  %v1828 = vsel %vm35, %v1721, 0
  %1830 = vmatprep.subr.mxu0 0.0
  %1831 = vmatpush1.msra.mxu0 %v1168
  %1832 = vmatprep.subr.mxu0 0.0
  %1833 = vmatpush1.msra.mxu0 %v1169
  %1834 = vmatprep.subr.mxu0 0.0
  %1835 = vmatpush1.msra.mxu0 %v1170
  %1836 = vmatprep.subr.mxu0 0.0
  %1837 = vmatpush1.msra.mxu0 %v1171
  %1838 = vmatprep.subr.mxu0 0.0
  %1839 = vmatpush1.msra.mxu0 0.0
  %1840 = vmatprep.subr.mxu0 0.0
  %1841 = vmatpush1.msra.mxu0 0.0
  %1842 = vmatprep.subr.mxu0 0.0
  %1843 = vmatpush1.msra.mxu0 0.0
  %1844 = vmatprep.subr.mxu0 0.0
  %1845 = vmatpush1.msra.mxu0 0.0
  %1846 = vmatprep.subr.mxu0 0.0
  %1847 = vmatpush1.msra.mxu0 0.0
  %1848 = vmatprep.subr.mxu0 0.0
  %1849 = vmatpush1.msra.mxu0 0.0
  %1850 = vmatprep.subr.mxu0 0.0
  %1851 = vmatpush1.msra.mxu0 0.0
  %1852 = vmatprep.subr.mxu0 0.0
  %1853 = vmatpush1.msra.mxu0 0.0
  %1854 = vmatprep.subr.mxu0 0.0
  %1855 = vmatpush1.msra.mxu0 0.0
  %1856 = vmatprep.subr.mxu0 0.0
  %1857 = vmatpush1.msra.mxu0 0.0
  %1858 = vmatprep.subr.mxu0 0.0
  %1859 = vmatpush1.msra.mxu0 0.0
  %1860 = vmatprep.subr.mxu0 0.0
  %1861 = vmatpush1.msra.mxu0 0.0
  %1862 = vmatprep.subr.mxu0 0.0
  %1863 = vmatpush1.msra.mxu0 0.0
  %1864 = vmatprep.subr.mxu0 0.0
  %1865 = vmatpush1.msra.mxu0 0.0
  %1866 = vmatprep.subr.mxu0 0.0
  %1867 = vmatpush1.msra.mxu0 0.0
  %1868 = vmatprep.subr.mxu0 0.0
  %1869 = vmatpush1.msra.mxu0 0.0
  %1870 = vmatprep.subr.mxu0 0.0
  %1871 = vmatpush1.msra.mxu0 0.0
  %1872 = vmatprep.subr.mxu0 0.0
  %1873 = vmatpush1.msra.mxu0 0.0
  %1874 = vmatprep.subr.mxu0 0.0
  %1875 = vmatpush1.msra.mxu0 0.0
  %1876 = vmatprep.subr.mxu0 0.0
  %1877 = vmatpush1.msra.mxu0 0.0
  %1878 = vmatprep.subr.mxu0 0.0
  %1879 = vmatpush1.msra.mxu0 0.0
  %1880 = vmatprep.subr.mxu0 0.0
  %1881 = vmatpush1.msra.mxu0 0.0
  %1882 = vmatprep.subr.mxu0 0.0
  %1883 = vmatpush1.msra.mxu0 0.0
  %1884 = vmatprep.subr.mxu0 0.0
  %1885 = vmatpush1.msra.mxu0 0.0
  %1886 = vmatprep.subr.mxu0 0.0
  %1887 = vmatpush1.msra.mxu0 0.0
  %1888 = vmatprep.subr.mxu0 0.0
  %1889 = vmatpush1.msra.mxu0 0.0
  %1890 = vmatprep.subr.mxu0 0.0
  %1891 = vmatpush1.msra.mxu0 0.0
  %1892 = vmatprep.subr.mxu0 0.0
  %1893 = vmatpush1.msra.mxu0 0.0
  %1894 = vmatprep.mubr.f32.mxu0 0.0
  %1895 = vmatmul.mubr.f32.gmra.mrb[0].mxu0 %v1828
  %v1896 = vpop.f32.mrb[0].mxu0
  %v1897 = vadd.f32 0.0, %v1896
  %v1898 = vpop.f32.mrb[0].mxu0
  %1899 = vdwg.mxu0
  %v1900 = vadd.f32 %v1827, %v1897
  %v1901 = vxor.u32 %v1900, 2147483648
  %v1902 = vmul.f32 %v1901, 1.442695
  %v1903 = vpow.pop %v1902
  %v1904 = vadd.f32 %v1903, 1.0
  %v1905 = vrcp.pop %v1904
  %v1906 = vmul.f32 1.0, %v1905
  %v1907 = vtanh.pop %v1900
  %v1908 = vmul.f32 %v1906, %v1712
  %1910 = vrot.lane.b32.xlu0 %v1907, 64
  %v1911 = vpop.permute.xlu0 %1910
  %v1913 = vmul.f32 %v1906, %v1911
  %1915 = vrot.lane.b32.xlu0 %v1913, 32
  %v1916 = vpop.permute.xlu0 %1915
  %v1918 = vadd.f32 %v1908, %v1916
  %v1919 = vtanh.pop %v1918
  %1921 = vrot.lane.b32.xlu0 %v1919, 64
  %v1922 = vpop.permute.xlu0 %1921
  %v1924 = vmul.f32 %v1906, %v1922
  %1926 = vrot.lane.b32.xlu0 %v1924, 32
  %v1927 = vpop.permute.xlu0 %1926
  %1929 = vst.msk [vmem:[#allocation6 + $0x10] sm:$0xff] %vm35, %v1927
  %v1930 = vld [vmem:[#allocation2 + $0x18] sm:$0xff]
  %v1931 = vsel %vm35, %v1824, 0
  %1933 = vmatprep.subr.mxu0 0.0
  %1934 = vmatpush1.msra.mxu0 %v1010
  %1935 = vmatprep.subr.mxu0 0.0
  %1936 = vmatpush1.msra.mxu0 %v1011
  %1937 = vmatprep.subr.mxu0 0.0
  %1938 = vmatpush1.msra.mxu0 %v1012
  %1939 = vmatprep.subr.mxu0 0.0
  %1940 = vmatpush1.msra.mxu0 %v1013
  %1941 = vmatprep.subr.mxu0 0.0
  %1942 = vmatpush1.msra.mxu0 0.0
  %1943 = vmatprep.subr.mxu0 0.0
  %1944 = vmatpush1.msra.mxu0 0.0
  %1945 = vmatprep.subr.mxu0 0.0
  %1946 = vmatpush1.msra.mxu0 0.0
  %1947 = vmatprep.subr.mxu0 0.0
  %1948 = vmatpush1.msra.mxu0 0.0
  %1949 = vmatprep.subr.mxu0 0.0
  %1950 = vmatpush1.msra.mxu0 0.0
  %1951 = vmatprep.subr.mxu0 0.0
  %1952 = vmatpush1.msra.mxu0 0.0
  %1953 = vmatprep.subr.mxu0 0.0
  %1954 = vmatpush1.msra.mxu0 0.0
  %1955 = vmatprep.subr.mxu0 0.0
  %1956 = vmatpush1.msra.mxu0 0.0
  %1957 = vmatprep.subr.mxu0 0.0
  %1958 = vmatpush1.msra.mxu0 0.0
  %1959 = vmatprep.subr.mxu0 0.0
  %1960 = vmatpush1.msra.mxu0 0.0
  %1961 = vmatprep.subr.mxu0 0.0
  %1962 = vmatpush1.msra.mxu0 0.0
  %1963 = vmatprep.subr.mxu0 0.0
  %1964 = vmatpush1.msra.mxu0 0.0
  %1965 = vmatprep.subr.mxu0 0.0
  %1966 = vmatpush1.msra.mxu0 0.0
  %1967 = vmatprep.subr.mxu0 0.0
  %1968 = vmatpush1.msra.mxu0 0.0
  %1969 = vmatprep.subr.mxu0 0.0
  %1970 = vmatpush1.msra.mxu0 0.0
  %1971 = vmatprep.subr.mxu0 0.0
  %1972 = vmatpush1.msra.mxu0 0.0
  %1973 = vmatprep.subr.mxu0 0.0
  %1974 = vmatpush1.msra.mxu0 0.0
  %1975 = vmatprep.subr.mxu0 0.0
  %1976 = vmatpush1.msra.mxu0 0.0
  %1977 = vmatprep.subr.mxu0 0.0
  %1978 = vmatpush1.msra.mxu0 0.0
  %1979 = vmatprep.subr.mxu0 0.0
  %1980 = vmatpush1.msra.mxu0 0.0
  %1981 = vmatprep.subr.mxu0 0.0
  %1982 = vmatpush1.msra.mxu0 0.0
  %1983 = vmatprep.subr.mxu0 0.0
  %1984 = vmatpush1.msra.mxu0 0.0
  %1985 = vmatprep.subr.mxu0 0.0
  %1986 = vmatpush1.msra.mxu0 0.0
  %1987 = vmatprep.subr.mxu0 0.0
  %1988 = vmatpush1.msra.mxu0 0.0
  %1989 = vmatprep.subr.mxu0 0.0
  %1990 = vmatpush1.msra.mxu0 0.0
  %1991 = vmatprep.subr.mxu0 0.0
  %1992 = vmatpush1.msra.mxu0 0.0
  %1993 = vmatprep.subr.mxu0 0.0
  %1994 = vmatpush1.msra.mxu0 0.0
  %1995 = vmatprep.subr.mxu0 0.0
  %1996 = vmatpush1.msra.mxu0 0.0
  %1997 = vmatprep.mubr.f32.mxu0 0.0
  %1998 = vmatmul.mubr.f32.gmra.mrb[0].mxu0 %v1931
  %v1999 = vpop.f32.mrb[0].mxu0
  %v2000 = vadd.f32 0.0, %v1999
  %v2001 = vpop.f32.mrb[0].mxu0
  %2002 = vdwg.mxu0
  %v2003 = vadd.f32 %v1930, %v2000
  %v2004 = vxor.u32 %v2003, 2147483648
  %v2005 = vmul.f32 %v2004, 1.442695
  %v2006 = vpow.pop %v2005
  %v2007 = vadd.f32 %v2006, 1.0
  %v2008 = vrcp.pop %v2007
  %v2009 = vmul.f32 1.0, %v2008
  %v2010 = vtanh.pop %v2003
  %v2011 = vmul.f32 %v2009, %v1815
  %2013 = vrot.lane.b32.xlu0 %v2010, 64
  %v2014 = vpop.permute.xlu0 %2013
  %v2016 = vmul.f32 %v2009, %v2014
  %2018 = vrot.lane.b32.xlu0 %v2016, 32
  %v2019 = vpop.permute.xlu0 %2018
  %v2021 = vadd.f32 %v2011, %v2019
  %v2022 = vtanh.pop %v2021
  %2024 = vrot.lane.b32.xlu0 %v2022, 64
  %v2025 = vpop.permute.xlu0 %2024
  %v2027 = vmul.f32 %v2009, %v2025
  %2029 = vrot.lane.b32.xlu0 %v2027, 32
  %v2030 = vpop.permute.xlu0 %2029
  %2032 = vst.msk [vmem:[#allocation5 + $0x18] sm:$0xff] %vm35, %v2030
  %v2033 = vld [vmem:[#allocation3 + $0x18] sm:$0xff]
  %v2034 = vsel %vm35, %v1927, 0
  %2036 = vmatprep.subr.mxu0 0.0
  %2037 = vmatpush1.msra.mxu0 %v1168
  %2038 = vmatprep.subr.mxu0 0.0
  %2039 = vmatpush1.msra.mxu0 %v1169
  %2040 = vmatprep.subr.mxu0 0.0
  %2041 = vmatpush1.msra.mxu0 %v1170
  %2042 = vmatprep.subr.mxu0 0.0
  %2043 = vmatpush1.msra.mxu0 %v1171
  %2044 = vmatprep.subr.mxu0 0.0
  %2045 = vmatpush1.msra.mxu0 0.0
  %2046 = vmatprep.subr.mxu0 0.0
  %2047 = vmatpush1.msra.mxu0 0.0
  %2048 = vmatprep.subr.mxu0 0.0
  %2049 = vmatpush1.msra.mxu0 0.0
  %2050 = vmatprep.subr.mxu0 0.0
  %2051 = vmatpush1.msra.mxu0 0.0
  %2052 = vmatprep.subr.mxu0 0.0
  %2053 = vmatpush1.msra.mxu0 0.0
  %2054 = vmatprep.subr.mxu0 0.0
  %2055 = vmatpush1.msra.mxu0 0.0
  %2056 = vmatprep.subr.mxu0 0.0
  %2057 = vmatpush1.msra.mxu0 0.0
  %2058 = vmatprep.subr.mxu0 0.0
  %2059 = vmatpush1.msra.mxu0 0.0
  %2060 = vmatprep.subr.mxu0 0.0
  %2061 = vmatpush1.msra.mxu0 0.0
  %2062 = vmatprep.subr.mxu0 0.0
  %2063 = vmatpush1.msra.mxu0 0.0
  %2064 = vmatprep.subr.mxu0 0.0
  %2065 = vmatpush1.msra.mxu0 0.0
  %2066 = vmatprep.subr.mxu0 0.0
  %2067 = vmatpush1.msra.mxu0 0.0
  %2068 = vmatprep.subr.mxu0 0.0
  %2069 = vmatpush1.msra.mxu0 0.0
  %2070 = vmatprep.subr.mxu0 0.0
  %2071 = vmatpush1.msra.mxu0 0.0
  %2072 = vmatprep.subr.mxu0 0.0
  %2073 = vmatpush1.msra.mxu0 0.0
  %2074 = vmatprep.subr.mxu0 0.0
  %2075 = vmatpush1.msra.mxu0 0.0
  %2076 = vmatprep.subr.mxu0 0.0
  %2077 = vmatpush1.msra.mxu0 0.0
  %2078 = vmatprep.subr.mxu0 0.0
  %2079 = vmatpush1.msra.mxu0 0.0
  %2080 = vmatprep.subr.mxu0 0.0
  %2081 = vmatpush1.msra.mxu0 0.0
  %2082 = vmatprep.subr.mxu0 0.0
  %2083 = vmatpush1.msra.mxu0 0.0
  %2084 = vmatprep.subr.mxu0 0.0
  %2085 = vmatpush1.msra.mxu0 0.0
  %2086 = vmatprep.subr.mxu0 0.0
  %2087 = vmatpush1.msra.mxu0 0.0
  %2088 = vmatprep.subr.mxu0 0.0
  %2089 = vmatpush1.msra.mxu0 0.0
  %2090 = vmatprep.subr.mxu0 0.0
  %2091 = vmatpush1.msra.mxu0 0.0
  %2092 = vmatprep.subr.mxu0 0.0
  %2093 = vmatpush1.msra.mxu0 0.0
  %2094 = vmatprep.subr.mxu0 0.0
  %2095 = vmatpush1.msra.mxu0 0.0
  %2096 = vmatprep.subr.mxu0 0.0
  %2097 = vmatpush1.msra.mxu0 0.0
  %2098 = vmatprep.subr.mxu0 0.0
  %2099 = vmatpush1.msra.mxu0 0.0
  %2100 = vmatprep.mubr.f32.mxu0 0.0
  %2101 = vmatmul.mubr.f32.gmra.mrb[0].mxu0 %v2034
  %v2102 = vpop.f32.mrb[0].mxu0
  %v2103 = vadd.f32 0.0, %v2102
  %v2104 = vpop.f32.mrb[0].mxu0
  %2105 = vdwg.mxu0
  %v2106 = vadd.f32 %v2033, %v2103
  %v2107 = vxor.u32 %v2106, 2147483648
  %v2108 = vmul.f32 %v2107, 1.442695
  %v2109 = vpow.pop %v2108
  %v2110 = vadd.f32 %v2109, 1.0
  %v2111 = vrcp.pop %v2110
  %v2112 = vmul.f32 1.0, %v2111
  %v2113 = vtanh.pop %v2106
  %v2114 = vmul.f32 %v2112, %v1918
  %2116 = vrot.lane.b32.xlu0 %v2113, 64
  %v2117 = vpop.permute.xlu0 %2116
  %v2119 = vmul.f32 %v2112, %v2117
  %2121 = vrot.lane.b32.xlu0 %v2119, 32
  %v2122 = vpop.permute.xlu0 %2121
  %v2124 = vadd.f32 %v2114, %v2122
  %v2125 = vtanh.pop %v2124
  %2127 = vrot.lane.b32.xlu0 %v2125, 64
  %v2128 = vpop.permute.xlu0 %2127
  %v2130 = vmul.f32 %v2112, %v2128
  %2132 = vrot.lane.b32.xlu0 %v2130, 32
  %v2133 = vpop.permute.xlu0 %2132
  %2135 = vst.msk [vmem:[#allocation6 + $0x18] sm:$0xff] %vm35, %v2133
  %v2136 = vld [vmem:[#allocation2 + $0x20] sm:$0xff]
  %v2137 = vsel %vm35, %v2030, 0
  %2139 = vmatprep.subr.mxu0 0.0
  %2140 = vmatpush1.msra.mxu0 %v1010
  %2141 = vmatprep.subr.mxu0 0.0
  %2142 = vmatpush1.msra.mxu0 %v1011
  %2143 = vmatprep.subr.mxu0 0.0
  %2144 = vmatpush1.msra.mxu0 %v1012
  %2145 = vmatprep.subr.mxu0 0.0
  %2146 = vmatpush1.msra.mxu0 %v1013
  %2147 = vmatprep.subr.mxu0 0.0
  %2148 = vmatpush1.msra.mxu0 0.0
  %2149 = vmatprep.subr.mxu0 0.0
  %2150 = vmatpush1.msra.mxu0 0.0
  %2151 = vmatprep.subr.mxu0 0.0
  %2152 = vmatpush1.msra.mxu0 0.0
  %2153 = vmatprep.subr.mxu0 0.0
  %2154 = vmatpush1.msra.mxu0 0.0
  %2155 = vmatprep.subr.mxu0 0.0
  %2156 = vmatpush1.msra.mxu0 0.0
  %2157 = vmatprep.subr.mxu0 0.0
  %2158 = vmatpush1.msra.mxu0 0.0
  %2159 = vmatprep.subr.mxu0 0.0
  %2160 = vmatpush1.msra.mxu0 0.0
  %2161 = vmatprep.subr.mxu0 0.0
  %2162 = vmatpush1.msra.mxu0 0.0
  %2163 = vmatprep.subr.mxu0 0.0
  %2164 = vmatpush1.msra.mxu0 0.0
  %2165 = vmatprep.subr.mxu0 0.0
  %2166 = vmatpush1.msra.mxu0 0.0
  %2167 = vmatprep.subr.mxu0 0.0
  %2168 = vmatpush1.msra.mxu0 0.0
  %2169 = vmatprep.subr.mxu0 0.0
  %2170 = vmatpush1.msra.mxu0 0.0
  %2171 = vmatprep.subr.mxu0 0.0
  %2172 = vmatpush1.msra.mxu0 0.0
  %2173 = vmatprep.subr.mxu0 0.0
  %2174 = vmatpush1.msra.mxu0 0.0
  %2175 = vmatprep.subr.mxu0 0.0
  %2176 = vmatpush1.msra.mxu0 0.0
  %2177 = vmatprep.subr.mxu0 0.0
  %2178 = vmatpush1.msra.mxu0 0.0
  %2179 = vmatprep.subr.mxu0 0.0
  %2180 = vmatpush1.msra.mxu0 0.0
  %2181 = vmatprep.subr.mxu0 0.0
  %2182 = vmatpush1.msra.mxu0 0.0
  %2183 = vmatprep.subr.mxu0 0.0
  %2184 = vmatpush1.msra.mxu0 0.0
  %2185 = vmatprep.subr.mxu0 0.0
  %2186 = vmatpush1.msra.mxu0 0.0
  %2187 = vmatprep.subr.mxu0 0.0
  %2188 = vmatpush1.msra.mxu0 0.0
  %2189 = vmatprep.subr.mxu0 0.0
  %2190 = vmatpush1.msra.mxu0 0.0
  %2191 = vmatprep.subr.mxu0 0.0
  %2192 = vmatpush1.msra.mxu0 0.0
  %2193 = vmatprep.subr.mxu0 0.0
  %2194 = vmatpush1.msra.mxu0 0.0
  %2195 = vmatprep.subr.mxu0 0.0
  %2196 = vmatpush1.msra.mxu0 0.0
  %2197 = vmatprep.subr.mxu0 0.0
  %2198 = vmatpush1.msra.mxu0 0.0
  %2199 = vmatprep.subr.mxu0 0.0
  %2200 = vmatpush1.msra.mxu0 0.0
  %2201 = vmatprep.subr.mxu0 0.0
  %2202 = vmatpush1.msra.mxu0 0.0
  %2203 = vmatprep.mubr.f32.mxu0 0.0
  %2204 = vmatmul.mubr.f32.gmra.mrb[0].mxu0 %v2137
  %v2205 = vpop.f32.mrb[0].mxu0
  %v2206 = vadd.f32 0.0, %v2205
  %v2207 = vpop.f32.mrb[0].mxu0
  %2208 = vdwg.mxu0
  %v2209 = vadd.f32 %v2136, %v2206
  %v2210 = vxor.u32 %v2209, 2147483648
  %v2211 = vmul.f32 %v2210, 1.442695
  %v2212 = vpow.pop %v2211
  %v2213 = vadd.f32 %v2212, 1.0
  %v2214 = vrcp.pop %v2213
  %v2215 = vmul.f32 1.0, %v2214
  %v2216 = vtanh.pop %v2209
  %v2217 = vmul.f32 %v2215, %v2021
  %2219 = vrot.lane.b32.xlu0 %v2216, 64
  %v2220 = vpop.permute.xlu0 %2219
  %v2222 = vmul.f32 %v2215, %v2220
  %2224 = vrot.lane.b32.xlu0 %v2222, 32
  %v2225 = vpop.permute.xlu0 %2224
  %v2227 = vadd.f32 %v2217, %v2225
  %v2228 = vtanh.pop %v2227
  %2230 = vrot.lane.b32.xlu0 %v2228, 64
  %v2231 = vpop.permute.xlu0 %2230
  %v2233 = vmul.f32 %v2215, %v2231
  %2235 = vrot.lane.b32.xlu0 %v2233, 32
  %v2236 = vpop.permute.xlu0 %2235
  %2238 = vst.msk [vmem:[#allocation5 + $0x20] sm:$0xff] %vm35, %v2236
  %v2239 = vld [vmem:[#allocation3 + $0x20] sm:$0xff]
  %v2240 = vsel %vm35, %v2133, 0
  %2242 = vmatprep.subr.mxu0 0.0
  %2243 = vmatpush1.msra.mxu0 %v1168
  %2244 = vmatprep.subr.mxu0 0.0
  %2245 = vmatpush1.msra.mxu0 %v1169
  %2246 = vmatprep.subr.mxu0 0.0
  %2247 = vmatpush1.msra.mxu0 %v1170
  %2248 = vmatprep.subr.mxu0 0.0
  %2249 = vmatpush1.msra.mxu0 %v1171
  %2250 = vmatprep.subr.mxu0 0.0
  %2251 = vmatpush1.msra.mxu0 0.0
  %2252 = vmatprep.subr.mxu0 0.0
  %2253 = vmatpush1.msra.mxu0 0.0
  %2254 = vmatprep.subr.mxu0 0.0
  %2255 = vmatpush1.msra.mxu0 0.0
  %2256 = vmatprep.subr.mxu0 0.0
  %2257 = vmatpush1.msra.mxu0 0.0
  %2258 = vmatprep.subr.mxu0 0.0
  %2259 = vmatpush1.msra.mxu0 0.0
  %2260 = vmatprep.subr.mxu0 0.0
  %2261 = vmatpush1.msra.mxu0 0.0
  %2262 = vmatprep.subr.mxu0 0.0
  %2263 = vmatpush1.msra.mxu0 0.0
  %2264 = vmatprep.subr.mxu0 0.0
  %2265 = vmatpush1.msra.mxu0 0.0
  %2266 = vmatprep.subr.mxu0 0.0
  %2267 = vmatpush1.msra.mxu0 0.0
  %2268 = vmatprep.subr.mxu0 0.0
  %2269 = vmatpush1.msra.mxu0 0.0
  %2270 = vmatprep.subr.mxu0 0.0
  %2271 = vmatpush1.msra.mxu0 0.0
  %2272 = vmatprep.subr.mxu0 0.0
  %2273 = vmatpush1.msra.mxu0 0.0
  %2274 = vmatprep.subr.mxu0 0.0
  %2275 = vmatpush1.msra.mxu0 0.0
  %2276 = vmatprep.subr.mxu0 0.0
  %2277 = vmatpush1.msra.mxu0 0.0
  %2278 = vmatprep.subr.mxu0 0.0
  %2279 = vmatpush1.msra.mxu0 0.0
  %2280 = vmatprep.subr.mxu0 0.0
  %2281 = vmatpush1.msra.mxu0 0.0
  %2282 = vmatprep.subr.mxu0 0.0
  %2283 = vmatpush1.msra.mxu0 0.0
  %2284 = vmatprep.subr.mxu0 0.0
  %2285 = vmatpush1.msra.mxu0 0.0
  %2286 = vmatprep.subr.mxu0 0.0
  %2287 = vmatpush1.msra.mxu0 0.0
  %2288 = vmatprep.subr.mxu0 0.0
  %2289 = vmatpush1.msra.mxu0 0.0
  %2290 = vmatprep.subr.mxu0 0.0
  %2291 = vmatpush1.msra.mxu0 0.0
  %2292 = vmatprep.subr.mxu0 0.0
  %2293 = vmatpush1.msra.mxu0 0.0
  %2294 = vmatprep.subr.mxu0 0.0
  %2295 = vmatpush1.msra.mxu0 0.0
  %2296 = vmatprep.subr.mxu0 0.0
  %2297 = vmatpush1.msra.mxu0 0.0
  %2298 = vmatprep.subr.mxu0 0.0
  %2299 = vmatpush1.msra.mxu0 0.0
  %2300 = vmatprep.subr.mxu0 0.0
  %2301 = vmatpush1.msra.mxu0 0.0
  %2302 = vmatprep.subr.mxu0 0.0
  %2303 = vmatpush1.msra.mxu0 0.0
  %2304 = vmatprep.subr.mxu0 0.0
  %2305 = vmatpush1.msra.mxu0 0.0
  %2306 = vmatprep.mubr.f32.mxu0 0.0
  %2307 = vmatmul.mubr.f32.gmra.mrb[0].mxu0 %v2240
  %v2308 = vpop.f32.mrb[0].mxu0
  %v2309 = vadd.f32 0.0, %v2308
  %v2310 = vpop.f32.mrb[0].mxu0
  %2311 = vdwg.mxu0
  %v2312 = vadd.f32 %v2239, %v2309
  %v2313 = vxor.u32 %v2312, 2147483648
  %v2314 = vmul.f32 %v2313, 1.442695
  %v2315 = vpow.pop %v2314
  %v2316 = vadd.f32 %v2315, 1.0
  %v2317 = vrcp.pop %v2316
  %v2318 = vmul.f32 1.0, %v2317
  %v2319 = vtanh.pop %v2312
  %v2320 = vmul.f32 %v2318, %v2124
  %2322 = vrot.lane.b32.xlu0 %v2319, 64
  %v2323 = vpop.permute.xlu0 %2322
  %v2325 = vmul.f32 %v2318, %v2323
  %2327 = vrot.lane.b32.xlu0 %v2325, 32
  %v2328 = vpop.permute.xlu0 %2327
  %v2330 = vadd.f32 %v2320, %v2328
  %v2331 = vtanh.pop %v2330
  %2333 = vrot.lane.b32.xlu0 %v2331, 64
  %v2334 = vpop.permute.xlu0 %2333
  %v2336 = vmul.f32 %v2318, %v2334
  %2338 = vrot.lane.b32.xlu0 %v2336, 32
  %v2339 = vpop.permute.xlu0 %2338
  %2341 = vst.msk [vmem:[#allocation6 + $0x20] sm:$0xff] %vm35, %v2339
  %v2342 = vld [vmem:[#allocation2 + $0x28] sm:$0xff]
  %v2343 = vsel %vm35, %v2236, 0
  %2345 = vmatprep.subr.mxu0 0.0
  %2346 = vmatpush1.msra.mxu0 %v1010
  %2347 = vmatprep.subr.mxu0 0.0
  %2348 = vmatpush1.msra.mxu0 %v1011
  %2349 = vmatprep.subr.mxu0 0.0
  %2350 = vmatpush1.msra.mxu0 %v1012
  %2351 = vmatprep.subr.mxu0 0.0
  %2352 = vmatpush1.msra.mxu0 %v1013
  %2353 = vmatprep.subr.mxu0 0.0
  %2354 = vmatpush1.msra.mxu0 0.0
  %2355 = vmatprep.subr.mxu0 0.0
  %2356 = vmatpush1.msra.mxu0 0.0
  %2357 = vmatprep.subr.mxu0 0.0
  %2358 = vmatpush1.msra.mxu0 0.0
  %2359 = vmatprep.subr.mxu0 0.0
  %2360 = vmatpush1.msra.mxu0 0.0
  %2361 = vmatprep.subr.mxu0 0.0
  %2362 = vmatpush1.msra.mxu0 0.0
  %2363 = vmatprep.subr.mxu0 0.0
  %2364 = vmatpush1.msra.mxu0 0.0
  %2365 = vmatprep.subr.mxu0 0.0
  %2366 = vmatpush1.msra.mxu0 0.0
  %2367 = vmatprep.subr.mxu0 0.0
  %2368 = vmatpush1.msra.mxu0 0.0
  %2369 = vmatprep.subr.mxu0 0.0
  %2370 = vmatpush1.msra.mxu0 0.0
  %2371 = vmatprep.subr.mxu0 0.0
  %2372 = vmatpush1.msra.mxu0 0.0
  %2373 = vmatprep.subr.mxu0 0.0
  %2374 = vmatpush1.msra.mxu0 0.0
  %2375 = vmatprep.subr.mxu0 0.0
  %2376 = vmatpush1.msra.mxu0 0.0
  %2377 = vmatprep.subr.mxu0 0.0
  %2378 = vmatpush1.msra.mxu0 0.0
  %2379 = vmatprep.subr.mxu0 0.0
  %2380 = vmatpush1.msra.mxu0 0.0
  %2381 = vmatprep.subr.mxu0 0.0
  %2382 = vmatpush1.msra.mxu0 0.0
  %2383 = vmatprep.subr.mxu0 0.0
  %2384 = vmatpush1.msra.mxu0 0.0
  %2385 = vmatprep.subr.mxu0 0.0
  %2386 = vmatpush1.msra.mxu0 0.0
  %2387 = vmatprep.subr.mxu0 0.0
  %2388 = vmatpush1.msra.mxu0 0.0
  %2389 = vmatprep.subr.mxu0 0.0
  %2390 = vmatpush1.msra.mxu0 0.0
  %2391 = vmatprep.subr.mxu0 0.0
  %2392 = vmatpush1.msra.mxu0 0.0
  %2393 = vmatprep.subr.mxu0 0.0
  %2394 = vmatpush1.msra.mxu0 0.0
  %2395 = vmatprep.subr.mxu0 0.0
  %2396 = vmatpush1.msra.mxu0 0.0
  %2397 = vmatprep.subr.mxu0 0.0
  %2398 = vmatpush1.msra.mxu0 0.0
  %2399 = vmatprep.subr.mxu0 0.0
  %2400 = vmatpush1.msra.mxu0 0.0
  %2401 = vmatprep.subr.mxu0 0.0
  %2402 = vmatpush1.msra.mxu0 0.0
  %2403 = vmatprep.subr.mxu0 0.0
  %2404 = vmatpush1.msra.mxu0 0.0
  %2405 = vmatprep.subr.mxu0 0.0
  %2406 = vmatpush1.msra.mxu0 0.0
  %2407 = vmatprep.subr.mxu0 0.0
  %2408 = vmatpush1.msra.mxu0 0.0
  %2409 = vmatprep.mubr.f32.mxu0 0.0
  %2410 = vmatmul.mubr.f32.gmra.mrb[0].mxu0 %v2343
  %v2411 = vpop.f32.mrb[0].mxu0
  %v2412 = vadd.f32 0.0, %v2411
  %v2413 = vpop.f32.mrb[0].mxu0
  %2414 = vdwg.mxu0
  %v2415 = vadd.f32 %v2342, %v2412
  %v2416 = vxor.u32 %v2415, 2147483648
  %v2417 = vmul.f32 %v2416, 1.442695
  %v2418 = vpow.pop %v2417
  %v2419 = vadd.f32 %v2418, 1.0
  %v2420 = vrcp.pop %v2419
  %v2421 = vmul.f32 1.0, %v2420
  %v2422 = vtanh.pop %v2415
  %v2423 = vmul.f32 %v2421, %v2227
  %2425 = vrot.lane.b32.xlu0 %v2422, 64
  %v2426 = vpop.permute.xlu0 %2425
  %v2428 = vmul.f32 %v2421, %v2426
  %2430 = vrot.lane.b32.xlu0 %v2428, 32
  %v2431 = vpop.permute.xlu0 %2430
  %v2433 = vadd.f32 %v2423, %v2431
  %v2434 = vtanh.pop %v2433
  %2436 = vrot.lane.b32.xlu0 %v2434, 64
  %v2437 = vpop.permute.xlu0 %2436
  %v2439 = vmul.f32 %v2421, %v2437
  %2441 = vrot.lane.b32.xlu0 %v2439, 32
  %v2442 = vpop.permute.xlu0 %2441
  %2444 = vst.msk [vmem:[#allocation5 + $0x28] sm:$0xff] %vm35, %v2442
  %v2445 = vld [vmem:[#allocation3 + $0x28] sm:$0xff]
  %v2446 = vsel %vm35, %v2339, 0
  %2448 = vmatprep.subr.mxu0 0.0
  %2449 = vmatpush1.msra.mxu0 %v1168
  %2450 = vmatprep.subr.mxu0 0.0
  %2451 = vmatpush1.msra.mxu0 %v1169
  %2452 = vmatprep.subr.mxu0 0.0
  %2453 = vmatpush1.msra.mxu0 %v1170
  %2454 = vmatprep.subr.mxu0 0.0
  %2455 = vmatpush1.msra.mxu0 %v1171
  %2456 = vmatprep.subr.mxu0 0.0
  %2457 = vmatpush1.msra.mxu0 0.0
  %2458 = vmatprep.subr.mxu0 0.0
  %2459 = vmatpush1.msra.mxu0 0.0
  %2460 = vmatprep.subr.mxu0 0.0
  %2461 = vmatpush1.msra.mxu0 0.0
  %2462 = vmatprep.subr.mxu0 0.0
  %2463 = vmatpush1.msra.mxu0 0.0
  %2464 = vmatprep.subr.mxu0 0.0
  %2465 = vmatpush1.msra.mxu0 0.0
  %2466 = vmatprep.subr.mxu0 0.0
  %2467 = vmatpush1.msra.mxu0 0.0
  %2468 = vmatprep.subr.mxu0 0.0
  %2469 = vmatpush1.msra.mxu0 0.0
  %2470 = vmatprep.subr.mxu0 0.0
  %2471 = vmatpush1.msra.mxu0 0.0
  %2472 = vmatprep.subr.mxu0 0.0
  %2473 = vmatpush1.msra.mxu0 0.0
  %2474 = vmatprep.subr.mxu0 0.0
  %2475 = vmatpush1.msra.mxu0 0.0
  %2476 = vmatprep.subr.mxu0 0.0
  %2477 = vmatpush1.msra.mxu0 0.0
  %2478 = vmatprep.subr.mxu0 0.0
  %2479 = vmatpush1.msra.mxu0 0.0
  %2480 = vmatprep.subr.mxu0 0.0
  %2481 = vmatpush1.msra.mxu0 0.0
  %2482 = vmatprep.subr.mxu0 0.0
  %2483 = vmatpush1.msra.mxu0 0.0
  %2484 = vmatprep.subr.mxu0 0.0
  %2485 = vmatpush1.msra.mxu0 0.0
  %2486 = vmatprep.subr.mxu0 0.0
  %2487 = vmatpush1.msra.mxu0 0.0
  %2488 = vmatprep.subr.mxu0 0.0
  %2489 = vmatpush1.msra.mxu0 0.0
  %2490 = vmatprep.subr.mxu0 0.0
  %2491 = vmatpush1.msra.mxu0 0.0
  %2492 = vmatprep.subr.mxu0 0.0
  %2493 = vmatpush1.msra.mxu0 0.0
  %2494 = vmatprep.subr.mxu0 0.0
  %2495 = vmatpush1.msra.mxu0 0.0
  %2496 = vmatprep.subr.mxu0 0.0
  %2497 = vmatpush1.msra.mxu0 0.0
  %2498 = vmatprep.subr.mxu0 0.0
  %2499 = vmatpush1.msra.mxu0 0.0
  %2500 = vmatprep.subr.mxu0 0.0
  %2501 = vmatpush1.msra.mxu0 0.0
  %2502 = vmatprep.subr.mxu0 0.0
  %2503 = vmatpush1.msra.mxu0 0.0
  %2504 = vmatprep.subr.mxu0 0.0
  %2505 = vmatpush1.msra.mxu0 0.0
  %2506 = vmatprep.subr.mxu0 0.0
  %2507 = vmatpush1.msra.mxu0 0.0
  %2508 = vmatprep.subr.mxu0 0.0
  %2509 = vmatpush1.msra.mxu0 0.0
  %2510 = vmatprep.subr.mxu0 0.0
  %2511 = vmatpush1.msra.mxu0 0.0
  %2512 = vmatprep.mubr.f32.mxu0 0.0
  %2513 = vmatmul.mubr.f32.gmra.mrb[0].mxu0 %v2446
  %v2514 = vpop.f32.mrb[0].mxu0
  %v2515 = vadd.f32 0.0, %v2514
  %v2516 = vpop.f32.mrb[0].mxu0
  %2517 = vdwg.mxu0
  %v2518 = vadd.f32 %v2445, %v2515
  %v2519 = vxor.u32 %v2518, 2147483648
  %v2520 = vmul.f32 %v2519, 1.442695
  %v2521 = vpow.pop %v2520
  %v2522 = vadd.f32 %v2521, 1.0
  %v2523 = vrcp.pop %v2522
  %v2524 = vmul.f32 1.0, %v2523
  %v2525 = vtanh.pop %v2518
  %v2526 = vmul.f32 %v2524, %v2330
  %2528 = vrot.lane.b32.xlu0 %v2525, 64
  %v2529 = vpop.permute.xlu0 %2528
  %v2531 = vmul.f32 %v2524, %v2529
  %2533 = vrot.lane.b32.xlu0 %v2531, 32
  %v2534 = vpop.permute.xlu0 %2533
  %v2536 = vadd.f32 %v2526, %v2534
  %v2537 = vtanh.pop %v2536
  %2539 = vrot.lane.b32.xlu0 %v2537, 64
  %v2540 = vpop.permute.xlu0 %2539
  %v2542 = vmul.f32 %v2524, %v2540
  %2544 = vrot.lane.b32.xlu0 %v2542, 32
  %v2545 = vpop.permute.xlu0 %2544
  %2547 = vst.msk [vmem:[#allocation6 + $0x28] sm:$0xff] %vm35, %v2545
  %v2548 = vld [vmem:[#allocation2 + $0x30] sm:$0xff]
  %v2549 = vsel %vm35, %v2442, 0
  %2551 = vmatprep.subr.mxu0 0.0
  %2552 = vmatpush1.msra.mxu0 %v1010
  %2553 = vmatprep.subr.mxu0 0.0
  %2554 = vmatpush1.msra.mxu0 %v1011
  %2555 = vmatprep.subr.mxu0 0.0
  %2556 = vmatpush1.msra.mxu0 %v1012
  %2557 = vmatprep.subr.mxu0 0.0
  %2558 = vmatpush1.msra.mxu0 %v1013
  %2559 = vmatprep.subr.mxu0 0.0
  %2560 = vmatpush1.msra.mxu0 0.0
  %2561 = vmatprep.subr.mxu0 0.0
  %2562 = vmatpush1.msra.mxu0 0.0
  %2563 = vmatprep.subr.mxu0 0.0
  %2564 = vmatpush1.msra.mxu0 0.0
  %2565 = vmatprep.subr.mxu0 0.0
  %2566 = vmatpush1.msra.mxu0 0.0
  %2567 = vmatprep.subr.mxu0 0.0
  %2568 = vmatpush1.msra.mxu0 0.0
  %2569 = vmatprep.subr.mxu0 0.0
  %2570 = vmatpush1.msra.mxu0 0.0
  %2571 = vmatprep.subr.mxu0 0.0
  %2572 = vmatpush1.msra.mxu0 0.0
  %2573 = vmatprep.subr.mxu0 0.0
  %2574 = vmatpush1.msra.mxu0 0.0
  %2575 = vmatprep.subr.mxu0 0.0
  %2576 = vmatpush1.msra.mxu0 0.0
  %2577 = vmatprep.subr.mxu0 0.0
  %2578 = vmatpush1.msra.mxu0 0.0
  %2579 = vmatprep.subr.mxu0 0.0
  %2580 = vmatpush1.msra.mxu0 0.0
  %2581 = vmatprep.subr.mxu0 0.0
  %2582 = vmatpush1.msra.mxu0 0.0
  %2583 = vmatprep.subr.mxu0 0.0
  %2584 = vmatpush1.msra.mxu0 0.0
  %2585 = vmatprep.subr.mxu0 0.0
  %2586 = vmatpush1.msra.mxu0 0.0
  %2587 = vmatprep.subr.mxu0 0.0
  %2588 = vmatpush1.msra.mxu0 0.0
  %2589 = vmatprep.subr.mxu0 0.0
  %2590 = vmatpush1.msra.mxu0 0.0
  %2591 = vmatprep.subr.mxu0 0.0
  %2592 = vmatpush1.msra.mxu0 0.0
  %2593 = vmatprep.subr.mxu0 0.0
  %2594 = vmatpush1.msra.mxu0 0.0
  %2595 = vmatprep.subr.mxu0 0.0
  %2596 = vmatpush1.msra.mxu0 0.0
  %2597 = vmatprep.subr.mxu0 0.0
  %2598 = vmatpush1.msra.mxu0 0.0
  %2599 = vmatprep.subr.mxu0 0.0
  %2600 = vmatpush1.msra.mxu0 0.0
  %2601 = vmatprep.subr.mxu0 0.0
  %2602 = vmatpush1.msra.mxu0 0.0
  %2603 = vmatprep.subr.mxu0 0.0
  %2604 = vmatpush1.msra.mxu0 0.0
  %2605 = vmatprep.subr.mxu0 0.0
  %2606 = vmatpush1.msra.mxu0 0.0
  %2607 = vmatprep.subr.mxu0 0.0
  %2608 = vmatpush1.msra.mxu0 0.0
  %2609 = vmatprep.subr.mxu0 0.0
  %2610 = vmatpush1.msra.mxu0 0.0
  %2611 = vmatprep.subr.mxu0 0.0
  %2612 = vmatpush1.msra.mxu0 0.0
  %2613 = vmatprep.subr.mxu0 0.0
  %2614 = vmatpush1.msra.mxu0 0.0
  %2615 = vmatprep.mubr.f32.mxu0 0.0
  %2616 = vmatmul.mubr.f32.gmra.mrb[0].mxu0 %v2549
  %v2617 = vpop.f32.mrb[0].mxu0
  %v2618 = vadd.f32 0.0, %v2617
  %v2619 = vpop.f32.mrb[0].mxu0
  %2620 = vdwg.mxu0
  %v2621 = vadd.f32 %v2548, %v2618
  %v2622 = vxor.u32 %v2621, 2147483648
  %v2623 = vmul.f32 %v2622, 1.442695
  %v2624 = vpow.pop %v2623
  %v2625 = vadd.f32 %v2624, 1.0
  %v2626 = vrcp.pop %v2625
  %v2627 = vmul.f32 1.0, %v2626
  %v2628 = vtanh.pop %v2621
  %v2629 = vmul.f32 %v2627, %v2433
  %2631 = vrot.lane.b32.xlu0 %v2628, 64
  %v2632 = vpop.permute.xlu0 %2631
  %v2634 = vmul.f32 %v2627, %v2632
  %2636 = vrot.lane.b32.xlu0 %v2634, 32
  %v2637 = vpop.permute.xlu0 %2636
  %v2639 = vadd.f32 %v2629, %v2637
  %v2640 = vtanh.pop %v2639
  %2642 = vrot.lane.b32.xlu0 %v2640, 64
  %v2643 = vpop.permute.xlu0 %2642
  %v2645 = vmul.f32 %v2627, %v2643
  %2647 = vrot.lane.b32.xlu0 %v2645, 32
  %v2648 = vpop.permute.xlu0 %2647
  %2650 = vst.msk [vmem:[#allocation5 + $0x30] sm:$0xff] %vm35, %v2648
  %v2651 = vld [vmem:[#allocation3 + $0x30] sm:$0xff]
  %v2652 = vsel %vm35, %v2545, 0
  %2654 = vmatprep.subr.mxu0 0.0
  %2655 = vmatpush1.msra.mxu0 %v1168
  %2656 = vmatprep.subr.mxu0 0.0
  %2657 = vmatpush1.msra.mxu0 %v1169
  %2658 = vmatprep.subr.mxu0 0.0
  %2659 = vmatpush1.msra.mxu0 %v1170
  %2660 = vmatprep.subr.mxu0 0.0
  %2661 = vmatpush1.msra.mxu0 %v1171
  %2662 = vmatprep.subr.mxu0 0.0
  %2663 = vmatpush1.msra.mxu0 0.0
  %2664 = vmatprep.subr.mxu0 0.0
  %2665 = vmatpush1.msra.mxu0 0.0
  %2666 = vmatprep.subr.mxu0 0.0
  %2667 = vmatpush1.msra.mxu0 0.0
  %2668 = vmatprep.subr.mxu0 0.0
  %2669 = vmatpush1.msra.mxu0 0.0
  %2670 = vmatprep.subr.mxu0 0.0
  %2671 = vmatpush1.msra.mxu0 0.0
  %2672 = vmatprep.subr.mxu0 0.0
  %2673 = vmatpush1.msra.mxu0 0.0
  %2674 = vmatprep.subr.mxu0 0.0
  %2675 = vmatpush1.msra.mxu0 0.0
  %2676 = vmatprep.subr.mxu0 0.0
  %2677 = vmatpush1.msra.mxu0 0.0
  %2678 = vmatprep.subr.mxu0 0.0
  %2679 = vmatpush1.msra.mxu0 0.0
  %2680 = vmatprep.subr.mxu0 0.0
  %2681 = vmatpush1.msra.mxu0 0.0
  %2682 = vmatprep.subr.mxu0 0.0
  %2683 = vmatpush1.msra.mxu0 0.0
  %2684 = vmatprep.subr.mxu0 0.0
  %2685 = vmatpush1.msra.mxu0 0.0
  %2686 = vmatprep.subr.mxu0 0.0
  %2687 = vmatpush1.msra.mxu0 0.0
  %2688 = vmatprep.subr.mxu0 0.0
  %2689 = vmatpush1.msra.mxu0 0.0
  %2690 = vmatprep.subr.mxu0 0.0
  %2691 = vmatpush1.msra.mxu0 0.0
  %2692 = vmatprep.subr.mxu0 0.0
  %2693 = vmatpush1.msra.mxu0 0.0
  %2694 = vmatprep.subr.mxu0 0.0
  %2695 = vmatpush1.msra.mxu0 0.0
  %2696 = vmatprep.subr.mxu0 0.0
  %2697 = vmatpush1.msra.mxu0 0.0
  %2698 = vmatprep.subr.mxu0 0.0
  %2699 = vmatpush1.msra.mxu0 0.0
  %2700 = vmatprep.subr.mxu0 0.0
  %2701 = vmatpush1.msra.mxu0 0.0
  %2702 = vmatprep.subr.mxu0 0.0
  %2703 = vmatpush1.msra.mxu0 0.0
  %2704 = vmatprep.subr.mxu0 0.0
  %2705 = vmatpush1.msra.mxu0 0.0
  %2706 = vmatprep.subr.mxu0 0.0
  %2707 = vmatpush1.msra.mxu0 0.0
  %2708 = vmatprep.subr.mxu0 0.0
  %2709 = vmatpush1.msra.mxu0 0.0
  %2710 = vmatprep.subr.mxu0 0.0
  %2711 = vmatpush1.msra.mxu0 0.0
  %2712 = vmatprep.subr.mxu0 0.0
  %2713 = vmatpush1.msra.mxu0 0.0
  %2714 = vmatprep.subr.mxu0 0.0
  %2715 = vmatpush1.msra.mxu0 0.0
  %2716 = vmatprep.subr.mxu0 0.0
  %2717 = vmatpush1.msra.mxu0 0.0
  %2718 = vmatprep.mubr.f32.mxu0 0.0
  %2719 = vmatmul.mubr.f32.gmra.mrb[0].mxu0 %v2652
  %v2720 = vpop.f32.mrb[0].mxu0
  %v2721 = vadd.f32 0.0, %v2720
  %v2722 = vpop.f32.mrb[0].mxu0
  %2723 = vdwg.mxu0
  %v2724 = vadd.f32 %v2651, %v2721
  %v2725 = vxor.u32 %v2724, 2147483648
  %v2726 = vmul.f32 %v2725, 1.442695
  %v2727 = vpow.pop %v2726
  %v2728 = vadd.f32 %v2727, 1.0
  %v2729 = vrcp.pop %v2728
  %v2730 = vmul.f32 1.0, %v2729
  %v2731 = vtanh.pop %v2724
  %v2732 = vmul.f32 %v2730, %v2536
  %2734 = vrot.lane.b32.xlu0 %v2731, 64
  %v2735 = vpop.permute.xlu0 %2734
  %v2737 = vmul.f32 %v2730, %v2735
  %2739 = vrot.lane.b32.xlu0 %v2737, 32
  %v2740 = vpop.permute.xlu0 %2739
  %v2742 = vadd.f32 %v2732, %v2740
  %v2743 = vtanh.pop %v2742
  %2745 = vrot.lane.b32.xlu0 %v2743, 64
  %v2746 = vpop.permute.xlu0 %2745
  %v2748 = vmul.f32 %v2730, %v2746
  %2750 = vrot.lane.b32.xlu0 %v2748, 32
  %v2751 = vpop.permute.xlu0 %2750
  %2753 = vst.msk [vmem:[#allocation6 + $0x30] sm:$0xff] %vm35, %v2751
  %v2754 = vld [vmem:[#allocation2 + $0x38] sm:$0xff]
  %v2755 = vsel %vm35, %v2648, 0
  %2757 = vmatprep.subr.mxu0 0.0
  %2758 = vmatpush1.msra.mxu0 %v1010
  %2759 = vmatprep.subr.mxu0 0.0
  %2760 = vmatpush1.msra.mxu0 %v1011
  %2761 = vmatprep.subr.mxu0 0.0
  %2762 = vmatpush1.msra.mxu0 %v1012
  %2763 = vmatprep.subr.mxu0 0.0
  %2764 = vmatpush1.msra.mxu0 %v1013
  %2765 = vmatprep.subr.mxu0 0.0
  %2766 = vmatpush1.msra.mxu0 0.0
  %2767 = vmatprep.subr.mxu0 0.0
  %2768 = vmatpush1.msra.mxu0 0.0
  %2769 = vmatprep.subr.mxu0 0.0
  %2770 = vmatpush1.msra.mxu0 0.0
  %2771 = vmatprep.subr.mxu0 0.0
  %2772 = vmatpush1.msra.mxu0 0.0
  %2773 = vmatprep.subr.mxu0 0.0
  %2774 = vmatpush1.msra.mxu0 0.0
  %2775 = vmatprep.subr.mxu0 0.0
  %2776 = vmatpush1.msra.mxu0 0.0
  %2777 = vmatprep.subr.mxu0 0.0
  %2778 = vmatpush1.msra.mxu0 0.0
  %2779 = vmatprep.subr.mxu0 0.0
  %2780 = vmatpush1.msra.mxu0 0.0
  %2781 = vmatprep.subr.mxu0 0.0
  %2782 = vmatpush1.msra.mxu0 0.0
  %2783 = vmatprep.subr.mxu0 0.0
  %2784 = vmatpush1.msra.mxu0 0.0
  %2785 = vmatprep.subr.mxu0 0.0
  %2786 = vmatpush1.msra.mxu0 0.0
  %2787 = vmatprep.subr.mxu0 0.0
  %2788 = vmatpush1.msra.mxu0 0.0
  %2789 = vmatprep.subr.mxu0 0.0
  %2790 = vmatpush1.msra.mxu0 0.0
  %2791 = vmatprep.subr.mxu0 0.0
  %2792 = vmatpush1.msra.mxu0 0.0
  %2793 = vmatprep.subr.mxu0 0.0
  %2794 = vmatpush1.msra.mxu0 0.0
  %2795 = vmatprep.subr.mxu0 0.0
  %2796 = vmatpush1.msra.mxu0 0.0
  %2797 = vmatprep.subr.mxu0 0.0
  %2798 = vmatpush1.msra.mxu0 0.0
  %2799 = vmatprep.subr.mxu0 0.0
  %2800 = vmatpush1.msra.mxu0 0.0
  %2801 = vmatprep.subr.mxu0 0.0
  %2802 = vmatpush1.msra.mxu0 0.0
  %2803 = vmatprep.subr.mxu0 0.0
  %2804 = vmatpush1.msra.mxu0 0.0
  %2805 = vmatprep.subr.mxu0 0.0
  %2806 = vmatpush1.msra.mxu0 0.0
  %2807 = vmatprep.subr.mxu0 0.0
  %2808 = vmatpush1.msra.mxu0 0.0
  %2809 = vmatprep.subr.mxu0 0.0
  %2810 = vmatpush1.msra.mxu0 0.0
  %2811 = vmatprep.subr.mxu0 0.0
  %2812 = vmatpush1.msra.mxu0 0.0
  %2813 = vmatprep.subr.mxu0 0.0
  %2814 = vmatpush1.msra.mxu0 0.0
  %2815 = vmatprep.subr.mxu0 0.0
  %2816 = vmatpush1.msra.mxu0 0.0
  %2817 = vmatprep.subr.mxu0 0.0
  %2818 = vmatpush1.msra.mxu0 0.0
  %2819 = vmatprep.subr.mxu0 0.0
  %2820 = vmatpush1.msra.mxu0 0.0
  %2821 = vmatprep.mubr.f32.mxu0 0.0
  %2822 = vmatmul.mubr.f32.gmra.mrb[0].mxu0 %v2755
  %v2823 = vpop.f32.mrb[0].mxu0
  %v2824 = vadd.f32 0.0, %v2823
  %v2825 = vpop.f32.mrb[0].mxu0
  %2826 = vdwg.mxu0
  %v2827 = vadd.f32 %v2754, %v2824
  %v2828 = vxor.u32 %v2827, 2147483648
  %v2829 = vmul.f32 %v2828, 1.442695
  %v2830 = vpow.pop %v2829
  %v2831 = vadd.f32 %v2830, 1.0
  %v2832 = vrcp.pop %v2831
  %v2833 = vmul.f32 1.0, %v2832
  %v2834 = vtanh.pop %v2827
  %v2835 = vmul.f32 %v2833, %v2639
  %2837 = vrot.lane.b32.xlu0 %v2834, 64
  %v2838 = vpop.permute.xlu0 %2837
  %v2840 = vmul.f32 %v2833, %v2838
  %2842 = vrot.lane.b32.xlu0 %v2840, 32
  %v2843 = vpop.permute.xlu0 %2842
  %v2845 = vadd.f32 %v2835, %v2843
  %v2846 = vtanh.pop %v2845
  %2848 = vrot.lane.b32.xlu0 %v2846, 64
  %v2849 = vpop.permute.xlu0 %2848
  %v2851 = vmul.f32 %v2833, %v2849
  %2853 = vrot.lane.b32.xlu0 %v2851, 32
  %v2854 = vpop.permute.xlu0 %2853
  %2856 = vst.msk [vmem:[#allocation5 + $0x38] sm:$0xff] %vm35, %v2854
  %v2857 = vld [vmem:[#allocation3 + $0x38] sm:$0xff]
  %v2858 = vsel %vm35, %v2751, 0
  %2860 = vmatprep.subr.mxu0 0.0
  %2861 = vmatpush1.msra.mxu0 %v1168
  %2862 = vmatprep.subr.mxu0 0.0
  %2863 = vmatpush1.msra.mxu0 %v1169
  %2864 = vmatprep.subr.mxu0 0.0
  %2865 = vmatpush1.msra.mxu0 %v1170
  %2866 = vmatprep.subr.mxu0 0.0
  %2867 = vmatpush1.msra.mxu0 %v1171
  %2868 = vmatprep.subr.mxu0 0.0
  %2869 = vmatpush1.msra.mxu0 0.0
  %2870 = vmatprep.subr.mxu0 0.0
  %2871 = vmatpush1.msra.mxu0 0.0
  %2872 = vmatprep.subr.mxu0 0.0
  %2873 = vmatpush1.msra.mxu0 0.0
  %2874 = vmatprep.subr.mxu0 0.0
  %2875 = vmatpush1.msra.mxu0 0.0
  %2876 = vmatprep.subr.mxu0 0.0
  %2877 = vmatpush1.msra.mxu0 0.0
  %2878 = vmatprep.subr.mxu0 0.0
  %2879 = vmatpush1.msra.mxu0 0.0
  %2880 = vmatprep.subr.mxu0 0.0
  %2881 = vmatpush1.msra.mxu0 0.0
  %2882 = vmatprep.subr.mxu0 0.0
  %2883 = vmatpush1.msra.mxu0 0.0
  %2884 = vmatprep.subr.mxu0 0.0
  %2885 = vmatpush1.msra.mxu0 0.0
  %2886 = vmatprep.subr.mxu0 0.0
  %2887 = vmatpush1.msra.mxu0 0.0
  %2888 = vmatprep.subr.mxu0 0.0
  %2889 = vmatpush1.msra.mxu0 0.0
  %2890 = vmatprep.subr.mxu0 0.0
  %2891 = vmatpush1.msra.mxu0 0.0
  %2892 = vmatprep.subr.mxu0 0.0
  %2893 = vmatpush1.msra.mxu0 0.0
  %2894 = vmatprep.subr.mxu0 0.0
  %2895 = vmatpush1.msra.mxu0 0.0
  %2896 = vmatprep.subr.mxu0 0.0
  %2897 = vmatpush1.msra.mxu0 0.0
  %2898 = vmatprep.subr.mxu0 0.0
  %2899 = vmatpush1.msra.mxu0 0.0
  %2900 = vmatprep.subr.mxu0 0.0
  %2901 = vmatpush1.msra.mxu0 0.0
  %2902 = vmatprep.subr.mxu0 0.0
  %2903 = vmatpush1.msra.mxu0 0.0
  %2904 = vmatprep.subr.mxu0 0.0
  %2905 = vmatpush1.msra.mxu0 0.0
  %2906 = vmatprep.subr.mxu0 0.0
  %2907 = vmatpush1.msra.mxu0 0.0
  %2908 = vmatprep.subr.mxu0 0.0
  %2909 = vmatpush1.msra.mxu0 0.0
  %2910 = vmatprep.subr.mxu0 0.0
  %2911 = vmatpush1.msra.mxu0 0.0
  %2912 = vmatprep.subr.mxu0 0.0
  %2913 = vmatpush1.msra.mxu0 0.0
  %2914 = vmatprep.subr.mxu0 0.0
  %2915 = vmatpush1.msra.mxu0 0.0
  %2916 = vmatprep.subr.mxu0 0.0
  %2917 = vmatpush1.msra.mxu0 0.0
  %2918 = vmatprep.subr.mxu0 0.0
  %2919 = vmatpush1.msra.mxu0 0.0
  %2920 = vmatprep.subr.mxu0 0.0
  %2921 = vmatpush1.msra.mxu0 0.0
  %2922 = vmatprep.subr.mxu0 0.0
  %2923 = vmatpush1.msra.mxu0 0.0
  %2924 = vmatprep.mubr.f32.mxu0 0.0
  %2925 = vmatmul.mubr.f32.gmra.mrb[0].mxu0 %v2858
  %v2926 = vpop.f32.mrb[0].mxu0
  %v2927 = vadd.f32 0.0, %v2926
  %v2928 = vpop.f32.mrb[0].mxu0
  %2929 = vdwg.mxu0
  %v2930 = vadd.f32 %v2857, %v2927
  %v2931 = vxor.u32 %v2930, 2147483648
  %v2932 = vmul.f32 %v2931, 1.442695
  %v2933 = vpow.pop %v2932
  %v2934 = vadd.f32 %v2933, 1.0
  %v2935 = vrcp.pop %v2934
  %v2936 = vmul.f32 1.0, %v2935
  %v2937 = vtanh.pop %v2930
  %v2938 = vmul.f32 %v2936, %v2742
  %2940 = vrot.lane.b32.xlu0 %v2937, 64
  %v2941 = vpop.permute.xlu0 %2940
  %v2943 = vmul.f32 %v2936, %v2941
  %2945 = vrot.lane.b32.xlu0 %v2943, 32
  %v2946 = vpop.permute.xlu0 %2945
  %v2948 = vadd.f32 %v2938, %v2946
  %v2949 = vtanh.pop %v2948
  %2951 = vrot.lane.b32.xlu0 %v2949, 64
  %v2952 = vpop.permute.xlu0 %2951
  %v2954 = vmul.f32 %v2936, %v2952
  %2956 = vrot.lane.b32.xlu0 %v2954, 32
  %v2957 = vpop.permute.xlu0 %2956
  %2959 = vst.msk [vmem:[#allocation6 + $0x38] sm:$0xff] %vm35, %v2957
  %v2960 = vld [vmem:[#allocation6] sm:$0xff]
  %v2961 = vld [vmem:[#allocation6 + $0x8] sm:$0xff]
  %v2962 = vld [vmem:[#allocation6 + $0x10] sm:$0xff]
  %v2963 = vld [vmem:[#allocation6 + $0x18] sm:$0xff]
  %v2964 = vld [vmem:[#allocation6 + $0x20] sm:$0xff]
  %v2965 = vld [vmem:[#allocation6 + $0x28] sm:$0xff]
  %v2966 = vld [vmem:[#allocation6 + $0x30] sm:$0xff]
  %v2967 = vld [vmem:[#allocation6 + $0x38] sm:$0xff]
  %v2968 = vld [vmem:[%s1 + $0xd8] sm:$0xff]
  %v2969 = vld [vmem:[%s1 + $0xe0] sm:$0xff]
  %v2970 = vld [vmem:[%s1 + $0xe8] sm:$0xff]
  %v2971 = vld [vmem:[%s1 + $0xf0] sm:$0xff]
  %v2972 = vld [vmem:[%s1 + $0xf8] sm:$0xff]
  %v2973 = vld [vmem:[%s1 + $0x100] sm:$0xff]
  %v2974 = vld [vmem:[%s1 + $0x108] sm:$0xff]
  %v2975 = vld [vmem:[%s1 + $0x110] sm:$0xff]
  %v2976 = vld [vmem:[%s1 + $0x118] sm:$0x1]
  %v2977 = vlaneseq
  %v2978 = vshrl.u32 %v2977, 7
  %v2979 = vsub.s32 0, %v2978
  %v2980 = vrot.slane %v2976, %v2979
  %v2982 = vsel %vm35, %v2960, 0
  %v2985 = vsel %vm35, %v2961, 0
  %v2988 = vsel %vm35, %v2962, 0
  %v2991 = vsel %vm35, %v2963, 0
  %v2994 = vsel %vm35, %v2964, 0
  %v2997 = vsel %vm35, %v2965, 0
  %v3000 = vsel %vm35, %v2966, 0
  %v3003 = vsel %vm35, %v2967, 0
  %3005 = vmatprep.subr.mxu0 0.0
  %3006 = vmatpush1.msra.mxu0 %v2968
  %3007 = vmatprep.subr.mxu0 0.0
  %3008 = vmatpush1.msra.mxu0 %v2969
  %3009 = vmatprep.subr.mxu0 0.0
  %3010 = vmatpush1.msra.mxu0 %v2970
  %3011 = vmatprep.subr.mxu0 0.0
  %3012 = vmatpush1.msra.mxu0 %v2971
  %3013 = vmatprep.subr.mxu0 0.0
  %3014 = vmatpush1.msra.mxu0 0.0
  %3015 = vmatprep.subr.mxu0 0.0
  %3016 = vmatpush1.msra.mxu0 0.0
  %3017 = vmatprep.subr.mxu0 0.0
  %3018 = vmatpush1.msra.mxu0 0.0
  %3019 = vmatprep.subr.mxu0 0.0
  %3020 = vmatpush1.msra.mxu0 0.0
  %3021 = vmatprep.subr.mxu0 0.0
  %3022 = vmatpush1.msra.mxu0 0.0
  %3023 = vmatprep.subr.mxu0 0.0
  %3024 = vmatpush1.msra.mxu0 0.0
  %3025 = vmatprep.subr.mxu0 0.0
  %3026 = vmatpush1.msra.mxu0 0.0
  %3027 = vmatprep.subr.mxu0 0.0
  %3028 = vmatpush1.msra.mxu0 0.0
  %3029 = vmatprep.subr.mxu0 0.0
  %3030 = vmatpush1.msra.mxu0 0.0
  %3031 = vmatprep.subr.mxu0 0.0
  %3032 = vmatpush1.msra.mxu0 0.0
  %3033 = vmatprep.subr.mxu0 0.0
  %3034 = vmatpush1.msra.mxu0 0.0
  %3035 = vmatprep.subr.mxu0 0.0
  %3036 = vmatpush1.msra.mxu0 0.0
  %3037 = vmatprep.subr.mxu0 0.0
  %3038 = vmatpush1.msra.mxu0 0.0
  %3039 = vmatprep.subr.mxu0 0.0
  %3040 = vmatpush1.msra.mxu0 0.0
  %3041 = vmatprep.subr.mxu0 0.0
  %3042 = vmatpush1.msra.mxu0 0.0
  %3043 = vmatprep.subr.mxu0 0.0
  %3044 = vmatpush1.msra.mxu0 0.0
  %3045 = vmatprep.subr.mxu0 0.0
  %3046 = vmatpush1.msra.mxu0 0.0
  %3047 = vmatprep.subr.mxu0 0.0
  %3048 = vmatpush1.msra.mxu0 0.0
  %3049 = vmatprep.subr.mxu0 0.0
  %3050 = vmatpush1.msra.mxu0 0.0
  %3051 = vmatprep.subr.mxu0 0.0
  %3052 = vmatpush1.msra.mxu0 0.0
  %3053 = vmatprep.subr.mxu0 0.0
  %3054 = vmatpush1.msra.mxu0 0.0
  %3055 = vmatprep.subr.mxu0 0.0
  %3056 = vmatpush1.msra.mxu0 0.0
  %3057 = vmatprep.subr.mxu0 0.0
  %3058 = vmatpush1.msra.mxu0 0.0
  %3059 = vmatprep.subr.mxu0 0.0
  %3060 = vmatpush1.msra.mxu0 0.0
  %3061 = vmatprep.subr.mxu0 0.0
  %3062 = vmatpush1.msra.mxu0 0.0
  %3063 = vmatprep.subr.mxu0 0.0
  %3064 = vmatpush1.msra.mxu0 0.0
  %3065 = vmatprep.subr.mxu0 0.0
  %3066 = vmatpush1.msra.mxu0 0.0
  %3067 = vmatprep.subr.mxu0 0.0
  %3068 = vmatpush1.msra.mxu0 0.0
  %3069 = vmatprep.mubr.f32.mxu0 0.0
  %3070 = vmatmul.mubr.f32.gmra.mrb[0].mxu0 %v2982
  %v3071 = vpop.f32.mrb[0].mxu0
  %v3072 = vadd.f32 %v2980, %v3071
  %v3073 = vpop.f32.mrb[0].mxu0
  %3074 = vmatprep.mubr.f32.mxu0 0.0
  %3075 = vmatmul.mubr.f32.gmra.mrb[0].mxu0 %v2985
  %v3076 = vpop.f32.mrb[0].mxu0
  %v3077 = vadd.f32 %v2980, %v3076
  %v3078 = vpop.f32.mrb[0].mxu0
  %3079 = vmatprep.mubr.f32.mxu0 0.0
  %3080 = vmatmul.mubr.f32.gmra.mrb[0].mxu0 %v2988
  %v3081 = vpop.f32.mrb[0].mxu0
  %v3082 = vadd.f32 %v2980, %v3081
  %v3083 = vpop.f32.mrb[0].mxu0
  %3084 = vmatprep.mubr.f32.mxu0 0.0
  %3085 = vmatmul.mubr.f32.gmra.mrb[0].mxu0 %v2991
  %v3086 = vpop.f32.mrb[0].mxu0
  %v3087 = vadd.f32 %v2980, %v3086
  %v3088 = vpop.f32.mrb[0].mxu0
  %3089 = vmatprep.mubr.f32.mxu0 0.0
  %3090 = vmatmul.mubr.f32.gmra.mrb[0].mxu0 %v2994
  %v3091 = vpop.f32.mrb[0].mxu0
  %v3092 = vadd.f32 %v2980, %v3091
  %v3093 = vpop.f32.mrb[0].mxu0
  %3094 = vmatprep.mubr.f32.mxu0 0.0
  %3095 = vmatmul.mubr.f32.gmra.mrb[0].mxu0 %v2997
  %v3096 = vpop.f32.mrb[0].mxu0
  %v3097 = vadd.f32 %v2980, %v3096
  %v3098 = vpop.f32.mrb[0].mxu0
  %3099 = vmatprep.mubr.f32.mxu0 0.0
  %3100 = vmatmul.mubr.f32.gmra.mrb[0].mxu0 %v3000
  %v3101 = vpop.f32.mrb[0].mxu0
  %v3102 = vadd.f32 %v2980, %v3101
  %v3103 = vpop.f32.mrb[0].mxu0
  %3104 = vmatprep.mubr.f32.mxu0 0.0
  %3105 = vmatmul.mubr.f32.gmra.mrb[0].mxu0 %v3003
  %v3106 = vpop.f32.mrb[0].mxu0
  %v3107 = vadd.f32 %v2980, %v3106
  %v3108 = vpop.f32.mrb[0].mxu0
  %3109 = vdwg.mxu0
  %3110 = vst [vmem:[#allocation3] sm:$0xff] %v3072
  %3111 = vst [vmem:[#allocation3 + $0x8] sm:$0xff] %v3077
  %3112 = vst [vmem:[#allocation3 + $0x10] sm:$0xff] %v3082
  %3113 = vst [vmem:[#allocation3 + $0x18] sm:$0xff] %v3087
  %3114 = vst [vmem:[#allocation3 + $0x20] sm:$0xff] %v3092
  %3115 = vst [vmem:[#allocation3 + $0x28] sm:$0xff] %v3097
  %3116 = vst [vmem:[#allocation3 + $0x30] sm:$0xff] %v3102
  %3117 = vst [vmem:[#allocation3 + $0x38] sm:$0xff] %v3107
  %v3118 = vld [vmem:[#allocation3] sm:$0xff]
  %v3119 = vsel %vm35, %v2854, 0
  %3121 = vmatprep.subr.mxu0 0.0
  %3122 = vmatpush1.msra.mxu0 %v2972
  %3123 = vmatprep.subr.mxu0 0.0
  %3124 = vmatpush1.msra.mxu0 %v2973
  %3125 = vmatprep.subr.mxu0 0.0
  %3126 = vmatpush1.msra.mxu0 %v2974
  %3127 = vmatprep.subr.mxu0 0.0
  %3128 = vmatpush1.msra.mxu0 %v2975
  %3129 = vmatprep.subr.mxu0 0.0
  %3130 = vmatpush1.msra.mxu0 0.0
  %3131 = vmatprep.subr.mxu0 0.0
  %3132 = vmatpush1.msra.mxu0 0.0
  %3133 = vmatprep.subr.mxu0 0.0
  %3134 = vmatpush1.msra.mxu0 0.0
  %3135 = vmatprep.subr.mxu0 0.0
  %3136 = vmatpush1.msra.mxu0 0.0
  %3137 = vmatprep.subr.mxu0 0.0
  %3138 = vmatpush1.msra.mxu0 0.0
  %3139 = vmatprep.subr.mxu0 0.0
  %3140 = vmatpush1.msra.mxu0 0.0
  %3141 = vmatprep.subr.mxu0 0.0
  %3142 = vmatpush1.msra.mxu0 0.0
  %3143 = vmatprep.subr.mxu0 0.0
  %3144 = vmatpush1.msra.mxu0 0.0
  %3145 = vmatprep.subr.mxu0 0.0
  %3146 = vmatpush1.msra.mxu0 0.0
  %3147 = vmatprep.subr.mxu0 0.0
  %3148 = vmatpush1.msra.mxu0 0.0
  %3149 = vmatprep.subr.mxu0 0.0
  %3150 = vmatpush1.msra.mxu0 0.0
  %3151 = vmatprep.subr.mxu0 0.0
  %3152 = vmatpush1.msra.mxu0 0.0
  %3153 = vmatprep.subr.mxu0 0.0
  %3154 = vmatpush1.msra.mxu0 0.0
  %3155 = vmatprep.subr.mxu0 0.0
  %3156 = vmatpush1.msra.mxu0 0.0
  %3157 = vmatprep.subr.mxu0 0.0
  %3158 = vmatpush1.msra.mxu0 0.0
  %3159 = vmatprep.subr.mxu0 0.0
  %3160 = vmatpush1.msra.mxu0 0.0
  %3161 = vmatprep.subr.mxu0 0.0
  %3162 = vmatpush1.msra.mxu0 0.0
  %3163 = vmatprep.subr.mxu0 0.0
  %3164 = vmatpush1.msra.mxu0 0.0
  %3165 = vmatprep.subr.mxu0 0.0
  %3166 = vmatpush1.msra.mxu0 0.0
  %3167 = vmatprep.subr.mxu0 0.0
  %3168 = vmatpush1.msra.mxu0 0.0
  %3169 = vmatprep.subr.mxu0 0.0
  %3170 = vmatpush1.msra.mxu0 0.0
  %3171 = vmatprep.subr.mxu0 0.0
  %3172 = vmatpush1.msra.mxu0 0.0
  %3173 = vmatprep.subr.mxu0 0.0
  %3174 = vmatpush1.msra.mxu0 0.0
  %3175 = vmatprep.subr.mxu0 0.0
  %3176 = vmatpush1.msra.mxu0 0.0
  %3177 = vmatprep.subr.mxu0 0.0
  %3178 = vmatpush1.msra.mxu0 0.0
  %3179 = vmatprep.subr.mxu0 0.0
  %3180 = vmatpush1.msra.mxu0 0.0
  %3181 = vmatprep.subr.mxu0 0.0
  %3182 = vmatpush1.msra.mxu0 0.0
  %3183 = vmatprep.subr.mxu0 0.0
  %3184 = vmatpush1.msra.mxu0 0.0
  %3185 = vmatprep.mubr.f32.mxu0 0.0
  %3186 = vmatmul.mubr.f32.gmra.mrb[0].mxu0 %v3119
  %v3187 = vpop.f32.mrb[0].mxu0
  %v3188 = vadd.f32 0.0, %v3187
  %v3189 = vpop.f32.mrb[0].mxu0
  %3190 = vdwg.mxu0
  %v3191 = vadd.f32 %v3118, %v3188
  %v3192 = vxor.u32 %v3191, 2147483648
  %v3193 = vmul.f32 %v3192, 1.442695
  %v3194 = vpow.pop %v3193
  %v3195 = vadd.f32 %v3194, 1.0
  %v3196 = vrcp.pop %v3195
  %v3197 = vmul.f32 1.0, %v3196
  %v3198 = vtanh.pop %v3191
  %v3199 = vmul.f32 %v3197, %v2845
  %3201 = vrot.lane.b32.xlu0 %v3198, 64
  %v3202 = vpop.permute.xlu0 %3201
  %v3204 = vmul.f32 %v3197, %v3202
  %3206 = vrot.lane.b32.xlu0 %v3204, 32
  %v3207 = vpop.permute.xlu0 %3206
  %v3209 = vadd.f32 %v3199, %v3207
  %v3210 = vtanh.pop %v3209
  %3212 = vrot.lane.b32.xlu0 %v3210, 64
  %v3213 = vpop.permute.xlu0 %3212
  %v3215 = vmul.f32 %v3197, %v3213
  %3217 = vrot.lane.b32.xlu0 %v3215, 32
  %v3218 = vpop.permute.xlu0 %3217
  %3220 = vst.msk [vmem:[#allocation7] sm:$0xff] %vm35, %v3218
  %v3221 = vld [vmem:[#allocation3 + $0x8] sm:$0xff]
  %v3222 = vsel %vm35, %v3218, 0
  %3224 = vmatprep.subr.mxu0 0.0
  %3225 = vmatpush1.msra.mxu0 %v2972
  %3226 = vmatprep.subr.mxu0 0.0
  %3227 = vmatpush1.msra.mxu0 %v2973
  %3228 = vmatprep.subr.mxu0 0.0
  %3229 = vmatpush1.msra.mxu0 %v2974
  %3230 = vmatprep.subr.mxu0 0.0
  %3231 = vmatpush1.msra.mxu0 %v2975
  %3232 = vmatprep.subr.mxu0 0.0
  %3233 = vmatpush1.msra.mxu0 0.0
  %3234 = vmatprep.subr.mxu0 0.0
  %3235 = vmatpush1.msra.mxu0 0.0
  %3236 = vmatprep.subr.mxu0 0.0
  %3237 = vmatpush1.msra.mxu0 0.0
  %3238 = vmatprep.subr.mxu0 0.0
  %3239 = vmatpush1.msra.mxu0 0.0
  %3240 = vmatprep.subr.mxu0 0.0
  %3241 = vmatpush1.msra.mxu0 0.0
  %3242 = vmatprep.subr.mxu0 0.0
  %3243 = vmatpush1.msra.mxu0 0.0
  %3244 = vmatprep.subr.mxu0 0.0
  %3245 = vmatpush1.msra.mxu0 0.0
  %3246 = vmatprep.subr.mxu0 0.0
  %3247 = vmatpush1.msra.mxu0 0.0
  %3248 = vmatprep.subr.mxu0 0.0
  %3249 = vmatpush1.msra.mxu0 0.0
  %3250 = vmatprep.subr.mxu0 0.0
  %3251 = vmatpush1.msra.mxu0 0.0
  %3252 = vmatprep.subr.mxu0 0.0
  %3253 = vmatpush1.msra.mxu0 0.0
  %3254 = vmatprep.subr.mxu0 0.0
  %3255 = vmatpush1.msra.mxu0 0.0
  %3256 = vmatprep.subr.mxu0 0.0
  %3257 = vmatpush1.msra.mxu0 0.0
  %3258 = vmatprep.subr.mxu0 0.0
  %3259 = vmatpush1.msra.mxu0 0.0
  %3260 = vmatprep.subr.mxu0 0.0
  %3261 = vmatpush1.msra.mxu0 0.0
  %3262 = vmatprep.subr.mxu0 0.0
  %3263 = vmatpush1.msra.mxu0 0.0
  %3264 = vmatprep.subr.mxu0 0.0
  %3265 = vmatpush1.msra.mxu0 0.0
  %3266 = vmatprep.subr.mxu0 0.0
  %3267 = vmatpush1.msra.mxu0 0.0
  %3268 = vmatprep.subr.mxu0 0.0
  %3269 = vmatpush1.msra.mxu0 0.0
  %3270 = vmatprep.subr.mxu0 0.0
  %3271 = vmatpush1.msra.mxu0 0.0
  %3272 = vmatprep.subr.mxu0 0.0
  %3273 = vmatpush1.msra.mxu0 0.0
  %3274 = vmatprep.subr.mxu0 0.0
  %3275 = vmatpush1.msra.mxu0 0.0
  %3276 = vmatprep.subr.mxu0 0.0
  %3277 = vmatpush1.msra.mxu0 0.0
  %3278 = vmatprep.subr.mxu0 0.0
  %3279 = vmatpush1.msra.mxu0 0.0
  %3280 = vmatprep.subr.mxu0 0.0
  %3281 = vmatpush1.msra.mxu0 0.0
  %3282 = vmatprep.subr.mxu0 0.0
  %3283 = vmatpush1.msra.mxu0 0.0
  %3284 = vmatprep.subr.mxu0 0.0
  %3285 = vmatpush1.msra.mxu0 0.0
  %3286 = vmatprep.subr.mxu0 0.0
  %3287 = vmatpush1.msra.mxu0 0.0
  %3288 = vmatprep.mubr.f32.mxu0 0.0
  %3289 = vmatmul.mubr.f32.gmra.mrb[0].mxu0 %v3222
  %v3290 = vpop.f32.mrb[0].mxu0
  %v3291 = vadd.f32 0.0, %v3290
  %v3292 = vpop.f32.mrb[0].mxu0
  %3293 = vdwg.mxu0
  %v3294 = vadd.f32 %v3221, %v3291
  %v3295 = vxor.u32 %v3294, 2147483648
  %v3296 = vmul.f32 %v3295, 1.442695
  %v3297 = vpow.pop %v3296
  %v3298 = vadd.f32 %v3297, 1.0
  %v3299 = vrcp.pop %v3298
  %v3300 = vmul.f32 1.0, %v3299
  %v3301 = vtanh.pop %v3294
  %v3302 = vmul.f32 %v3300, %v3209
  %3304 = vrot.lane.b32.xlu0 %v3301, 64
  %v3305 = vpop.permute.xlu0 %3304
  %v3307 = vmul.f32 %v3300, %v3305
  %3309 = vrot.lane.b32.xlu0 %v3307, 32
  %v3310 = vpop.permute.xlu0 %3309
  %v3312 = vadd.f32 %v3302, %v3310
  %v3313 = vtanh.pop %v3312
  %3315 = vrot.lane.b32.xlu0 %v3313, 64
  %v3316 = vpop.permute.xlu0 %3315
  %v3318 = vmul.f32 %v3300, %v3316
  %3320 = vrot.lane.b32.xlu0 %v3318, 32
  %v3321 = vpop.permute.xlu0 %3320
  %3323 = vst.msk [vmem:[#allocation7 + $0x8] sm:$0xff] %vm35, %v3321
  %v3324 = vld [vmem:[#allocation3 + $0x10] sm:$0xff]
  %v3325 = vsel %vm35, %v3321, 0
  %3327 = vmatprep.subr.mxu0 0.0
  %3328 = vmatpush1.msra.mxu0 %v2972
  %3329 = vmatprep.subr.mxu0 0.0
  %3330 = vmatpush1.msra.mxu0 %v2973
  %3331 = vmatprep.subr.mxu0 0.0
  %3332 = vmatpush1.msra.mxu0 %v2974
  %3333 = vmatprep.subr.mxu0 0.0
  %3334 = vmatpush1.msra.mxu0 %v2975
  %3335 = vmatprep.subr.mxu0 0.0
  %3336 = vmatpush1.msra.mxu0 0.0
  %3337 = vmatprep.subr.mxu0 0.0
  %3338 = vmatpush1.msra.mxu0 0.0
  %3339 = vmatprep.subr.mxu0 0.0
  %3340 = vmatpush1.msra.mxu0 0.0
  %3341 = vmatprep.subr.mxu0 0.0
  %3342 = vmatpush1.msra.mxu0 0.0
  %3343 = vmatprep.subr.mxu0 0.0
  %3344 = vmatpush1.msra.mxu0 0.0
  %3345 = vmatprep.subr.mxu0 0.0
  %3346 = vmatpush1.msra.mxu0 0.0
  %3347 = vmatprep.subr.mxu0 0.0
  %3348 = vmatpush1.msra.mxu0 0.0
  %3349 = vmatprep.subr.mxu0 0.0
  %3350 = vmatpush1.msra.mxu0 0.0
  %3351 = vmatprep.subr.mxu0 0.0
  %3352 = vmatpush1.msra.mxu0 0.0
  %3353 = vmatprep.subr.mxu0 0.0
  %3354 = vmatpush1.msra.mxu0 0.0
  %3355 = vmatprep.subr.mxu0 0.0
  %3356 = vmatpush1.msra.mxu0 0.0
  %3357 = vmatprep.subr.mxu0 0.0
  %3358 = vmatpush1.msra.mxu0 0.0
  %3359 = vmatprep.subr.mxu0 0.0
  %3360 = vmatpush1.msra.mxu0 0.0
  %3361 = vmatprep.subr.mxu0 0.0
  %3362 = vmatpush1.msra.mxu0 0.0
  %3363 = vmatprep.subr.mxu0 0.0
  %3364 = vmatpush1.msra.mxu0 0.0
  %3365 = vmatprep.subr.mxu0 0.0
  %3366 = vmatpush1.msra.mxu0 0.0
  %3367 = vmatprep.subr.mxu0 0.0
  %3368 = vmatpush1.msra.mxu0 0.0
  %3369 = vmatprep.subr.mxu0 0.0
  %3370 = vmatpush1.msra.mxu0 0.0
  %3371 = vmatprep.subr.mxu0 0.0
  %3372 = vmatpush1.msra.mxu0 0.0
  %3373 = vmatprep.subr.mxu0 0.0
  %3374 = vmatpush1.msra.mxu0 0.0
  %3375 = vmatprep.subr.mxu0 0.0
  %3376 = vmatpush1.msra.mxu0 0.0
  %3377 = vmatprep.subr.mxu0 0.0
  %3378 = vmatpush1.msra.mxu0 0.0
  %3379 = vmatprep.subr.mxu0 0.0
  %3380 = vmatpush1.msra.mxu0 0.0
  %3381 = vmatprep.subr.mxu0 0.0
  %3382 = vmatpush1.msra.mxu0 0.0
  %3383 = vmatprep.subr.mxu0 0.0
  %3384 = vmatpush1.msra.mxu0 0.0
  %3385 = vmatprep.subr.mxu0 0.0
  %3386 = vmatpush1.msra.mxu0 0.0
  %3387 = vmatprep.subr.mxu0 0.0
  %3388 = vmatpush1.msra.mxu0 0.0
  %3389 = vmatprep.subr.mxu0 0.0
  %3390 = vmatpush1.msra.mxu0 0.0
  %3391 = vmatprep.mubr.f32.mxu0 0.0
  %3392 = vmatmul.mubr.f32.gmra.mrb[0].mxu0 %v3325
  %v3393 = vpop.f32.mrb[0].mxu0
  %v3394 = vadd.f32 0.0, %v3393
  %v3395 = vpop.f32.mrb[0].mxu0
  %3396 = vdwg.mxu0
  %v3397 = vadd.f32 %v3324, %v3394
  %v3398 = vxor.u32 %v3397, 2147483648
  %v3399 = vmul.f32 %v3398, 1.442695
  %v3400 = vpow.pop %v3399
  %v3401 = vadd.f32 %v3400, 1.0
  %v3402 = vrcp.pop %v3401
  %v3403 = vmul.f32 1.0, %v3402
  %v3404 = vtanh.pop %v3397
  %v3405 = vmul.f32 %v3403, %v3312
  %3407 = vrot.lane.b32.xlu0 %v3404, 64
  %v3408 = vpop.permute.xlu0 %3407
  %v3410 = vmul.f32 %v3403, %v3408
  %3412 = vrot.lane.b32.xlu0 %v3410, 32
  %v3413 = vpop.permute.xlu0 %3412
  %v3415 = vadd.f32 %v3405, %v3413
  %v3416 = vtanh.pop %v3415
  %3418 = vrot.lane.b32.xlu0 %v3416, 64
  %v3419 = vpop.permute.xlu0 %3418
  %v3421 = vmul.f32 %v3403, %v3419
  %3423 = vrot.lane.b32.xlu0 %v3421, 32
  %v3424 = vpop.permute.xlu0 %3423
  %3426 = vst.msk [vmem:[#allocation7 + $0x10] sm:$0xff] %vm35, %v3424
  %v3427 = vld [vmem:[#allocation3 + $0x18] sm:$0xff]
  %v3428 = vsel %vm35, %v3424, 0
  %3430 = vmatprep.subr.mxu0 0.0
  %3431 = vmatpush1.msra.mxu0 %v2972
  %3432 = vmatprep.subr.mxu0 0.0
  %3433 = vmatpush1.msra.mxu0 %v2973
  %3434 = vmatprep.subr.mxu0 0.0
  %3435 = vmatpush1.msra.mxu0 %v2974
  %3436 = vmatprep.subr.mxu0 0.0
  %3437 = vmatpush1.msra.mxu0 %v2975
  %3438 = vmatprep.subr.mxu0 0.0
  %3439 = vmatpush1.msra.mxu0 0.0
  %3440 = vmatprep.subr.mxu0 0.0
  %3441 = vmatpush1.msra.mxu0 0.0
  %3442 = vmatprep.subr.mxu0 0.0
  %3443 = vmatpush1.msra.mxu0 0.0
  %3444 = vmatprep.subr.mxu0 0.0
  %3445 = vmatpush1.msra.mxu0 0.0
  %3446 = vmatprep.subr.mxu0 0.0
  %3447 = vmatpush1.msra.mxu0 0.0
  %3448 = vmatprep.subr.mxu0 0.0
  %3449 = vmatpush1.msra.mxu0 0.0
  %3450 = vmatprep.subr.mxu0 0.0
  %3451 = vmatpush1.msra.mxu0 0.0
  %3452 = vmatprep.subr.mxu0 0.0
  %3453 = vmatpush1.msra.mxu0 0.0
  %3454 = vmatprep.subr.mxu0 0.0
  %3455 = vmatpush1.msra.mxu0 0.0
  %3456 = vmatprep.subr.mxu0 0.0
  %3457 = vmatpush1.msra.mxu0 0.0
  %3458 = vmatprep.subr.mxu0 0.0
  %3459 = vmatpush1.msra.mxu0 0.0
  %3460 = vmatprep.subr.mxu0 0.0
  %3461 = vmatpush1.msra.mxu0 0.0
  %3462 = vmatprep.subr.mxu0 0.0
  %3463 = vmatpush1.msra.mxu0 0.0
  %3464 = vmatprep.subr.mxu0 0.0
  %3465 = vmatpush1.msra.mxu0 0.0
  %3466 = vmatprep.subr.mxu0 0.0
  %3467 = vmatpush1.msra.mxu0 0.0
  %3468 = vmatprep.subr.mxu0 0.0
  %3469 = vmatpush1.msra.mxu0 0.0
  %3470 = vmatprep.subr.mxu0 0.0
  %3471 = vmatpush1.msra.mxu0 0.0
  %3472 = vmatprep.subr.mxu0 0.0
  %3473 = vmatpush1.msra.mxu0 0.0
  %3474 = vmatprep.subr.mxu0 0.0
  %3475 = vmatpush1.msra.mxu0 0.0
  %3476 = vmatprep.subr.mxu0 0.0
  %3477 = vmatpush1.msra.mxu0 0.0
  %3478 = vmatprep.subr.mxu0 0.0
  %3479 = vmatpush1.msra.mxu0 0.0
  %3480 = vmatprep.subr.mxu0 0.0
  %3481 = vmatpush1.msra.mxu0 0.0
  %3482 = vmatprep.subr.mxu0 0.0
  %3483 = vmatpush1.msra.mxu0 0.0
  %3484 = vmatprep.subr.mxu0 0.0
  %3485 = vmatpush1.msra.mxu0 0.0
  %3486 = vmatprep.subr.mxu0 0.0
  %3487 = vmatpush1.msra.mxu0 0.0
  %3488 = vmatprep.subr.mxu0 0.0
  %3489 = vmatpush1.msra.mxu0 0.0
  %3490 = vmatprep.subr.mxu0 0.0
  %3491 = vmatpush1.msra.mxu0 0.0
  %3492 = vmatprep.subr.mxu0 0.0
  %3493 = vmatpush1.msra.mxu0 0.0
  %3494 = vmatprep.mubr.f32.mxu0 0.0
  %3495 = vmatmul.mubr.f32.gmra.mrb[0].mxu0 %v3428
  %v3496 = vpop.f32.mrb[0].mxu0
  %v3497 = vadd.f32 0.0, %v3496
  %v3498 = vpop.f32.mrb[0].mxu0
  %3499 = vdwg.mxu0
  %v3500 = vadd.f32 %v3427, %v3497
  %v3501 = vxor.u32 %v3500, 2147483648
  %v3502 = vmul.f32 %v3501, 1.442695
  %v3503 = vpow.pop %v3502
  %v3504 = vadd.f32 %v3503, 1.0
  %v3505 = vrcp.pop %v3504
  %v3506 = vmul.f32 1.0, %v3505
  %v3507 = vtanh.pop %v3500
  %v3508 = vmul.f32 %v3506, %v3415
  %3510 = vrot.lane.b32.xlu0 %v3507, 64
  %v3511 = vpop.permute.xlu0 %3510
  %v3513 = vmul.f32 %v3506, %v3511
  %3515 = vrot.lane.b32.xlu0 %v3513, 32
  %v3516 = vpop.permute.xlu0 %3515
  %v3518 = vadd.f32 %v3508, %v3516
  %v3519 = vtanh.pop %v3518
  %3521 = vrot.lane.b32.xlu0 %v3519, 64
  %v3522 = vpop.permute.xlu0 %3521
  %v3524 = vmul.f32 %v3506, %v3522
  %3526 = vrot.lane.b32.xlu0 %v3524, 32
  %v3527 = vpop.permute.xlu0 %3526
  %3529 = vst.msk [vmem:[#allocation7 + $0x18] sm:$0xff] %vm35, %v3527
  %v3530 = vld [vmem:[#allocation3 + $0x20] sm:$0xff]
  %v3531 = vsel %vm35, %v3527, 0
  %3533 = vmatprep.subr.mxu0 0.0
  %3534 = vmatpush1.msra.mxu0 %v2972
  %3535 = vmatprep.subr.mxu0 0.0
  %3536 = vmatpush1.msra.mxu0 %v2973
  %3537 = vmatprep.subr.mxu0 0.0
  %3538 = vmatpush1.msra.mxu0 %v2974
  %3539 = vmatprep.subr.mxu0 0.0
  %3540 = vmatpush1.msra.mxu0 %v2975
  %3541 = vmatprep.subr.mxu0 0.0
  %3542 = vmatpush1.msra.mxu0 0.0
  %3543 = vmatprep.subr.mxu0 0.0
  %3544 = vmatpush1.msra.mxu0 0.0
  %3545 = vmatprep.subr.mxu0 0.0
  %3546 = vmatpush1.msra.mxu0 0.0
  %3547 = vmatprep.subr.mxu0 0.0
  %3548 = vmatpush1.msra.mxu0 0.0
  %3549 = vmatprep.subr.mxu0 0.0
  %3550 = vmatpush1.msra.mxu0 0.0
  %3551 = vmatprep.subr.mxu0 0.0
  %3552 = vmatpush1.msra.mxu0 0.0
  %3553 = vmatprep.subr.mxu0 0.0
  %3554 = vmatpush1.msra.mxu0 0.0
  %3555 = vmatprep.subr.mxu0 0.0
  %3556 = vmatpush1.msra.mxu0 0.0
  %3557 = vmatprep.subr.mxu0 0.0
  %3558 = vmatpush1.msra.mxu0 0.0
  %3559 = vmatprep.subr.mxu0 0.0
  %3560 = vmatpush1.msra.mxu0 0.0
  %3561 = vmatprep.subr.mxu0 0.0
  %3562 = vmatpush1.msra.mxu0 0.0
  %3563 = vmatprep.subr.mxu0 0.0
  %3564 = vmatpush1.msra.mxu0 0.0
  %3565 = vmatprep.subr.mxu0 0.0
  %3566 = vmatpush1.msra.mxu0 0.0
  %3567 = vmatprep.subr.mxu0 0.0
  %3568 = vmatpush1.msra.mxu0 0.0
  %3569 = vmatprep.subr.mxu0 0.0
  %3570 = vmatpush1.msra.mxu0 0.0
  %3571 = vmatprep.subr.mxu0 0.0
  %3572 = vmatpush1.msra.mxu0 0.0
  %3573 = vmatprep.subr.mxu0 0.0
  %3574 = vmatpush1.msra.mxu0 0.0
  %3575 = vmatprep.subr.mxu0 0.0
  %3576 = vmatpush1.msra.mxu0 0.0
  %3577 = vmatprep.subr.mxu0 0.0
  %3578 = vmatpush1.msra.mxu0 0.0
  %3579 = vmatprep.subr.mxu0 0.0
  %3580 = vmatpush1.msra.mxu0 0.0
  %3581 = vmatprep.subr.mxu0 0.0
  %3582 = vmatpush1.msra.mxu0 0.0
  %3583 = vmatprep.subr.mxu0 0.0
  %3584 = vmatpush1.msra.mxu0 0.0
  %3585 = vmatprep.subr.mxu0 0.0
  %3586 = vmatpush1.msra.mxu0 0.0
  %3587 = vmatprep.subr.mxu0 0.0
  %3588 = vmatpush1.msra.mxu0 0.0
  %3589 = vmatprep.subr.mxu0 0.0
  %3590 = vmatpush1.msra.mxu0 0.0
  %3591 = vmatprep.subr.mxu0 0.0
  %3592 = vmatpush1.msra.mxu0 0.0
  %3593 = vmatprep.subr.mxu0 0.0
  %3594 = vmatpush1.msra.mxu0 0.0
  %3595 = vmatprep.subr.mxu0 0.0
  %3596 = vmatpush1.msra.mxu0 0.0
  %3597 = vmatprep.mubr.f32.mxu0 0.0
  %3598 = vmatmul.mubr.f32.gmra.mrb[0].mxu0 %v3531
  %v3599 = vpop.f32.mrb[0].mxu0
  %v3600 = vadd.f32 0.0, %v3599
  %v3601 = vpop.f32.mrb[0].mxu0
  %3602 = vdwg.mxu0
  %v3603 = vadd.f32 %v3530, %v3600
  %v3604 = vxor.u32 %v3603, 2147483648
  %v3605 = vmul.f32 %v3604, 1.442695
  %v3606 = vpow.pop %v3605
  %v3607 = vadd.f32 %v3606, 1.0
  %v3608 = vrcp.pop %v3607
  %v3609 = vmul.f32 1.0, %v3608
  %v3610 = vtanh.pop %v3603
  %v3611 = vmul.f32 %v3609, %v3518
  %3613 = vrot.lane.b32.xlu0 %v3610, 64
  %v3614 = vpop.permute.xlu0 %3613
  %v3616 = vmul.f32 %v3609, %v3614
  %3618 = vrot.lane.b32.xlu0 %v3616, 32
  %v3619 = vpop.permute.xlu0 %3618
  %v3621 = vadd.f32 %v3611, %v3619
  %v3622 = vtanh.pop %v3621
  %3624 = vrot.lane.b32.xlu0 %v3622, 64
  %v3625 = vpop.permute.xlu0 %3624
  %v3627 = vmul.f32 %v3609, %v3625
  %3629 = vrot.lane.b32.xlu0 %v3627, 32
  %v3630 = vpop.permute.xlu0 %3629
  %3632 = vst.msk [vmem:[#allocation7 + $0x20] sm:$0xff] %vm35, %v3630
  %v3633 = vld [vmem:[#allocation3 + $0x28] sm:$0xff]
  %v3634 = vsel %vm35, %v3630, 0
  %3636 = vmatprep.subr.mxu0 0.0
  %3637 = vmatpush1.msra.mxu0 %v2972
  %3638 = vmatprep.subr.mxu0 0.0
  %3639 = vmatpush1.msra.mxu0 %v2973
  %3640 = vmatprep.subr.mxu0 0.0
  %3641 = vmatpush1.msra.mxu0 %v2974
  %3642 = vmatprep.subr.mxu0 0.0
  %3643 = vmatpush1.msra.mxu0 %v2975
  %3644 = vmatprep.subr.mxu0 0.0
  %3645 = vmatpush1.msra.mxu0 0.0
  %3646 = vmatprep.subr.mxu0 0.0
  %3647 = vmatpush1.msra.mxu0 0.0
  %3648 = vmatprep.subr.mxu0 0.0
  %3649 = vmatpush1.msra.mxu0 0.0
  %3650 = vmatprep.subr.mxu0 0.0
  %3651 = vmatpush1.msra.mxu0 0.0
  %3652 = vmatprep.subr.mxu0 0.0
  %3653 = vmatpush1.msra.mxu0 0.0
  %3654 = vmatprep.subr.mxu0 0.0
  %3655 = vmatpush1.msra.mxu0 0.0
  %3656 = vmatprep.subr.mxu0 0.0
  %3657 = vmatpush1.msra.mxu0 0.0
  %3658 = vmatprep.subr.mxu0 0.0
  %3659 = vmatpush1.msra.mxu0 0.0
  %3660 = vmatprep.subr.mxu0 0.0
  %3661 = vmatpush1.msra.mxu0 0.0
  %3662 = vmatprep.subr.mxu0 0.0
  %3663 = vmatpush1.msra.mxu0 0.0
  %3664 = vmatprep.subr.mxu0 0.0
  %3665 = vmatpush1.msra.mxu0 0.0
  %3666 = vmatprep.subr.mxu0 0.0
  %3667 = vmatpush1.msra.mxu0 0.0
  %3668 = vmatprep.subr.mxu0 0.0
  %3669 = vmatpush1.msra.mxu0 0.0
  %3670 = vmatprep.subr.mxu0 0.0
  %3671 = vmatpush1.msra.mxu0 0.0
  %3672 = vmatprep.subr.mxu0 0.0
  %3673 = vmatpush1.msra.mxu0 0.0
  %3674 = vmatprep.subr.mxu0 0.0
  %3675 = vmatpush1.msra.mxu0 0.0
  %3676 = vmatprep.subr.mxu0 0.0
  %3677 = vmatpush1.msra.mxu0 0.0
  %3678 = vmatprep.subr.mxu0 0.0
  %3679 = vmatpush1.msra.mxu0 0.0
  %3680 = vmatprep.subr.mxu0 0.0
  %3681 = vmatpush1.msra.mxu0 0.0
  %3682 = vmatprep.subr.mxu0 0.0
  %3683 = vmatpush1.msra.mxu0 0.0
  %3684 = vmatprep.subr.mxu0 0.0
  %3685 = vmatpush1.msra.mxu0 0.0
  %3686 = vmatprep.subr.mxu0 0.0
  %3687 = vmatpush1.msra.mxu0 0.0
  %3688 = vmatprep.subr.mxu0 0.0
  %3689 = vmatpush1.msra.mxu0 0.0
  %3690 = vmatprep.subr.mxu0 0.0
  %3691 = vmatpush1.msra.mxu0 0.0
  %3692 = vmatprep.subr.mxu0 0.0
  %3693 = vmatpush1.msra.mxu0 0.0
  %3694 = vmatprep.subr.mxu0 0.0
  %3695 = vmatpush1.msra.mxu0 0.0
  %3696 = vmatprep.subr.mxu0 0.0
  %3697 = vmatpush1.msra.mxu0 0.0
  %3698 = vmatprep.subr.mxu0 0.0
  %3699 = vmatpush1.msra.mxu0 0.0
  %3700 = vmatprep.mubr.f32.mxu0 0.0
  %3701 = vmatmul.mubr.f32.gmra.mrb[0].mxu0 %v3634
  %v3702 = vpop.f32.mrb[0].mxu0
  %v3703 = vadd.f32 0.0, %v3702
  %v3704 = vpop.f32.mrb[0].mxu0
  %3705 = vdwg.mxu0
  %v3706 = vadd.f32 %v3633, %v3703
  %v3707 = vxor.u32 %v3706, 2147483648
  %v3708 = vmul.f32 %v3707, 1.442695
  %v3709 = vpow.pop %v3708
  %v3710 = vadd.f32 %v3709, 1.0
  %v3711 = vrcp.pop %v3710
  %v3712 = vmul.f32 1.0, %v3711
  %v3713 = vtanh.pop %v3706
  %v3714 = vmul.f32 %v3712, %v3621
  %3716 = vrot.lane.b32.xlu0 %v3713, 64
  %v3717 = vpop.permute.xlu0 %3716
  %v3719 = vmul.f32 %v3712, %v3717
  %3721 = vrot.lane.b32.xlu0 %v3719, 32
  %v3722 = vpop.permute.xlu0 %3721
  %v3724 = vadd.f32 %v3714, %v3722
  %v3725 = vtanh.pop %v3724
  %3727 = vrot.lane.b32.xlu0 %v3725, 64
  %v3728 = vpop.permute.xlu0 %3727
  %v3730 = vmul.f32 %v3712, %v3728
  %3732 = vrot.lane.b32.xlu0 %v3730, 32
  %v3733 = vpop.permute.xlu0 %3732
  %3735 = vst.msk [vmem:[#allocation7 + $0x28] sm:$0xff] %vm35, %v3733
  %v3736 = vld [vmem:[#allocation3 + $0x30] sm:$0xff]
  %v3737 = vsel %vm35, %v3733, 0
  %3739 = vmatprep.subr.mxu0 0.0
  %3740 = vmatpush1.msra.mxu0 %v2972
  %3741 = vmatprep.subr.mxu0 0.0
  %3742 = vmatpush1.msra.mxu0 %v2973
  %3743 = vmatprep.subr.mxu0 0.0
  %3744 = vmatpush1.msra.mxu0 %v2974
  %3745 = vmatprep.subr.mxu0 0.0
  %3746 = vmatpush1.msra.mxu0 %v2975
  %3747 = vmatprep.subr.mxu0 0.0
  %3748 = vmatpush1.msra.mxu0 0.0
  %3749 = vmatprep.subr.mxu0 0.0
  %3750 = vmatpush1.msra.mxu0 0.0
  %3751 = vmatprep.subr.mxu0 0.0
  %3752 = vmatpush1.msra.mxu0 0.0
  %3753 = vmatprep.subr.mxu0 0.0
  %3754 = vmatpush1.msra.mxu0 0.0
  %3755 = vmatprep.subr.mxu0 0.0
  %3756 = vmatpush1.msra.mxu0 0.0
  %3757 = vmatprep.subr.mxu0 0.0
  %3758 = vmatpush1.msra.mxu0 0.0
  %3759 = vmatprep.subr.mxu0 0.0
  %3760 = vmatpush1.msra.mxu0 0.0
  %3761 = vmatprep.subr.mxu0 0.0
  %3762 = vmatpush1.msra.mxu0 0.0
  %3763 = vmatprep.subr.mxu0 0.0
  %3764 = vmatpush1.msra.mxu0 0.0
  %3765 = vmatprep.subr.mxu0 0.0
  %3766 = vmatpush1.msra.mxu0 0.0
  %3767 = vmatprep.subr.mxu0 0.0
  %3768 = vmatpush1.msra.mxu0 0.0
  %3769 = vmatprep.subr.mxu0 0.0
  %3770 = vmatpush1.msra.mxu0 0.0
  %3771 = vmatprep.subr.mxu0 0.0
  %3772 = vmatpush1.msra.mxu0 0.0
  %3773 = vmatprep.subr.mxu0 0.0
  %3774 = vmatpush1.msra.mxu0 0.0
  %3775 = vmatprep.subr.mxu0 0.0
  %3776 = vmatpush1.msra.mxu0 0.0
  %3777 = vmatprep.subr.mxu0 0.0
  %3778 = vmatpush1.msra.mxu0 0.0
  %3779 = vmatprep.subr.mxu0 0.0
  %3780 = vmatpush1.msra.mxu0 0.0
  %3781 = vmatprep.subr.mxu0 0.0
  %3782 = vmatpush1.msra.mxu0 0.0
  %3783 = vmatprep.subr.mxu0 0.0
  %3784 = vmatpush1.msra.mxu0 0.0
  %3785 = vmatprep.subr.mxu0 0.0
  %3786 = vmatpush1.msra.mxu0 0.0
  %3787 = vmatprep.subr.mxu0 0.0
  %3788 = vmatpush1.msra.mxu0 0.0
  %3789 = vmatprep.subr.mxu0 0.0
  %3790 = vmatpush1.msra.mxu0 0.0
  %3791 = vmatprep.subr.mxu0 0.0
  %3792 = vmatpush1.msra.mxu0 0.0
  %3793 = vmatprep.subr.mxu0 0.0
  %3794 = vmatpush1.msra.mxu0 0.0
  %3795 = vmatprep.subr.mxu0 0.0
  %3796 = vmatpush1.msra.mxu0 0.0
  %3797 = vmatprep.subr.mxu0 0.0
  %3798 = vmatpush1.msra.mxu0 0.0
  %3799 = vmatprep.subr.mxu0 0.0
  %3800 = vmatpush1.msra.mxu0 0.0
  %3801 = vmatprep.subr.mxu0 0.0
  %3802 = vmatpush1.msra.mxu0 0.0
  %3803 = vmatprep.mubr.f32.mxu0 0.0
  %3804 = vmatmul.mubr.f32.gmra.mrb[0].mxu0 %v3737
  %v3805 = vpop.f32.mrb[0].mxu0
  %v3806 = vadd.f32 0.0, %v3805
  %v3807 = vpop.f32.mrb[0].mxu0
  %3808 = vdwg.mxu0
  %v3809 = vadd.f32 %v3736, %v3806
  %v3810 = vxor.u32 %v3809, 2147483648
  %v3811 = vmul.f32 %v3810, 1.442695
  %v3812 = vpow.pop %v3811
  %v3813 = vadd.f32 %v3812, 1.0
  %v3814 = vrcp.pop %v3813
  %v3815 = vmul.f32 1.0, %v3814
  %v3816 = vtanh.pop %v3809
  %v3817 = vmul.f32 %v3815, %v3724
  %3819 = vrot.lane.b32.xlu0 %v3816, 64
  %v3820 = vpop.permute.xlu0 %3819
  %v3822 = vmul.f32 %v3815, %v3820
  %3824 = vrot.lane.b32.xlu0 %v3822, 32
  %v3825 = vpop.permute.xlu0 %3824
  %v3827 = vadd.f32 %v3817, %v3825
  %v3828 = vtanh.pop %v3827
  %3830 = vrot.lane.b32.xlu0 %v3828, 64
  %v3831 = vpop.permute.xlu0 %3830
  %v3833 = vmul.f32 %v3815, %v3831
  %3835 = vrot.lane.b32.xlu0 %v3833, 32
  %v3836 = vpop.permute.xlu0 %3835
  %3838 = vst.msk [vmem:[#allocation7 + $0x30] sm:$0xff] %vm35, %v3836
  %v3839 = vld [vmem:[#allocation3 + $0x38] sm:$0xff]
  %v3840 = vsel %vm35, %v3836, 0
  %3842 = vmatprep.subr.mxu0 0.0
  %3843 = vmatpush1.msra.mxu0 %v2972
  %3844 = vmatprep.subr.mxu0 0.0
  %3845 = vmatpush1.msra.mxu0 %v2973
  %3846 = vmatprep.subr.mxu0 0.0
  %3847 = vmatpush1.msra.mxu0 %v2974
  %3848 = vmatprep.subr.mxu0 0.0
  %3849 = vmatpush1.msra.mxu0 %v2975
  %3850 = vmatprep.subr.mxu0 0.0
  %3851 = vmatpush1.msra.mxu0 0.0
  %3852 = vmatprep.subr.mxu0 0.0
  %3853 = vmatpush1.msra.mxu0 0.0
  %3854 = vmatprep.subr.mxu0 0.0
  %3855 = vmatpush1.msra.mxu0 0.0
  %3856 = vmatprep.subr.mxu0 0.0
  %3857 = vmatpush1.msra.mxu0 0.0
  %3858 = vmatprep.subr.mxu0 0.0
  %3859 = vmatpush1.msra.mxu0 0.0
  %3860 = vmatprep.subr.mxu0 0.0
  %3861 = vmatpush1.msra.mxu0 0.0
  %3862 = vmatprep.subr.mxu0 0.0
  %3863 = vmatpush1.msra.mxu0 0.0
  %3864 = vmatprep.subr.mxu0 0.0
  %3865 = vmatpush1.msra.mxu0 0.0
  %3866 = vmatprep.subr.mxu0 0.0
  %3867 = vmatpush1.msra.mxu0 0.0
  %3868 = vmatprep.subr.mxu0 0.0
  %3869 = vmatpush1.msra.mxu0 0.0
  %3870 = vmatprep.subr.mxu0 0.0
  %3871 = vmatpush1.msra.mxu0 0.0
  %3872 = vmatprep.subr.mxu0 0.0
  %3873 = vmatpush1.msra.mxu0 0.0
  %3874 = vmatprep.subr.mxu0 0.0
  %3875 = vmatpush1.msra.mxu0 0.0
  %3876 = vmatprep.subr.mxu0 0.0
  %3877 = vmatpush1.msra.mxu0 0.0
  %3878 = vmatprep.subr.mxu0 0.0
  %3879 = vmatpush1.msra.mxu0 0.0
  %3880 = vmatprep.subr.mxu0 0.0
  %3881 = vmatpush1.msra.mxu0 0.0
  %3882 = vmatprep.subr.mxu0 0.0
  %3883 = vmatpush1.msra.mxu0 0.0
  %3884 = vmatprep.subr.mxu0 0.0
  %3885 = vmatpush1.msra.mxu0 0.0
  %3886 = vmatprep.subr.mxu0 0.0
  %3887 = vmatpush1.msra.mxu0 0.0
  %3888 = vmatprep.subr.mxu0 0.0
  %3889 = vmatpush1.msra.mxu0 0.0
  %3890 = vmatprep.subr.mxu0 0.0
  %3891 = vmatpush1.msra.mxu0 0.0
  %3892 = vmatprep.subr.mxu0 0.0
  %3893 = vmatpush1.msra.mxu0 0.0
  %3894 = vmatprep.subr.mxu0 0.0
  %3895 = vmatpush1.msra.mxu0 0.0
  %3896 = vmatprep.subr.mxu0 0.0
  %3897 = vmatpush1.msra.mxu0 0.0
  %3898 = vmatprep.subr.mxu0 0.0
  %3899 = vmatpush1.msra.mxu0 0.0
  %3900 = vmatprep.subr.mxu0 0.0
  %3901 = vmatpush1.msra.mxu0 0.0
  %3902 = vmatprep.subr.mxu0 0.0
  %3903 = vmatpush1.msra.mxu0 0.0
  %3904 = vmatprep.subr.mxu0 0.0
  %3905 = vmatpush1.msra.mxu0 0.0
  %3906 = vmatprep.mubr.f32.mxu0 0.0
  %3907 = vmatmul.mubr.f32.gmra.mrb[0].mxu0 %v3840
  %v3908 = vpop.f32.mrb[0].mxu0
  %v3909 = vadd.f32 0.0, %v3908
  %v3910 = vpop.f32.mrb[0].mxu0
  %3911 = vdwg.mxu0
  %v3912 = vadd.f32 %v3839, %v3909
  %v3913 = vxor.u32 %v3912, 2147483648
  %v3914 = vmul.f32 %v3913, 1.442695
  %v3915 = vpow.pop %v3914
  %v3916 = vadd.f32 %v3915, 1.0
  %v3917 = vrcp.pop %v3916
  %v3918 = vmul.f32 1.0, %v3917
  %v3919 = vtanh.pop %v3912
  %v3920 = vmul.f32 %v3918, %v3827
  %3922 = vrot.lane.b32.xlu0 %v3919, 64
  %v3923 = vpop.permute.xlu0 %3922
  %v3925 = vmul.f32 %v3918, %v3923
  %3927 = vrot.lane.b32.xlu0 %v3925, 32
  %v3928 = vpop.permute.xlu0 %3927
  %v3930 = vadd.f32 %v3920, %v3928
  %v3931 = vtanh.pop %v3930
  %3933 = vrot.lane.b32.xlu0 %v3931, 64
  %v3934 = vpop.permute.xlu0 %3933
  %v3936 = vmul.f32 %v3918, %v3934
  %3938 = vrot.lane.b32.xlu0 %v3936, 32
  %v3939 = vpop.permute.xlu0 %3938
  %3941 = vst.msk [vmem:[#allocation7 + $0x38] sm:$0xff] %vm35, %v3939
  %v3942 = vld [vmem:[#allocation5] sm:$0xff]
  %v3943 = vld [vmem:[#allocation5 + $0x8] sm:$0xff]
  %v3944 = vld [vmem:[#allocation5 + $0x10] sm:$0xff]
  %v3945 = vld [vmem:[#allocation5 + $0x18] sm:$0xff]
  %v3946 = vld [vmem:[#allocation5 + $0x20] sm:$0xff]
  %v3947 = vld [vmem:[#allocation5 + $0x28] sm:$0xff]
  %v3948 = vld [vmem:[#allocation5 + $0x30] sm:$0xff]
  %v3949 = vld [vmem:[#allocation5 + $0x38] sm:$0xff]
  %v3950 = vld [vmem:[#allocation7] sm:$0xff]
  %v3951 = vld [vmem:[#allocation7 + $0x8] sm:$0xff]
  %v3952 = vld [vmem:[#allocation7 + $0x10] sm:$0xff]
  %v3953 = vld [vmem:[#allocation7 + $0x18] sm:$0xff]
  %v3954 = vld [vmem:[#allocation7 + $0x20] sm:$0xff]
  %v3955 = vld [vmem:[#allocation7 + $0x28] sm:$0xff]
  %v3956 = vld [vmem:[#allocation7 + $0x30] sm:$0xff]
  %v3957 = vld [vmem:[#allocation7 + $0x38] sm:$0xff]
  %v3959 = vsel %vm35, %v3950, 0
  %v3962 = vsel %vm35, %v3951, 0
  %v3965 = vsel %vm35, %v3952, 0
  %v3968 = vsel %vm35, %v3953, 0
  %v3971 = vsel %vm35, %v3954, 0
  %v3974 = vsel %vm35, %v3955, 0
  %v3977 = vsel %vm35, %v3956, 0
  %v3980 = vsel %vm35, %v3957, 0
  %v3983 = vsel %vm35, %v3942, 0
  %v3986 = vsel %vm35, %v3943, 0
  %v3989 = vsel %vm35, %v3944, 0
  %v3992 = vsel %vm35, %v3945, 0
  %v3995 = vsel %vm35, %v3946, 0
  %v3998 = vsel %vm35, %v3947, 0
  %v4001 = vsel %vm35, %v3948, 0
  %v4004 = vsel %vm35, %v3949, 0
  %4006 = vmatprep.subr.mxu0 0.0
  %4007 = vmatpush1.xpose.msra.mxu0 %v3983
  %4008 = vmatprep.subr.mxu0 0.0
  %4009 = vmatpush1.xpose.msra.mxu0 %v3986
  %4010 = vmatprep.subr.mxu0 0.0
  %4011 = vmatpush1.xpose.msra.mxu0 %v3989
  %4012 = vmatprep.subr.mxu0 0.0
  %4013 = vmatpush1.xpose.msra.mxu0 %v3992
  %4014 = vmatprep.subr.mxu0 0.0
  %4015 = vmatpush1.xpose.msra.mxu0 %v3995
  %4016 = vmatprep.subr.mxu0 0.0
  %4017 = vmatpush1.xpose.msra.mxu0 %v3998
  %4018 = vmatprep.subr.mxu0 0.0
  %4019 = vmatpush1.xpose.msra.mxu0 %v4001
  %4020 = vmatprep.subr.mxu0 0.0
  %4021 = vmatpush1.xpose.msra.mxu0 %v4004
  %4022 = vmatprep.subr.mxu0 0.0
  %4023 = vmatpush1.xpose.msra.mxu0 0.0
  %4024 = vmatprep.subr.mxu0 0.0
  %4025 = vmatpush1.xpose.msra.mxu0 0.0
  %4026 = vmatprep.subr.mxu0 0.0
  %4027 = vmatpush1.xpose.msra.mxu0 0.0
  %4028 = vmatprep.subr.mxu0 0.0
  %4029 = vmatpush1.xpose.msra.mxu0 0.0
  %4030 = vmatprep.subr.mxu0 0.0
  %4031 = vmatpush1.xpose.msra.mxu0 0.0
  %4032 = vmatprep.subr.mxu0 0.0
  %4033 = vmatpush1.xpose.msra.mxu0 0.0
  %4034 = vmatprep.subr.mxu0 0.0
  %4035 = vmatpush1.xpose.msra.mxu0 0.0
  %4036 = vmatprep.subr.mxu0 0.0
  %4037 = vmatpush1.xpose.msra.mxu0 0.0
  %4038 = vmatprep.subr.mxu0 0.0
  %4039 = vmatpush1.xpose.msra.mxu0 0.0
  %4040 = vmatprep.subr.mxu0 0.0
  %4041 = vmatpush1.xpose.msra.mxu0 0.0
  %4042 = vmatprep.subr.mxu0 0.0
  %4043 = vmatpush1.xpose.msra.mxu0 0.0
  %4044 = vmatprep.subr.mxu0 0.0
  %4045 = vmatpush1.xpose.msra.mxu0 0.0
  %4046 = vmatprep.subr.mxu0 0.0
  %4047 = vmatpush1.xpose.msra.mxu0 0.0
  %4048 = vmatprep.subr.mxu0 0.0
  %4049 = vmatpush1.xpose.msra.mxu0 0.0
  %4050 = vmatprep.subr.mxu0 0.0
  %4051 = vmatpush1.xpose.msra.mxu0 0.0
  %4052 = vmatprep.subr.mxu0 0.0
  %4053 = vmatpush1.xpose.msra.mxu0 0.0
  %4054 = vmatprep.subr.mxu0 0.0
  %4055 = vmatpush1.xpose.msra.mxu0 0.0
  %4056 = vmatprep.subr.mxu0 0.0
  %4057 = vmatpush1.xpose.msra.mxu0 0.0
  %4058 = vmatprep.subr.mxu0 0.0
  %4059 = vmatpush1.xpose.msra.mxu0 0.0
  %4060 = vmatprep.subr.mxu0 0.0
  %4061 = vmatpush1.xpose.msra.mxu0 0.0
  %4062 = vmatprep.subr.mxu0 0.0
  %4063 = vmatpush1.xpose.msra.mxu0 0.0
  %4064 = vmatprep.subr.mxu0 0.0
  %4065 = vmatpush1.xpose.msra.mxu0 0.0
  %4066 = vmatprep.subr.mxu0 0.0
  %4067 = vmatpush1.xpose.msra.mxu0 0.0
  %4068 = vmatprep.subr.mxu0 0.0
  %4069 = vmatpush1.xpose.msra.mxu0 0.0
  %4070 = vmatprep.mubr.f32.mxu0 0.0
  %4071 = vmatmul.mubr.f32.gmra.mrb[0].mxu0 %v3959
  %v4072 = vpop.f32.mrb[0].mxu0
  %v4073 = vadd.f32 0.0, %v4072
  %v4074 = vpop.f32.mrb[0].mxu0
  %4075 = vmatprep.mubr.f32.mxu0 0.0
  %4076 = vmatmul.mubr.f32.gmra.mrb[0].mxu0 %v3962
  %v4077 = vpop.f32.mrb[0].mxu0
  %v4078 = vadd.f32 0.0, %v4077
  %v4079 = vpop.f32.mrb[0].mxu0
  %4080 = vmatprep.mubr.f32.mxu0 0.0
  %4081 = vmatmul.mubr.f32.gmra.mrb[0].mxu0 %v3965
  %v4082 = vpop.f32.mrb[0].mxu0
  %v4083 = vadd.f32 0.0, %v4082
  %v4084 = vpop.f32.mrb[0].mxu0
  %4085 = vmatprep.mubr.f32.mxu0 0.0
  %4086 = vmatmul.mubr.f32.gmra.mrb[0].mxu0 %v3968
  %v4087 = vpop.f32.mrb[0].mxu0
  %v4088 = vadd.f32 0.0, %v4087
  %v4089 = vpop.f32.mrb[0].mxu0
  %4090 = vmatprep.mubr.f32.mxu0 0.0
  %4091 = vmatmul.mubr.f32.gmra.mrb[0].mxu0 %v3971
  %v4092 = vpop.f32.mrb[0].mxu0
  %v4093 = vadd.f32 0.0, %v4092
  %v4094 = vpop.f32.mrb[0].mxu0
  %4095 = vmatprep.mubr.f32.mxu0 0.0
  %4096 = vmatmul.mubr.f32.gmra.mrb[0].mxu0 %v3974
  %v4097 = vpop.f32.mrb[0].mxu0
  %v4098 = vadd.f32 0.0, %v4097
  %v4099 = vpop.f32.mrb[0].mxu0
  %4100 = vmatprep.mubr.f32.mxu0 0.0
  %4101 = vmatmul.mubr.f32.gmra.mrb[0].mxu0 %v3977
  %v4102 = vpop.f32.mrb[0].mxu0
  %v4103 = vadd.f32 0.0, %v4102
  %v4104 = vpop.f32.mrb[0].mxu0
  %4105 = vmatprep.mubr.f32.mxu0 0.0
  %4106 = vmatmul.mubr.f32.gmra.mrb[0].mxu0 %v3980
  %v4107 = vpop.f32.mrb[0].mxu0
  %v4108 = vadd.f32 0.0, %v4107
  %v4109 = vpop.f32.mrb[0].mxu0
  %4110 = vdwg.mxu0
  %v4111 = vlaneseq
  %v4112 = vshrl.u32 %v4111, 7
  %v4113 = vadd.s32 %v4112, 8
  %v4114 = vadd.s32 %v4112, 16
  %v4115 = vadd.s32 %v4112, 24
  %v4116 = vadd.s32 %v4112, 32
  %v4117 = vadd.s32 %v4112, 40
  %v4118 = vadd.s32 %v4112, 48
  %v4119 = vadd.s32 %v4112, 56
  %vm4120 = vcmp.lt.s32.totalorder %v4112, 0
  %v4121 = vsub.s32 0, %v4112
  %v4122 = vsel %vm4120, %v4121, %v4112
  %v4123 = vshrl.u32 %v4122, 3
  %v4124 = vand.u32 %v4122, 7
  %v4125 = vsub.s32 0, %v4124
  %v4126 = vsel %vm4120, %v4125, %v4124
  %vm4127 = vcmp.lt.s32.totalorder %v4113, 0
  %v4128 = vsub.s32 0, %v4113
  %v4129 = vsel %vm4127, %v4128, %v4113
  %v4130 = vshrl.u32 %v4129, 3
  %v4131 = vand.u32 %v4129, 7
  %v4132 = vsub.s32 0, %v4131
  %v4133 = vsel %vm4127, %v4132, %v4131
  %vm4134 = vcmp.lt.s32.totalorder %v4114, 0
  %v4135 = vsub.s32 0, %v4114
  %v4136 = vsel %vm4134, %v4135, %v4114
  %v4137 = vshrl.u32 %v4136, 3
  %v4138 = vand.u32 %v4136, 7
  %v4139 = vsub.s32 0, %v4138
  %v4140 = vsel %vm4134, %v4139, %v4138
  %vm4141 = vcmp.lt.s32.totalorder %v4115, 0
  %v4142 = vsub.s32 0, %v4115
  %v4143 = vsel %vm4141, %v4142, %v4115
  %v4144 = vshrl.u32 %v4143, 3
  %v4145 = vand.u32 %v4143, 7
  %v4146 = vsub.s32 0, %v4145
  %v4147 = vsel %vm4141, %v4146, %v4145
  %vm4148 = vcmp.lt.s32.totalorder %v4116, 0
  %v4149 = vsub.s32 0, %v4116
  %v4150 = vsel %vm4148, %v4149, %v4116
  %v4151 = vshrl.u32 %v4150, 3
  %v4152 = vand.u32 %v4150, 7
  %v4153 = vsub.s32 0, %v4152
  %v4154 = vsel %vm4148, %v4153, %v4152
  %vm4155 = vcmp.lt.s32.totalorder %v4117, 0
  %v4156 = vsub.s32 0, %v4117
  %v4157 = vsel %vm4155, %v4156, %v4117
  %v4158 = vshrl.u32 %v4157, 3
  %v4159 = vand.u32 %v4157, 7
  %v4160 = vsub.s32 0, %v4159
  %v4161 = vsel %vm4155, %v4160, %v4159
  %vm4162 = vcmp.lt.s32.totalorder %v4118, 0
  %v4163 = vsub.s32 0, %v4118
  %v4164 = vsel %vm4162, %v4163, %v4118
  %v4165 = vshrl.u32 %v4164, 3
  %v4166 = vand.u32 %v4164, 7
  %v4167 = vsub.s32 0, %v4166
  %v4168 = vsel %vm4162, %v4167, %v4166
  %vm4169 = vcmp.lt.s32.totalorder %v4119, 0
  %v4170 = vsub.s32 0, %v4119
  %v4171 = vsel %vm4169, %v4170, %v4119
  %v4172 = vshrl.u32 %v4171, 3
  %v4173 = vand.u32 %v4171, 7
  %v4174 = vsub.s32 0, %v4173
  %v4175 = vsel %vm4169, %v4174, %v4173
  %vm4176 = vcmp.ne.s32.totalorder %v4126, 0
  %vm4177 = vcmp.ne.s32.totalorder %v4133, 0
  %vm4178 = vcmp.ne.s32.totalorder %v4140, 0
  %vm4179 = vcmp.ne.s32.totalorder %v4147, 0
  %vm4180 = vcmp.ne.s32.totalorder %v4154, 0
  %vm4181 = vcmp.ne.s32.totalorder %v4161, 0
  %vm4182 = vcmp.ne.s32.totalorder %v4168, 0
  %vm4183 = vcmp.ne.s32.totalorder %v4175, 0
  %vm4184 = vcmp.lt.s32.totalorder %v4126, 0
  %vm4185 = vcmp.lt.s32.totalorder %v4133, 0
  %vm4186 = vcmp.lt.s32.totalorder %v4140, 0
  %vm4187 = vcmp.lt.s32.totalorder %v4147, 0
  %vm4188 = vcmp.lt.s32.totalorder %v4154, 0
  %vm4189 = vcmp.lt.s32.totalorder %v4161, 0
  %vm4190 = vcmp.lt.s32.totalorder %v4168, 0
  %vm4191 = vcmp.lt.s32.totalorder %v4175, 0
  %vm4192 = vmand %vm4184, %vm4176
  %vm4193 = vmand %vm4185, %vm4177
  %vm4194 = vmand %vm4186, %vm4178
  %vm4195 = vmand %vm4187, %vm4179
  %vm4196 = vmand %vm4188, %vm4180
  %vm4197 = vmand %vm4189, %vm4181
  %vm4198 = vmand %vm4190, %vm4182
  %vm4199 = vmand %vm4191, %vm4183
  %v4200 = vadd.s32 %v4126, 8
  %v4201 = vadd.s32 %v4133, 8
  %v4202 = vadd.s32 %v4140, 8
  %v4203 = vadd.s32 %v4147, 8
  %v4204 = vadd.s32 %v4154, 8
  %v4205 = vadd.s32 %v4161, 8
  %v4206 = vadd.s32 %v4168, 8
  %v4207 = vadd.s32 %v4175, 8
  %v4208 = vsel %vm4192, %v4200, %v4126
  %v4209 = vsel %vm4193, %v4201, %v4133
  %v4210 = vsel %vm4194, %v4202, %v4140
  %v4211 = vsel %vm4195, %v4203, %v4147
  %v4212 = vsel %vm4196, %v4204, %v4154
  %v4213 = vsel %vm4197, %v4205, %v4161
  %v4214 = vsel %vm4198, %v4206, %v4168
  %v4215 = vsel %vm4199, %v4207, %v4175
  %v4216 = vlaneseq
  %v4217 = vand.u32 %v4216, 127
  %vm4218 = vcmp.lt.s32.totalorder %v4217, 0
  %v4219 = vsub.s32 0, %v4217
  %v4220 = vsel %vm4218, %v4219, %v4217
  %v4221 = vshrl.u32 %v4220, 3
  %v4222 = vand.u32 %v4220, 7
  %v4223 = vsub.s32 0, %v4222
  %v4224 = vsel %vm4218, %v4223, %v4222
  %vm4225 = vcmp.ne.s32.totalorder %v4224, 0
  %vm4226 = vcmp.lt.s32.totalorder %v4224, 0
  %vm4227 = vmand %vm4226, %vm4225
  %v4228 = vadd.s32 %v4224, 8
  %v4229 = vsel %vm4227, %v4228, %v4224
  %vm4230 = vcmp.eq.s32.totalorder %v4208, %v4229
  %vm4231 = vcmp.eq.s32.totalorder %v4209, %v4229
  %vm4232 = vcmp.eq.s32.totalorder %v4210, %v4229
  %vm4233 = vcmp.eq.s32.totalorder %v4211, %v4229
  %vm4234 = vcmp.eq.s32.totalorder %v4212, %v4229
  %vm4235 = vcmp.eq.s32.totalorder %v4213, %v4229
  %vm4236 = vcmp.eq.s32.totalorder %v4214, %v4229
  %vm4237 = vcmp.eq.s32.totalorder %v4215, %v4229
  %v4238 = vsel %vm4230, %v4073, -1e+30
  %v4239 = vsel %vm4231, %v4078, -1e+30
  %v4240 = vsel %vm4232, %v4083, -1e+30
  %v4241 = vsel %vm4233, %v4088, -1e+30
  %v4242 = vsel %vm4234, %v4093, -1e+30
  %v4243 = vsel %vm4235, %v4098, -1e+30
  %v4244 = vsel %vm4236, %v4103, -1e+30
  %v4245 = vsel %vm4237, %v4108, -1e+30
  %vm4246 = vcmask 523264
  %v4247 = vsel %vm4246, %v4238, -inf
  %4248 = vmax.xlane.f32.xlu0 %v4247
  %v4249 = vpop.xlane.xlu0 %4248
  %v4250 = vsel %vm4246, %v4239, -inf
  %4251 = vmax.xlane.f32.xlu0 %v4250
  %v4252 = vpop.xlane.xlu0 %4251
  %v4253 = vsel %vm4246, %v4240, -inf
  %4254 = vmax.xlane.f32.xlu0 %v4253
  %v4255 = vpop.xlane.xlu0 %4254
  %v4256 = vsel %vm4246, %v4241, -inf
  %4257 = vmax.xlane.f32.xlu0 %v4256
  %v4258 = vpop.xlane.xlu0 %4257
  %v4259 = vsel %vm4246, %v4242, -inf
  %4260 = vmax.xlane.f32.xlu0 %v4259
  %v4261 = vpop.xlane.xlu0 %4260
  %v4262 = vsel %vm4246, %v4243, -inf
  %4263 = vmax.xlane.f32.xlu0 %v4262
  %v4264 = vpop.xlane.xlu0 %4263
  %v4265 = vsel %vm4246, %v4244, -inf
  %4266 = vmax.xlane.f32.xlu0 %v4265
  %v4267 = vpop.xlane.xlu0 %4266
  %v4268 = vsel %vm4246, %v4245, -inf
  %4269 = vmax.xlane.f32.xlu0 %v4268
  %v4270 = vpop.xlane.xlu0 %4269
  %v4271 = vsub.f32 %v4238, %v4249
  %v4272 = vsub.f32 %v4239, %v4252
  %v4273 = vsub.f32 %v4240, %v4255
  %v4274 = vsub.f32 %v4241, %v4258
  %v4275 = vsub.f32 %v4242, %v4261
  %v4276 = vsub.f32 %v4243, %v4264
  %v4277 = vsub.f32 %v4244, %v4267
  %v4278 = vsub.f32 %v4245, %v4270
  %v4279 = vmul.f32 %v4271, 1.442695
  %v4280 = vpow.pop %v4279
  %v4281 = vmul.f32 %v4272, 1.442695
  %v4282 = vpow.pop %v4281
  %v4283 = vmul.f32 %v4273, 1.442695
  %v4284 = vpow.pop %v4283
  %v4285 = vmul.f32 %v4274, 1.442695
  %v4286 = vpow.pop %v4285
  %v4287 = vmul.f32 %v4275, 1.442695
  %v4288 = vpow.pop %v4287
  %v4289 = vmul.f32 %v4276, 1.442695
  %v4290 = vpow.pop %v4289
  %v4291 = vmul.f32 %v4277, 1.442695
  %v4292 = vpow.pop %v4291
  %v4293 = vmul.f32 %v4278, 1.442695
  %v4294 = vpow.pop %v4293
  %v4295 = vsel %vm4246, %v4280, 0.0
  %4296 = vadd.xlane.f32.xlu0 %v4295
  %v4297 = vpop.xlane.xlu0 %4296
  %v4298 = vsel %vm4246, %v4282, 0.0
  %4299 = vadd.xlane.f32.xlu0 %v4298
  %v4300 = vpop.xlane.xlu0 %4299
  %v4301 = vsel %vm4246, %v4284, 0.0
  %4302 = vadd.xlane.f32.xlu0 %v4301
  %v4303 = vpop.xlane.xlu0 %4302
  %v4304 = vsel %vm4246, %v4286, 0.0
  %4305 = vadd.xlane.f32.xlu0 %v4304
  %v4306 = vpop.xlane.xlu0 %4305
  %v4307 = vsel %vm4246, %v4288, 0.0
  %4308 = vadd.xlane.f32.xlu0 %v4307
  %v4309 = vpop.xlane.xlu0 %4308
  %v4310 = vsel %vm4246, %v4290, 0.0
  %4311 = vadd.xlane.f32.xlu0 %v4310
  %v4312 = vpop.xlane.xlu0 %4311
  %v4313 = vsel %vm4246, %v4292, 0.0
  %4314 = vadd.xlane.f32.xlu0 %v4313
  %v4315 = vpop.xlane.xlu0 %4314
  %v4316 = vsel %vm4246, %v4294, 0.0
  %4317 = vadd.xlane.f32.xlu0 %v4316
  %v4318 = vpop.xlane.xlu0 %4317
  %v4319 = vrcp.pop %v4297
  %v4320 = vrcp.pop %v4300
  %v4321 = vrcp.pop %v4303
  %v4322 = vrcp.pop %v4306
  %v4323 = vrcp.pop %v4309
  %v4324 = vrcp.pop %v4312
  %v4325 = vrcp.pop %v4315
  %v4326 = vrcp.pop %v4318
  %v4327 = vmul.f32 %v4280, %v4319
  %v4328 = vmul.f32 %v4282, %v4320
  %v4329 = vmul.f32 %v4284, %v4321
  %v4330 = vmul.f32 %v4286, %v4322
  %v4331 = vmul.f32 %v4288, %v4323
  %v4332 = vmul.f32 %v4290, %v4324
  %v4333 = vmul.f32 %v4292, %v4325
  %v4334 = vmul.f32 %v4294, %v4326
  %v4336 = vsel %vm4246, %v4327, 0
  %v4339 = vsel %vm4246, %v4328, 0
  %v4342 = vsel %vm4246, %v4329, 0
  %v4345 = vsel %vm4246, %v4330, 0
  %v4348 = vsel %vm4246, %v4331, 0
  %v4351 = vsel %vm4246, %v4332, 0
  %v4354 = vsel %vm4246, %v4333, 0
  %v4357 = vsel %vm4246, %v4334, 0
  %4359 = vmatprep.subr.mxu0 0.0
  %4360 = vmatpush1.msra.mxu0 %v3942
  %4361 = vmatprep.subr.mxu0 0.0
  %4362 = vmatpush1.msra.mxu0 %v3943
  %4363 = vmatprep.subr.mxu0 0.0
  %4364 = vmatpush1.msra.mxu0 %v3944
  %4365 = vmatprep.subr.mxu0 0.0
  %4366 = vmatpush1.msra.mxu0 %v3945
  %4367 = vmatprep.subr.mxu0 0.0
  %4368 = vmatpush1.msra.mxu0 %v3946
  %4369 = vmatprep.subr.mxu0 0.0
  %4370 = vmatpush1.msra.mxu0 %v3947
  %4371 = vmatprep.subr.mxu0 0.0
  %4372 = vmatpush1.msra.mxu0 %v3948
  %4373 = vmatprep.subr.mxu0 0.0
  %4374 = vmatpush1.msra.mxu0 %v3949
  %4375 = vmatprep.subr.mxu0 0.0
  %4376 = vmatpush1.msra.mxu0 0.0
  %4377 = vmatprep.subr.mxu0 0.0
  %4378 = vmatpush1.msra.mxu0 0.0
  %4379 = vmatprep.subr.mxu0 0.0
  %4380 = vmatpush1.msra.mxu0 0.0
  %4381 = vmatprep.subr.mxu0 0.0
  %4382 = vmatpush1.msra.mxu0 0.0
  %4383 = vmatprep.subr.mxu0 0.0
  %4384 = vmatpush1.msra.mxu0 0.0
  %4385 = vmatprep.subr.mxu0 0.0
  %4386 = vmatpush1.msra.mxu0 0.0
  %4387 = vmatprep.subr.mxu0 0.0
  %4388 = vmatpush1.msra.mxu0 0.0
  %4389 = vmatprep.subr.mxu0 0.0
  %4390 = vmatpush1.msra.mxu0 0.0
  %4391 = vmatprep.subr.mxu0 0.0
  %4392 = vmatpush1.msra.mxu0 0.0
  %4393 = vmatprep.subr.mxu0 0.0
  %4394 = vmatpush1.msra.mxu0 0.0
  %4395 = vmatprep.subr.mxu0 0.0
  %4396 = vmatpush1.msra.mxu0 0.0
  %4397 = vmatprep.subr.mxu0 0.0
  %4398 = vmatpush1.msra.mxu0 0.0
  %4399 = vmatprep.subr.mxu0 0.0
  %4400 = vmatpush1.msra.mxu0 0.0
  %4401 = vmatprep.subr.mxu0 0.0
  %4402 = vmatpush1.msra.mxu0 0.0
  %4403 = vmatprep.subr.mxu0 0.0
  %4404 = vmatpush1.msra.mxu0 0.0
  %4405 = vmatprep.subr.mxu0 0.0
  %4406 = vmatpush1.msra.mxu0 0.0
  %4407 = vmatprep.subr.mxu0 0.0
  %4408 = vmatpush1.msra.mxu0 0.0
  %4409 = vmatprep.subr.mxu0 0.0
  %4410 = vmatpush1.msra.mxu0 0.0
  %4411 = vmatprep.subr.mxu0 0.0
  %4412 = vmatpush1.msra.mxu0 0.0
  %4413 = vmatprep.subr.mxu0 0.0
  %4414 = vmatpush1.msra.mxu0 0.0
  %4415 = vmatprep.subr.mxu0 0.0
  %4416 = vmatpush1.msra.mxu0 0.0
  %4417 = vmatprep.subr.mxu0 0.0
  %4418 = vmatpush1.msra.mxu0 0.0
  %4419 = vmatprep.subr.mxu0 0.0
  %4420 = vmatpush1.msra.mxu0 0.0
  %4421 = vmatprep.subr.mxu0 0.0
  %4422 = vmatpush1.msra.mxu0 0.0
  %4423 = vmatprep.mubr.f32.mxu0 0.0
  %4424 = vmatmul.mubr.f32.gmra.mrb[0].mxu0 %v4336
  %v4425 = vpop.f32.mrb[0].mxu0
  %v4426 = vadd.f32 0.0, %v4425
  %v4427 = vpop.f32.mrb[0].mxu0
  %4428 = vmatprep.mubr.f32.mxu0 0.0
  %4429 = vmatmul.mubr.f32.gmra.mrb[0].mxu0 %v4339
  %v4430 = vpop.f32.mrb[0].mxu0
  %v4431 = vadd.f32 0.0, %v4430
  %v4432 = vpop.f32.mrb[0].mxu0
  %4433 = vmatprep.mubr.f32.mxu0 0.0
  %4434 = vmatmul.mubr.f32.gmra.mrb[0].mxu0 %v4342
  %v4435 = vpop.f32.mrb[0].mxu0
  %v4436 = vadd.f32 0.0, %v4435
  %v4437 = vpop.f32.mrb[0].mxu0
  %4438 = vmatprep.mubr.f32.mxu0 0.0
  %4439 = vmatmul.mubr.f32.gmra.mrb[0].mxu0 %v4345
  %v4440 = vpop.f32.mrb[0].mxu0
  %v4441 = vadd.f32 0.0, %v4440
  %v4442 = vpop.f32.mrb[0].mxu0
  %4443 = vmatprep.mubr.f32.mxu0 0.0
  %4444 = vmatmul.mubr.f32.gmra.mrb[0].mxu0 %v4348
  %v4445 = vpop.f32.mrb[0].mxu0
  %v4446 = vadd.f32 0.0, %v4445
  %v4447 = vpop.f32.mrb[0].mxu0
  %4448 = vmatprep.mubr.f32.mxu0 0.0
  %4449 = vmatmul.mubr.f32.gmra.mrb[0].mxu0 %v4351
  %v4450 = vpop.f32.mrb[0].mxu0
  %v4451 = vadd.f32 0.0, %v4450
  %v4452 = vpop.f32.mrb[0].mxu0
  %4453 = vmatprep.mubr.f32.mxu0 0.0
  %4454 = vmatmul.mubr.f32.gmra.mrb[0].mxu0 %v4354
  %v4455 = vpop.f32.mrb[0].mxu0
  %v4456 = vadd.f32 0.0, %v4455
  %v4457 = vpop.f32.mrb[0].mxu0
  %4458 = vmatprep.mubr.f32.mxu0 0.0
  %4459 = vmatmul.mubr.f32.gmra.mrb[0].mxu0 %v4357
  %v4460 = vpop.f32.mrb[0].mxu0
  %v4461 = vadd.f32 0.0, %v4460
  %v4462 = vpop.f32.mrb[0].mxu0
  %4463 = vdwg.mxu0
  %4472 = vrot.lane.b32.xlu0 %v4426, 32
  %v4473 = vpop.permute.xlu0 %4472
  %4474 = vrot.lane.b32.xlu0 %v4431, 32
  %v4475 = vpop.permute.xlu0 %4474
  %4476 = vrot.lane.b32.xlu0 %v4436, 32
  %v4477 = vpop.permute.xlu0 %4476
  %4478 = vrot.lane.b32.xlu0 %v4441, 32
  %v4479 = vpop.permute.xlu0 %4478
  %4480 = vrot.lane.b32.xlu0 %v4446, 32
  %v4481 = vpop.permute.xlu0 %4480
  %4482 = vrot.lane.b32.xlu0 %v4451, 32
  %v4483 = vpop.permute.xlu0 %4482
  %4484 = vrot.lane.b32.xlu0 %v4456, 32
  %v4485 = vpop.permute.xlu0 %4484
  %4486 = vrot.lane.b32.xlu0 %v4461, 32
  %v4487 = vpop.permute.xlu0 %4486
  %v4496 = vsel %vm35, %v3950, %v4473
  %v4497 = vsel %vm35, %v3951, %v4475
  %v4498 = vsel %vm35, %v3952, %v4477
  %v4499 = vsel %vm35, %v3953, %v4479
  %v4500 = vsel %vm35, %v3954, %v4481
  %v4501 = vsel %vm35, %v3955, %v4483
  %v4502 = vsel %vm35, %v3956, %v4485
  %v4503 = vsel %vm35, %v3957, %v4487
  %v4504 = vld [vmem:[%s2] sm:$0xff]
  %v4505 = vld [vmem:[%s2 + $0x8] sm:$0xff]
  %v4506 = vld [vmem:[%s2 + $0x10] sm:$0xff]
  %v4507 = vld [vmem:[%s2 + $0x18] sm:$0xff]
  %v4508 = vld [vmem:[%s2 + $0x20] sm:$0xff]
  %v4509 = vld [vmem:[%s2 + $0x28] sm:$0xff]
  %v4510 = vld [vmem:[%s2 + $0x30] sm:$0xff]
  %v4511 = vld [vmem:[%s2 + $0x38] sm:$0xff]
  %v4512 = vld [vmem:[%s2 + $0x40] sm:$0x1]
  %v4513 = vlaneseq
  %v4514 = vshrl.u32 %v4513, 7
  %v4515 = vsub.s32 0, %v4514
  %v4516 = vrot.slane %v4512, %v4515
  %v4518 = vsel %vm4246, %v4496, 0
  %v4521 = vsel %vm4246, %v4497, 0
  %v4524 = vsel %vm4246, %v4498, 0
  %v4527 = vsel %vm4246, %v4499, 0
  %v4530 = vsel %vm4246, %v4500, 0
  %v4533 = vsel %vm4246, %v4501, 0
  %v4536 = vsel %vm4246, %v4502, 0
  %v4539 = vsel %vm4246, %v4503, 0
  %4541 = vmatprep.subr.mxu0 0.0
  %4542 = vmatpush1.msra.mxu0 %v4504
  %4543 = vmatprep.subr.mxu0 0.0
  %4544 = vmatpush1.msra.mxu0 %v4505
  %4545 = vmatprep.subr.mxu0 0.0
  %4546 = vmatpush1.msra.mxu0 %v4506
  %4547 = vmatprep.subr.mxu0 0.0
  %4548 = vmatpush1.msra.mxu0 %v4507
  %4549 = vmatprep.subr.mxu0 0.0
  %4550 = vmatpush1.msra.mxu0 %v4508
  %4551 = vmatprep.subr.mxu0 0.0
  %4552 = vmatpush1.msra.mxu0 %v4509
  %4553 = vmatprep.subr.mxu0 0.0
  %4554 = vmatpush1.msra.mxu0 %v4510
  %4555 = vmatprep.subr.mxu0 0.0
  %4556 = vmatpush1.msra.mxu0 %v4511
  %4557 = vmatprep.subr.mxu0 0.0
  %4558 = vmatpush1.msra.mxu0 0.0
  %4559 = vmatprep.subr.mxu0 0.0
  %4560 = vmatpush1.msra.mxu0 0.0
  %4561 = vmatprep.subr.mxu0 0.0
  %4562 = vmatpush1.msra.mxu0 0.0
  %4563 = vmatprep.subr.mxu0 0.0
  %4564 = vmatpush1.msra.mxu0 0.0
  %4565 = vmatprep.subr.mxu0 0.0
  %4566 = vmatpush1.msra.mxu0 0.0
  %4567 = vmatprep.subr.mxu0 0.0
  %4568 = vmatpush1.msra.mxu0 0.0
  %4569 = vmatprep.subr.mxu0 0.0
  %4570 = vmatpush1.msra.mxu0 0.0
  %4571 = vmatprep.subr.mxu0 0.0
  %4572 = vmatpush1.msra.mxu0 0.0
  %4573 = vmatprep.subr.mxu0 0.0
  %4574 = vmatpush1.msra.mxu0 0.0
  %4575 = vmatprep.subr.mxu0 0.0
  %4576 = vmatpush1.msra.mxu0 0.0
  %4577 = vmatprep.subr.mxu0 0.0
  %4578 = vmatpush1.msra.mxu0 0.0
  %4579 = vmatprep.subr.mxu0 0.0
  %4580 = vmatpush1.msra.mxu0 0.0
  %4581 = vmatprep.subr.mxu0 0.0
  %4582 = vmatpush1.msra.mxu0 0.0
  %4583 = vmatprep.subr.mxu0 0.0
  %4584 = vmatpush1.msra.mxu0 0.0
  %4585 = vmatprep.subr.mxu0 0.0
  %4586 = vmatpush1.msra.mxu0 0.0
  %4587 = vmatprep.subr.mxu0 0.0
  %4588 = vmatpush1.msra.mxu0 0.0
  %4589 = vmatprep.subr.mxu0 0.0
  %4590 = vmatpush1.msra.mxu0 0.0
  %4591 = vmatprep.subr.mxu0 0.0
  %4592 = vmatpush1.msra.mxu0 0.0
  %4593 = vmatprep.subr.mxu0 0.0
  %4594 = vmatpush1.msra.mxu0 0.0
  %4595 = vmatprep.subr.mxu0 0.0
  %4596 = vmatpush1.msra.mxu0 0.0
  %4597 = vmatprep.subr.mxu0 0.0
  %4598 = vmatpush1.msra.mxu0 0.0
  %4599 = vmatprep.subr.mxu0 0.0
  %4600 = vmatpush1.msra.mxu0 0.0
  %4601 = vmatprep.subr.mxu0 0.0
  %4602 = vmatpush1.msra.mxu0 0.0
  %4603 = vmatprep.subr.mxu0 0.0
  %4604 = vmatpush1.msra.mxu0 0.0
  %4605 = vmatprep.mubr.f32.mxu0 0.0
  %4606 = vmatmul.mubr.f32.gmra.mrb[0].mxu0 %v4518
  %v4607 = vpop.f32.mrb[0].mxu0
  %v4608 = vadd.f32 %v4516, %v4607
  %v4609 = vpop.f32.mrb[0].mxu0
  %4610 = vmatprep.mubr.f32.mxu0 0.0
  %4611 = vmatmul.mubr.f32.gmra.mrb[0].mxu0 %v4521
  %v4612 = vpop.f32.mrb[0].mxu0
  %v4613 = vadd.f32 %v4516, %v4612
  %v4614 = vpop.f32.mrb[0].mxu0
  %4615 = vmatprep.mubr.f32.mxu0 0.0
  %4616 = vmatmul.mubr.f32.gmra.mrb[0].mxu0 %v4524
  %v4617 = vpop.f32.mrb[0].mxu0
  %v4618 = vadd.f32 %v4516, %v4617
  %v4619 = vpop.f32.mrb[0].mxu0
  %4620 = vmatprep.mubr.f32.mxu0 0.0
  %4621 = vmatmul.mubr.f32.gmra.mrb[0].mxu0 %v4527
  %v4622 = vpop.f32.mrb[0].mxu0
  %v4623 = vadd.f32 %v4516, %v4622
  %v4624 = vpop.f32.mrb[0].mxu0
  %4625 = vmatprep.mubr.f32.mxu0 0.0
  %4626 = vmatmul.mubr.f32.gmra.mrb[0].mxu0 %v4530
  %v4627 = vpop.f32.mrb[0].mxu0
  %v4628 = vadd.f32 %v4516, %v4627
  %v4629 = vpop.f32.mrb[0].mxu0
  %4630 = vmatprep.mubr.f32.mxu0 0.0
  %4631 = vmatmul.mubr.f32.gmra.mrb[0].mxu0 %v4533
  %v4632 = vpop.f32.mrb[0].mxu0
  %v4633 = vadd.f32 %v4516, %v4632
  %v4634 = vpop.f32.mrb[0].mxu0
  %4635 = vmatprep.mubr.f32.mxu0 0.0
  %4636 = vmatmul.mubr.f32.gmra.mrb[0].mxu0 %v4536
  %v4637 = vpop.f32.mrb[0].mxu0
  %v4638 = vadd.f32 %v4516, %v4637
  %v4639 = vpop.f32.mrb[0].mxu0
  %4640 = vmatprep.mubr.f32.mxu0 0.0
  %4641 = vmatmul.mubr.f32.gmra.mrb[0].mxu0 %v4539
  %v4642 = vpop.f32.mrb[0].mxu0
  %v4643 = vadd.f32 %v4516, %v4642
  %v4644 = vpop.f32.mrb[0].mxu0
  %4645 = vdwg.mxu0
  %4646 = vst [vmem:[%s3] sm:$0xff] %v4608
  %4647 = vst [vmem:[%s3 + $0x8] sm:$0xff] %v4613
  %4648 = vst [vmem:[%s3 + $0x10] sm:$0xff] %v4618
  %4649 = vst [vmem:[%s3 + $0x18] sm:$0xff] %v4623
  %4650 = vst [vmem:[%s3 + $0x20] sm:$0xff] %v4628
  %4651 = vst [vmem:[%s3 + $0x28] sm:$0xff] %v4633
  %4652 = vst [vmem:[%s3 + $0x30] sm:$0xff] %v4638
  %4653 = vst [vmem:[%s3 + $0x38] sm:$0xff] %v4643
  // Predicated region
  $region14: #{model_forward.1} parent=0 // pred_check
    _
  $region15: #{model_forward.1} parent=0 // pred_check_branch
    %4655 = sbr.rel (0) target = $region17
  $region16: #{model_forward.1} parent=0 // pred_region
    _
  $region17: #{model_forward.1} parent=0 // pred_fallthru
    _
  // Predicated region
  $region18: #{model_forward.1} parent=0 // pred_check
    _
  $region19: #{model_forward.1} parent=0 // pred_check_branch
    %4657 = sbr.rel (0) target = $region21
  $region20: #{model_forward.1} parent=0 // pred_region
    _
  $region21: #{model_forward.1} parent=0 // pred_fallthru
    _

</llo_original>
